<compile_context>
chip_gen: v6e
topology: v6e:2x2x1
jax: 0.10.0
libtpu: 0.0.40
codegen_flags: <defaults>
</compile_context>

<pallas_src>
import functools
import math

import jax
import jax.numpy as jnp
from jax.experimental import pallas as pl
from jax.experimental.pallas import tpu as pltpu

_LN_EPS = 1e-5
_GELU_C = math.sqrt(2.0 / math.pi)   # hoisted GELU constants (v5e: keep VPU muls minimal)
_GELU_A = 0.044715
# 32 MiB is safe on every generation (v5e/v6e: 128 MiB physical, v7x: 64 MiB physical /
# 32 MiB default scoped).  For production-size weights raise toward ~100 MiB on v5e/v6e,
# or single-buffer the grid-invariant weights (pipeline_mode=pl.Buffered(1)) / tile h_dim
# to stay inside v7x's 64 MiB.
_VMEM_LIMIT = 32 * 1024 * 1024


def _round_up(x, m):
    return ((x + m - 1) // m) * m


# ---------------------------------------------------------------------------
# Kernel 1: mapper input linear  y = x @ Wl + bl
# ---------------------------------------------------------------------------
def _linear_kernel(x_ref, w_ref, b_ref, o_ref):
    x = x_ref[...].astype(jnp.bfloat16)                       # bf16 operands, f32 acc
    y = jnp.dot(x, w_ref[...], preferred_element_type=jnp.float32) + b_ref[...]
    o_ref[...] = y.astype(o_ref.dtype)


def _linear_pallas(x, w, b):
    B, d_in = x.shape
    d_out = w.shape[1]
    return pl.pallas_call(
        _linear_kernel,
        out_shape=jax.ShapeDtypeStruct((B, d_out), jnp.float32),
        grid_spec=pltpu.PrefetchScalarGridSpec(
            num_scalar_prefetch=0,
            grid=(1,),
            in_specs=[
                pl.BlockSpec((B, d_in), lambda i: (0, 0)),
                pl.BlockSpec((d_in, d_out), lambda i: (0, 0)),
                pl.BlockSpec((1, d_out), lambda i: (0, 0)),
            ],
            out_specs=pl.BlockSpec((B, d_out), lambda i: (0, 0)),
        ),
        compiler_params=pltpu.CompilerParams(
            dimension_semantics=("arbitrary",),
            vmem_limit_bytes=_VMEM_LIMIT),
    )(x, w, b)


# ---------------------------------------------------------------------------
# Kernel 2: fused  x + Proj(MHA(LayerNorm1(x)))   (one batch element per grid step)
# ---------------------------------------------------------------------------
def _attn_block_kernel(x_ref, g1_ref, bt1_ref, wq_ref, wkv_ref, wp_ref, bp_ref,
                       o_ref, attn_acc, *, num_heads, head_dim, scale):
    x = x_ref[0]                                              # (T, D) f32 residual stream
    d = num_heads * head_dim

    # LayerNorm (f32)
    mu = jnp.mean(x, axis=-1, keepdims=True)
    var = jnp.mean(jnp.square(x - mu), axis=-1, keepdims=True)
    xn = (x - mu) * jax.lax.rsqrt(var + _LN_EPS)
    xn = xn * g1_ref[...] + bt1_ref[...]

    # QKV projections: bf16 operands, f32 accumulation (full-rate MXU path)
    xb = xn.astype(jnp.bfloat16)
    q = jnp.dot(xb, wq_ref[...], preferred_element_type=jnp.float32)      # (T, D)
    kv = jnp.dot(xb, wkv_ref[...], preferred_element_type=jnp.float32)    # (T, 2D)

    # Per-head attention.  kv layout matches torch's reshape(b, m, 2, h, d):
    # columns [0:D) are keys, [D:2D) are values, head h owns columns h*hd:(h+1)*hd.
    for h in range(num_heads):
        lo = h * head_dim
        hi = lo + head_dim
        q_h = q[:, lo:hi]                                     # (T, hd)
        k_h = kv[:, lo:hi]                                    # (T, hd)
        v_h = kv[:, d + lo:d + hi]                            # (T, hd)
        s = jax.lax.dot_general(q_h, k_h, (((1,), (1,)), ((), ())),
                                preferred_element_type=jnp.float32) * scale   # (T, T)
        s = s - jnp.max(s, axis=-1, keepdims=True)
        p = jnp.exp(s)
        p = p / jnp.sum(p, axis=-1, keepdims=True)
        attn_acc[:, lo:hi] = jnp.dot(p, v_h, preferred_element_type=jnp.float32)

    # Output projection + residual
    a = attn_acc[...].astype(jnp.bfloat16)
    proj = jnp.dot(a, wp_ref[...], preferred_element_type=jnp.float32) + bp_ref[...]
    o_ref[0] = (x + proj).astype(o_ref.dtype)


def _attn_block_pallas(x, lp, *, num_heads):
    B, T, D = x.shape
    head_dim = D // num_heads
    kernel = functools.partial(_attn_block_kernel, num_heads=num_heads,
                               head_dim=head_dim, scale=head_dim ** -0.5)
    return pl.pallas_call(
        kernel,
        out_shape=jax.ShapeDtypeStruct((B, T, D), jnp.float32),
        grid_spec=pltpu.PrefetchScalarGridSpec(
            num_scalar_prefetch=0,
            grid=(B,),
            in_specs=[
                pl.BlockSpec((1, T, D), lambda b: (b, 0, 0)),   # x: one batch row / step
                pl.BlockSpec((1, D), lambda b: (0, 0)),         # ln1 gamma
                pl.BlockSpec((1, D), lambda b: (0, 0)),         # ln1 beta
                # Grid-invariant bf16 weights stay resident across steps.  For
                # production sizes consider pipeline_mode=pl.Buffered(1) / h-tiling
                # so v7x's 64 MiB VMEM is not blown by double-buffered copies.
                pl.BlockSpec((D, D), lambda b: (0, 0)),         # Wq  (no bias)
                pl.BlockSpec((D, 2 * D), lambda b: (0, 0)),     # Wkv (no bias)
                pl.BlockSpec((D, D), lambda b: (0, 0)),         # Wproj
                pl.BlockSpec((1, D), lambda b: (0, 0)),         # bproj
            ],
            out_specs=pl.BlockSpec((1, T, D), lambda b: (b, 0, 0)),
            scratch_shapes=[pltpu.VMEM((T, D), jnp.float32)],   # per-head output assembly
        ),
        compiler_params=pltpu.CompilerParams(
            dimension_semantics=("parallel",),                  # both TCs on v7x
            vmem_limit_bytes=_VMEM_LIMIT),
    )(x, lp["ln1_g"], lp["ln1_b"], lp["wq"], lp["wkv"], lp["wp"], lp["bp"])


# ---------------------------------------------------------------------------
# Kernel 3: fused  x + FC2(GELU_tanh(FC1(LayerNorm2(x))))  over flattened rows
# ---------------------------------------------------------------------------
def _mlp_block_kernel(x_ref, g2_ref, bt2_ref, w1_ref, b1_ref, w2_ref, b2_ref, o_ref):
    x = x_ref[...]                                            # (tm, D) f32

    # LayerNorm (f32)
    mu = jnp.mean(x, axis=-1, keepdims=True)
    var = jnp.mean(jnp.square(x - mu), axis=-1, keepdims=True)
    xn = (x - mu) * jax.lax.rsqrt(var + _LN_EPS)
    xn = xn * g2_ref[...] + bt2_ref[...]

    # fc1: bf16 operands, f32 accumulator
    h = jnp.dot(xn.astype(jnp.bfloat16), w1_ref[...],
                preferred_element_type=jnp.float32) + b1_ref[...]
    # tanh-approx GELU in f32 on the accumulator (tanh -> EUP slot, constants hoisted)
    h = 0.5 * h * (1.0 + jnp.tanh(_GELU_C * (h + _GELU_A * (h * h * h))))
    # dropout(p=0.0) == identity
    # fc2: hidden cast back to bf16, f32 accumulator
    y = jnp.dot(h.astype(jnp.bfloat16), w2_ref[...],
                preferred_element_type=jnp.float32) + b2_ref[...]
    o_ref[...] = (x + y).astype(o_ref.dtype)                  # residual


def _mlp_block_pallas(x, lp, *, tm_max=256):
    B, T, D = x.shape
    H = lp["w1"].shape[1]
    M = B * T
    x2 = x.reshape(M, D)                                      # contiguous reshape, no copy

    # Big row tiles (multiple of 8) amortize the ~0.35us/step grid overhead and fill the
    # MXU M dimension.  No host-side padding: grid = cdiv(M, tm), Pallas masks the tail.
    tm = min(tm_max, _round_up(M, 8))
    # v7x has 2 TensorCores: for large M keep >= 2 parallel grid steps.
    if M >= 2 * 128 and pl.cdiv(M, tm) < 2:
        tm = _round_up(pl.cdiv(M, 2), 8)
    grid = (pl.cdiv(M, tm),)

    out = pl.pallas_call(
        _mlp_block_kernel,
        out_shape=jax.ShapeDtypeStruct((M, D), jnp.float32),
        grid_spec=pltpu.PrefetchScalarGridSpec(
            num_scalar_prefetch=0,
            grid=grid,
            in_specs=[
                pl.BlockSpec((tm, D), lambda i: (i, 0)),       # x row tile
                pl.BlockSpec((1, D), lambda i: (0, 0)),        # ln2 gamma
                pl.BlockSpec((1, D), lambda i: (0, 0)),        # ln2 beta
                pl.BlockSpec((D, H), lambda i: (0, 0)),        # W1 (grid-invariant, bf16)
                pl.BlockSpec((1, H), lambda i: (0, 0)),        # b1
                pl.BlockSpec((H, D), lambda i: (0, 0)),        # W2 (grid-invariant, bf16)
                pl.BlockSpec((1, D), lambda i: (0, 0)),        # b2
            ],
            out_specs=pl.BlockSpec((tm, D), lambda i: (i, 0)),
        ),
        compiler_params=pltpu.CompilerParams(
            dimension_semantics=("parallel",),
            vmem_limit_bytes=_VMEM_LIMIT),
    )(x2, lp["ln2_g"], lp["ln2_b"], lp["w1"], lp["b1"], lp["w2"], lp["b2"])
    return out.reshape(B, T, D)


# ---------------------------------------------------------------------------
# Full TransformerMapper forward
# ---------------------------------------------------------------------------
def transformer_mapper_pallas(x, params, *, clip_length, num_heads):
    B = x.shape[0]
    D = params["prefix_const"].shape[1]
    # self.linear(x).view(B, clip_length, D)
    y = _linear_pallas(x, params["linear_w"], params["linear_b"]).reshape(B, clip_length, D)
    # prefix = cat((x, prefix_const.expand(B, ...)), dim=1)   -- pure layout op
    pref = jnp.broadcast_to(params["prefix_const"][None],
                            (B,) + params["prefix_const"].shape)
    h = jnp.concatenate([y, pref], axis=1)                    # (B, T, D), T = clip + prefix
    # transformer layers:  x = x + attn(norm1(x));  x = x + mlp(norm2(x))
    for lp in params["layers"]:
        h = _attn_block_pallas(h, lp, num_heads=num_heads)
        h = _mlp_block_pallas(h, lp)
    return h[:, clip_length:]                                 # required by the module


# ---------------------------------------------------------------------------
# Parameters (nn.Linear-style init; weights stored bf16 per perf feedback)
# ---------------------------------------------------------------------------
def init_params(key, *, dim_clip, dim_embedding, prefix_length, clip_length,
                num_layers, mlp_ratio=2.0):
    D = dim_embedding
    H = int(D * mlp_ratio)
    keys = jax.random.split(key, 2 + num_layers)

    def linear(k, fan_in, fan_out, bias=True):
        bound = 1.0 / math.sqrt(fan_in)
        kw, kb = jax.random.split(k)
        w = jax.random.uniform(kw, (fan_in, fan_out), jnp.float32, -bound, bound)
        b = (jax.random.uniform(kb, (1, fan_out), jnp.float32, -bound, bound)
             if bias else None)
        return w.astype(jnp.bfloat16), b                      # weights kept in bf16

    lw, lb = linear(keys[0], dim_clip, clip_length * D)
    prefix_const = 1e-4 * jax.random.normal(keys[1], (prefix_length, D), jnp.float32)

    layers = []
    for i in range(num_layers):
        kq, kkv, kp, k1, k2 = jax.random.split(keys[2 + i], 5)
        wq, _ = linear(kq, D, D, bias=False)                  # TransformerLayer: bias=False
        wkv, _ = linear(kkv, D, 2 * D, bias=False)
        wp, bp = linear(kp, D, D)                             # project always has bias
        w1, b1 = linear(k1, D, H)
        w2, b2 = linear(k2, H, D)
        layers.append(dict(
            ln1_g=jnp.ones((1, D), jnp.float32), ln1_b=jnp.zeros((1, D), jnp.float32),
            wq=wq, wkv=wkv, wp=wp, bp=bp,
            ln2_g=jnp.ones((1, D), jnp.float32), ln2_b=jnp.zeros((1, D), jnp.float32),
            w1=w1, b1=b1, w2=w2, b2=b2))
    return dict(linear_w=lw, linear_b=lb, prefix_const=prefix_const, layers=layers)


# ---------------------------------------------------------------------------
# Pure-JAX f32 reference (mirrors the PyTorch forward exactly)
# ---------------------------------------------------------------------------
def _layer_norm_ref(x, g, b):
    mu = jnp.mean(x, axis=-1, keepdims=True)
    var = jnp.mean(jnp.square(x - mu), axis=-1, keepdims=True)
    return (x - mu) / jnp.sqrt(var + _LN_EPS) * g + b


def _ref_forward(x, params, *, clip_length, num_heads):
    f32 = lambda a: a.astype(jnp.float32)
    B = x.shape[0]
    D = params["prefix_const"].shape[1]
    h = (x @ f32(params["linear_w"]) + params["linear_b"]).reshape(B, clip_length, D)
    pref = jnp.broadcast_to(params["prefix_const"][None],
                            (B,) + params["prefix_const"].shape)
    h = jnp.concatenate([h, pref], axis=1)
    T = h.shape[1]
    hd = D // num_heads
    for lp in params["layers"]:
        xn = _layer_norm_ref(h, lp["ln1_g"], lp["ln1_b"])
        q = (xn @ f32(lp["wq"])).reshape(B, T, num_heads, hd)
        kv = (xn @ f32(lp["wkv"])).reshape(B, T, 2, num_heads, hd)
        k, v = kv[:, :, 0], kv[:, :, 1]
        att = jnp.einsum("bnhd,bmhd->bnmh", q, k) * (hd ** -0.5)
        att = jax.nn.softmax(att, axis=2)
        out = jnp.einsum("bnmh,bmhd->bnhd", att, v).reshape(B, T, D)
        h = h + (out @ f32(lp["wp"]) + lp["bp"])
        xn = _layer_norm_ref(h, lp["ln2_g"], lp["ln2_b"])
        m = xn @ f32(lp["w1"]) + lp["b1"]
        m = 0.5 * m * (1.0 + jnp.tanh(_GELU_C * (m + _GELU_A * m ** 3)))
        h = h + (m @ f32(lp["w2"]) + lp["b2"])
    return h[:, clip_length:]


if __name__ == "__main__":
    # Small config consistent with the module; every feature dim is a multiple of 128.
    batch = 2
    dim_clip = 512
    dim_embedding = 128
    clip_length = 10
    prefix_length = 10
    num_layers = 2          # small test config (module default is 8)
    num_heads = 8           # head_dim = 16

    key = jax.random.PRNGKey(0)
    kp, kx = jax.random.split(key)
    params = init_params(kp, dim_clip=dim_clip, dim_embedding=dim_embedding,
                         prefix_length=prefix_length, clip_length=clip_length,
                         num_layers=num_layers)
    x = jax.random.normal(kx, (batch, dim_clip), jnp.float32)

    fwd = jax.jit(functools.partial(transformer_mapper_pallas,
                                    clip_length=clip_length, num_heads=num_heads))
    out = jax.block_until_ready(fwd(x, params))

    ref = _ref_forward(x, params, clip_length=clip_length, num_heads=num_heads)

    assert out.shape == (batch, prefix_length, dim_embedding), out.shape
    assert bool(jnp.all(jnp.isfinite(out)))
    # bf16 matmul operands vs the f32 reference -> loosened tolerance.
    assert jnp.allclose(out, ref, atol=5e-2, rtol=5e-2), \
        float(jnp.max(jnp.abs(out - ref)))

    print("KERNEL_OK")
</pallas_src>

<mosaic_0001>
module attributes {stable_mosaic.version = 11 : i64} {
  func.func @_mlp_block_kernel(%arg0: i32, %arg1: memref<40x128xf32, #tpu.memory_space<vmem>>, %arg2: memref<1x128xf32, #tpu.memory_space<vmem>>, %arg3: memref<1x128xf32, #tpu.memory_space<vmem>>, %arg4: memref<128x256xbf16, #tpu.memory_space<vmem>>, %arg5: memref<1x256xf32, #tpu.memory_space<vmem>>, %arg6: memref<256x128xbf16, #tpu.memory_space<vmem>>, %arg7: memref<1x128xf32, #tpu.memory_space<vmem>>, %arg8: memref<40x128xf32, #tpu.memory_space<vmem>>) attributes {dimension_semantics = [#tpu.dimension_semantics<parallel>], iteration_bounds = array<i64: 1>, scalar_prefetch = 0 : i64, scratch_operands = 0 : i64, tpu.core_type = #tpu.core_type<tc>, window_params = [{transform_indices = @transform_0, window_bounds = array<i64: 40, 128>}, {pipeline_mode = #tpu.pipeline_mode<synchronous>, transform_indices = @transform_1, window_bounds = array<i64: 1, 128>}, {pipeline_mode = #tpu.pipeline_mode<synchronous>, transform_indices = @transform_2, window_bounds = array<i64: 1, 128>}, {pipeline_mode = #tpu.pipeline_mode<synchronous>, transform_indices = @transform_3, window_bounds = array<i64: 128, 256>}, {pipeline_mode = #tpu.pipeline_mode<synchronous>, transform_indices = @transform_4, window_bounds = array<i64: 1, 256>}, {pipeline_mode = #tpu.pipeline_mode<synchronous>, transform_indices = @transform_5, window_bounds = array<i64: 256, 128>}, {pipeline_mode = #tpu.pipeline_mode<synchronous>, transform_indices = @transform_6, window_bounds = array<i64: 1, 128>}, {transform_indices = @transform_7, window_bounds = array<i64: 40, 128>}]} {
    %c0 = arith.constant 0 : index
    %c0_0 = arith.constant 0 : index
    %0 = vector.load %arg1[%c0, %c0_0] : memref<40x128xf32, #tpu.memory_space<vmem>>, vector<40x128xf32>
    %cst = arith.constant dense<0.000000e+00> : vector<40xf32>
    %1 = vector.multi_reduction <add>, %0, %cst [1] : vector<40x128xf32> to vector<40xf32>
    %2 = vector.shape_cast %1 : vector<40xf32> to vector<40x1xf32>
    %cst_1 = arith.constant 1.280000e+02 : f32
    %3 = vector.broadcast %cst_1 : f32 to vector<40x1xf32>
    %4 = arith.divf %2, %3 : vector<40x1xf32>
    %5 = vector.broadcast %4 : vector<40x1xf32> to vector<40x128xf32>
    %6 = arith.subf %0, %5 : vector<40x128xf32>
    %7 = arith.mulf %6, %6 : vector<40x128xf32>
    %cst_2 = arith.constant dense<0.000000e+00> : vector<40xf32>
    %8 = vector.multi_reduction <add>, %7, %cst_2 [1] : vector<40x128xf32> to vector<40xf32>
    %9 = vector.shape_cast %8 : vector<40xf32> to vector<40x1xf32>
    %cst_3 = arith.constant 1.280000e+02 : f32
    %10 = vector.broadcast %cst_3 : f32 to vector<40x1xf32>
    %11 = arith.divf %9, %10 : vector<40x1xf32>
    %12 = vector.broadcast %4 : vector<40x1xf32> to vector<40x128xf32>
    %13 = arith.subf %0, %12 : vector<40x128xf32>
    %cst_4 = arith.constant 9.99999974E-6 : f32
    %14 = vector.broadcast %cst_4 : f32 to vector<40x1xf32>
    %15 = arith.addf %11, %14 : vector<40x1xf32>
    %16 = math.rsqrt %15 : vector<40x1xf32>
    %17 = vector.broadcast %16 : vector<40x1xf32> to vector<40x128xf32>
    %18 = arith.mulf %13, %17 : vector<40x128xf32>
    %c0_5 = arith.constant 0 : index
    %c0_6 = arith.constant 0 : index
    %19 = vector.load %arg2[%c0_5, %c0_6] : memref<1x128xf32, #tpu.memory_space<vmem>>, vector<1x128xf32>
    %20 = vector.broadcast %19 : vector<1x128xf32> to vector<40x128xf32>
    %21 = arith.mulf %18, %20 : vector<40x128xf32>
    %c0_7 = arith.constant 0 : index
    %c0_8 = arith.constant 0 : index
    %22 = vector.load %arg3[%c0_7, %c0_8] : memref<1x128xf32, #tpu.memory_space<vmem>>, vector<1x128xf32>
    %23 = vector.broadcast %22 : vector<1x128xf32> to vector<40x128xf32>
    %24 = arith.addf %21, %23 : vector<40x128xf32>
    %25 = arith.truncf %24 : vector<40x128xf32> to vector<40x128xbf16>
    %c0_9 = arith.constant 0 : index
    %c0_10 = arith.constant 0 : index
    %26 = vector.load %arg4[%c0_9, %c0_10] : memref<128x256xbf16, #tpu.memory_space<vmem>>, vector<128x256xbf16>
    %cst_11 = arith.constant dense<0.000000e+00> : vector<40x256xf32>
    %27 = tpu.matmul %25, %26, %cst_11 {dimension_numbers = #tpu.dot_dimension_numbers<[1], [0], [0], [1], [0, 0, 1, 1], [], []>} : vector<40x128xbf16>, vector<128x256xbf16>, vector<40x256xf32> -> vector<40x256xf32>
    %c0_12 = arith.constant 0 : index
    %c0_13 = arith.constant 0 : index
    %28 = vector.load %arg5[%c0_12, %c0_13] : memref<1x256xf32, #tpu.memory_space<vmem>>, vector<1x256xf32>
    %29 = vector.broadcast %28 : vector<1x256xf32> to vector<40x256xf32>
    %30 = arith.addf %27, %29 : vector<40x256xf32>
    %cst_14 = arith.constant 5.000000e-01 : f32
    %31 = vector.broadcast %cst_14 : f32 to vector<40x256xf32>
    %32 = arith.mulf %31, %30 : vector<40x256xf32>
    %33 = arith.mulf %30, %30 : vector<40x256xf32>
    %34 = arith.mulf %33, %30 : vector<40x256xf32>
    %cst_15 = arith.constant 4.471500e-02 : f32
    %35 = vector.broadcast %cst_15 : f32 to vector<40x256xf32>
    %36 = arith.mulf %35, %34 : vector<40x256xf32>
    %37 = arith.addf %30, %36 : vector<40x256xf32>
    %cst_16 = arith.constant 0.797884583 : f32
    %38 = vector.broadcast %cst_16 : f32 to vector<40x256xf32>
    %39 = arith.mulf %38, %37 : vector<40x256xf32>
    %40 = math.tanh %39 : vector<40x256xf32>
    %cst_17 = arith.constant 1.000000e+00 : f32
    %41 = vector.broadcast %cst_17 : f32 to vector<40x256xf32>
    %42 = arith.addf %41, %40 : vector<40x256xf32>
    %43 = arith.mulf %32, %42 : vector<40x256xf32>
    %44 = arith.truncf %43 : vector<40x256xf32> to vector<40x256xbf16>
    %c0_18 = arith.constant 0 : index
    %c0_19 = arith.constant 0 : index
    %45 = vector.load %arg6[%c0_18, %c0_19] : memref<256x128xbf16, #tpu.memory_space<vmem>>, vector<256x128xbf16>
    %cst_20 = arith.constant dense<0.000000e+00> : vector<40x128xf32>
    %46 = tpu.matmul %44, %45, %cst_20 {dimension_numbers = #tpu.dot_dimension_numbers<[1], [0], [0], [1], [0, 0, 1, 1], [], []>} : vector<40x256xbf16>, vector<256x128xbf16>, vector<40x128xf32> -> vector<40x128xf32>
    %c0_21 = arith.constant 0 : index
    %c0_22 = arith.constant 0 : index
    %47 = vector.load %arg7[%c0_21, %c0_22] : memref<1x128xf32, #tpu.memory_space<vmem>>, vector<1x128xf32>
    %48 = vector.broadcast %47 : vector<1x128xf32> to vector<40x128xf32>
    %49 = arith.addf %46, %48 : vector<40x128xf32>
    %50 = arith.addf %0, %49 : vector<40x128xf32>
    %c0_23 = arith.constant 0 : index
    %c0_24 = arith.constant 0 : index
    %51 = vector.load %arg8[%c0_23, %c0_24] : memref<40x128xf32, #tpu.memory_space<vmem>>, vector<40x128xf32>
    tpu.vector_store %arg8[%c0_23, %c0_24], %50 {strides = array<i32>} : memref<40x128xf32, #tpu.memory_space<vmem>>, vector<40x128xf32>,
    return
  }
  func.func @transform_0(%arg0: i32) -> (i32, i32) {
    %c0_i32 = arith.constant 0 : i32
    %c0_i32_0 = arith.constant 0 : i32
    return %arg0, %c0_i32 : i32, i32
  }
  func.func @transform_1(%arg0: i32) -> (i32, i32) {
    %c0_i32 = arith.constant 0 : i32
    %c0_i32_0 = arith.constant 0 : i32
    %c0_i32_1 = arith.constant 0 : i32
    return %c0_i32, %c0_i32_0 : i32, i32
  }
  func.func @transform_2(%arg0: i32) -> (i32, i32) {
    %c0_i32 = arith.constant 0 : i32
    %c0_i32_0 = arith.constant 0 : i32
    %c0_i32_1 = arith.constant 0 : i32
    return %c0_i32, %c0_i32_0 : i32, i32
  }
  func.func @transform_3(%arg0: i32) -> (i32, i32) {
    %c0_i32 = arith.constant 0 : i32
    %c0_i32_0 = arith.constant 0 : i32
    %c0_i32_1 = arith.constant 0 : i32
    return %c0_i32, %c0_i32_0 : i32, i32
  }
  func.func @transform_4(%arg0: i32) -> (i32, i32) {
    %c0_i32 = arith.constant 0 : i32
    %c0_i32_0 = arith.constant 0 : i32
    %c0_i32_1 = arith.constant 0 : i32
    return %c0_i32, %c0_i32_0 : i32, i32
  }
  func.func @transform_5(%arg0: i32) -> (i32, i32) {
    %c0_i32 = arith.constant 0 : i32
    %c0_i32_0 = arith.constant 0 : i32
    %c0_i32_1 = arith.constant 0 : i32
    return %c0_i32, %c0_i32_0 : i32, i32
  }
  func.func @transform_6(%arg0: i32) -> (i32, i32) {
    %c0_i32 = arith.constant 0 : i32
    %c0_i32_0 = arith.constant 0 : i32
    %c0_i32_1 = arith.constant 0 : i32
    return %c0_i32, %c0_i32_0 : i32, i32
  }
  func.func @transform_7(%arg0: i32) -> (i32, i32) {
    %c0_i32 = arith.constant 0 : i32
    %c0_i32_0 = arith.constant 0 : i32
    return %arg0, %c0_i32 : i32, i32
  }
}

module attributes {stable_mosaic.version = 11 : i64} {
  func.func @_linear_kernel(%arg0: i32, %arg1: memref<2x512xf32, #tpu.memory_space<vmem>>, %arg2: memref<512x1280xbf16, #tpu.memory_space<vmem>>, %arg3: memref<1x1280xf32, #tpu.memory_space<vmem>>, %arg4: memref<2x1280xf32, #tpu.memory_space<vmem>>) attributes {dimension_semantics = [#tpu.dimension_semantics<arbitrary>], iteration_bounds = array<i64: 1>, scalar_prefetch = 0 : i64, scratch_operands = 0 : i64, tpu.core_type = #tpu.core_type<tc>, window_params = [{pipeline_mode = #tpu.pipeline_mode<synchronous>, transform_indices = @transform_0, window_bounds = array<i64: 2, 512>}, {pipeline_mode = #tpu.pipeline_mode<synchronous>, transform_indices = @transform_1, window_bounds = array<i64: 512, 1280>}, {pipeline_mode = #tpu.pipeline_mode<synchronous>, transform_indices = @transform_2, window_bounds = array<i64: 1, 1280>}, {pipeline_mode = #tpu.pipeline_mode<synchronous>, transform_indices = @transform_3, window_bounds = array<i64: 2, 1280>}]} {
    %c0 = arith.constant 0 : index
    %c0_0 = arith.constant 0 : index
    %0 = vector.load %arg1[%c0, %c0_0] : memref<2x512xf32, #tpu.memory_space<vmem>>, vector<2x512xf32>
    %1 = arith.truncf %0 : vector<2x512xf32> to vector<2x512xbf16>
    %c0_1 = arith.constant 0 : index
    %c0_2 = arith.constant 0 : index
    %2 = vector.load %arg2[%c0_1, %c0_2] : memref<512x1280xbf16, #tpu.memory_space<vmem>>, vector<512x1280xbf16>
    %cst = arith.constant dense<0.000000e+00> : vector<2x1280xf32>
    %3 = tpu.matmul %1, %2, %cst {dimension_numbers = #tpu.dot_dimension_numbers<[1], [0], [0], [1], [0, 0, 1, 1], [], []>} : vector<2x512xbf16>, vector<512x1280xbf16>, vector<2x1280xf32> -> vector<2x1280xf32>
    %c0_3 = arith.constant 0 : index
    %c0_4 = arith.constant 0 : index
    %4 = vector.load %arg3[%c0_3, %c0_4] : memref<1x1280xf32, #tpu.memory_space<vmem>>, vector<1x1280xf32>
    %5 = vector.broadcast %4 : vector<1x1280xf32> to vector<2x1280xf32>
    %6 = arith.addf %3, %5 : vector<2x1280xf32>
    %c0_5 = arith.constant 0 : index
    %c0_6 = arith.constant 0 : index
    %7 = vector.load %arg4[%c0_5, %c0_6] : memref<2x1280xf32, #tpu.memory_space<vmem>>, vector<2x1280xf32>
    tpu.vector_store %arg4[%c0_5, %c0_6], %6 {strides = array<i32>} : memref<2x1280xf32, #tpu.memory_space<vmem>>, vector<2x1280xf32>,
    return
  }
  func.func @transform_0(%arg0: i32) -> (i32, i32) {
    %c0_i32 = arith.constant 0 : i32
    %c0_i32_0 = arith.constant 0 : i32
    %c0_i32_1 = arith.constant 0 : i32
    return %c0_i32, %c0_i32_0 : i32, i32
  }
  func.func @transform_1(%arg0: i32) -> (i32, i32) {
    %c0_i32 = arith.constant 0 : i32
    %c0_i32_0 = arith.constant 0 : i32
    %c0_i32_1 = arith.constant 0 : i32
    return %c0_i32, %c0_i32_0 : i32, i32
  }
  func.func @transform_2(%arg0: i32) -> (i32, i32) {
    %c0_i32 = arith.constant 0 : i32
    %c0_i32_0 = arith.constant 0 : i32
    %c0_i32_1 = arith.constant 0 : i32
    return %c0_i32, %c0_i32_0 : i32, i32
  }
  func.func @transform_3(%arg0: i32) -> (i32, i32) {
    %c0_i32 = arith.constant 0 : i32
    %c0_i32_0 = arith.constant 0 : i32
    %c0_i32_1 = arith.constant 0 : i32
    return %c0_i32, %c0_i32_0 : i32, i32
  }
}

module attributes {stable_mosaic.version = 11 : i64} {
  func.func @_attn_block_kernel(%arg0: i32, %arg1: memref<1x20x128xf32, #tpu.memory_space<vmem>>, %arg2: memref<1x128xf32, #tpu.memory_space<vmem>>, %arg3: memref<1x128xf32, #tpu.memory_space<vmem>>, %arg4: memref<128x128xbf16, #tpu.memory_space<vmem>>, %arg5: memref<128x256xbf16, #tpu.memory_space<vmem>>, %arg6: memref<128x128xbf16, #tpu.memory_space<vmem>>, %arg7: memref<1x128xf32, #tpu.memory_space<vmem>>, %arg8: memref<1x20x128xf32, #tpu.memory_space<vmem>>, %arg9: memref<20x128xf32, #tpu.memory_space<vmem>>) attributes {dimension_semantics = [#tpu.dimension_semantics<parallel>], iteration_bounds = array<i64: 2>, scalar_prefetch = 0 : i64, scratch_operands = 1 : i64, tpu.core_type = #tpu.core_type<tc>, window_params = [{transform_indices = @transform_0, window_bounds = array<i64: 1, 20, 128>}, {pipeline_mode = #tpu.pipeline_mode<synchronous>, transform_indices = @transform_1, window_bounds = array<i64: 1, 128>}, {pipeline_mode = #tpu.pipeline_mode<synchronous>, transform_indices = @transform_2, window_bounds = array<i64: 1, 128>}, {pipeline_mode = #tpu.pipeline_mode<synchronous>, transform_indices = @transform_3, window_bounds = array<i64: 128, 128>}, {pipeline_mode = #tpu.pipeline_mode<synchronous>, transform_indices = @transform_4, window_bounds = array<i64: 128, 256>}, {pipeline_mode = #tpu.pipeline_mode<synchronous>, transform_indices = @transform_5, window_bounds = array<i64: 128, 128>}, {pipeline_mode = #tpu.pipeline_mode<synchronous>, transform_indices = @transform_6, window_bounds = array<i64: 1, 128>}, {transform_indices = @transform_7, window_bounds = array<i64: 1, 20, 128>}]} {
    %c0 = arith.constant 0 : index
    %c0_0 = arith.constant 0 : index
    %c0_1 = arith.constant 0 : index
    %0 = vector.load %arg1[%c0, %c0_0, %c0_1] : memref<1x20x128xf32, #tpu.memory_space<vmem>>, vector<1x20x128xf32>
    %1 = vector.shape_cast %0 : vector<1x20x128xf32> to vector<20x128xf32>
    %cst = arith.constant dense<0.000000e+00> : vector<20xf32>
    %2 = vector.multi_reduction <add>, %1, %cst [1] : vector<20x128xf32> to vector<20xf32>
    %3 = vector.shape_cast %2 : vector<20xf32> to vector<20x1xf32>
    %cst_2 = arith.constant 1.280000e+02 : f32
    %4 = vector.broadcast %cst_2 : f32 to vector<20x1xf32>
    %5 = arith.divf %3, %4 : vector<20x1xf32>
    %6 = vector.broadcast %5 : vector<20x1xf32> to vector<20x128xf32>
    %7 = arith.subf %1, %6 : vector<20x128xf32>
    %8 = arith.mulf %7, %7 : vector<20x128xf32>
    %cst_3 = arith.constant dense<0.000000e+00> : vector<20xf32>
    %9 = vector.multi_reduction <add>, %8, %cst_3 [1] : vector<20x128xf32> to vector<20xf32>
    %10 = vector.shape_cast %9 : vector<20xf32> to vector<20x1xf32>
    %cst_4 = arith.constant 1.280000e+02 : f32
    %11 = vector.broadcast %cst_4 : f32 to vector<20x1xf32>
    %12 = arith.divf %10, %11 : vector<20x1xf32>
    %13 = vector.broadcast %5 : vector<20x1xf32> to vector<20x128xf32>
    %14 = arith.subf %1, %13 : vector<20x128xf32>
    %cst_5 = arith.constant 9.99999974E-6 : f32
    %15 = vector.broadcast %cst_5 : f32 to vector<20x1xf32>
    %16 = arith.addf %12, %15 : vector<20x1xf32>
    %17 = math.rsqrt %16 : vector<20x1xf32>
    %18 = vector.broadcast %17 : vector<20x1xf32> to vector<20x128xf32>
    %19 = arith.mulf %14, %18 : vector<20x128xf32>
    %c0_6 = arith.constant 0 : index
    %c0_7 = arith.constant 0 : index
    %20 = vector.load %arg2[%c0_6, %c0_7] : memref<1x128xf32, #tpu.memory_space<vmem>>, vector<1x128xf32>
    %21 = vector.broadcast %20 : vector<1x128xf32> to vector<20x128xf32>
    %22 = arith.mulf %19, %21 : vector<20x128xf32>
    %c0_8 = arith.constant 0 : index
    %c0_9 = arith.constant 0 : index
    %23 = vector.load %arg3[%c0_8, %c0_9] : memref<1x128xf32, #tpu.memory_space<vmem>>, vector<1x128xf32>
    %24 = vector.broadcast %23 : vector<1x128xf32> to vector<20x128xf32>
    %25 = arith.addf %22, %24 : vector<20x128xf32>
    %26 = arith.truncf %25 : vector<20x128xf32> to vector<20x128xbf16>
    %c0_10 = arith.constant 0 : index
    %c0_11 = arith.constant 0 : index
    %27 = vector.load %arg4[%c0_10, %c0_11] : memref<128x128xbf16, #tpu.memory_space<vmem>>, vector<128x128xbf16>
    %cst_12 = arith.constant dense<0.000000e+00> : vector<20x128xf32>
    %28 = tpu.matmul %26, %27, %cst_12 {dimension_numbers = #tpu.dot_dimension_numbers<[1], [0], [0], [1], [0, 0, 1, 1], [], []>} : vector<20x128xbf16>, vector<128x128xbf16>, vector<20x128xf32> -> vector<20x128xf32>
    %c0_13 = arith.constant 0 : index
    %c0_14 = arith.constant 0 : index
    %29 = vector.load %arg5[%c0_13, %c0_14] : memref<128x256xbf16, #tpu.memory_space<vmem>>, vector<128x256xbf16>
    %cst_15 = arith.constant dense<0.000000e+00> : vector<20x256xf32>
    %30 = tpu.matmul %26, %29, %cst_15 {dimension_numbers = #tpu.dot_dimension_numbers<[1], [0], [0], [1], [0, 0, 1, 1], [], []>} : vector<20x128xbf16>, vector<128x256xbf16>, vector<20x256xf32> -> vector<20x256xf32>
    %31 = vector.extract_strided_slice %28 {offsets = [0, 0], sizes = [20, 16], strides = [1, 1]} : vector<20x128xf32> to vector<20x16xf32>
    %32 = vector.extract_strided_slice %30 {offsets = [0, 0], sizes = [20, 16], strides = [1, 1]} : vector<20x256xf32> to vector<20x16xf32>
    %33 = vector.extract_strided_slice %30 {offsets = [0, 128], sizes = [20, 16], strides = [1, 1]} : vector<20x256xf32> to vector<20x16xf32>
    %cst_16 = arith.constant dense<0.000000e+00> : vector<20x20xf32>
    %34 = tpu.matmul %31, %32, %cst_16 {dimension_numbers = #tpu.dot_dimension_numbers<[1], [1], [0], [0], [0, 0, 1, 0], [], []>} : vector<20x16xf32>, vector<20x16xf32>, vector<20x20xf32> -> vector<20x20xf32>
    %cst_17 = arith.constant 2.500000e-01 : f32
    %35 = vector.broadcast %cst_17 : f32 to vector<20x20xf32>
    %36 = arith.mulf %34, %35 : vector<20x20xf32>
    %cst_18 = arith.constant dense<0xFF800000> : vector<20xf32>
    %37 = vector.multi_reduction <maximumf>, %36, %cst_18 [1] : vector<20x20xf32> to vector<20xf32>
    %38 = vector.shape_cast %37 : vector<20xf32> to vector<20x1xf32>
    %39 = vector.broadcast %38 : vector<20x1xf32> to vector<20x20xf32>
    %40 = arith.subf %36, %39 : vector<20x20xf32>
    %41 = math.exp %40 : vector<20x20xf32>
    %cst_19 = arith.constant dense<0.000000e+00> : vector<20xf32>
    %42 = vector.multi_reduction <add>, %41, %cst_19 [1] : vector<20x20xf32> to vector<20xf32>
    %43 = vector.shape_cast %42 : vector<20xf32> to vector<20x1xf32>
    %44 = vector.broadcast %43 : vector<20x1xf32> to vector<20x20xf32>
    %45 = arith.divf %41, %44 : vector<20x20xf32>
    %cst_20 = arith.constant dense<0.000000e+00> : vector<20x16xf32>
    %46 = tpu.matmul %45, %33, %cst_20 {dimension_numbers = #tpu.dot_dimension_numbers<[1], [0], [0], [1], [0, 0, 1, 1], [], []>} : vector<20x20xf32>, vector<20x16xf32>, vector<20x16xf32> -> vector<20x16xf32>
    %c0_21 = arith.constant 0 : index
    %c0_22 = arith.constant 0 : index
    %47 = vector.load %arg9[%c0_21, %c0_22] : memref<20x128xf32, #tpu.memory_space<vmem>>, vector<20x16xf32>
    tpu.vector_store %arg9[%c0_21, %c0_22], %46 {strides = array<i32>} : memref<20x128xf32, #tpu.memory_space<vmem>>, vector<20x16xf32>,
    %48 = vector.extract_strided_slice %28 {offsets = [0, 16], sizes = [20, 16], strides = [1, 1]} : vector<20x128xf32> to vector<20x16xf32>
    %49 = vector.extract_strided_slice %30 {offsets = [0, 16], sizes = [20, 16], strides = [1, 1]} : vector<20x256xf32> to vector<20x16xf32>
    %50 = vector.extract_strided_slice %30 {offsets = [0, 144], sizes = [20, 16], strides = [1, 1]} : vector<20x256xf32> to vector<20x16xf32>
    %cst_23 = arith.constant dense<0.000000e+00> : vector<20x20xf32>
    %51 = tpu.matmul %48, %49, %cst_23 {dimension_numbers = #tpu.dot_dimension_numbers<[1], [1], [0], [0], [0, 0, 1, 0], [], []>} : vector<20x16xf32>, vector<20x16xf32>, vector<20x20xf32> -> vector<20x20xf32>
    %cst_24 = arith.constant 2.500000e-01 : f32
    %52 = vector.broadcast %cst_24 : f32 to vector<20x20xf32>
    %53 = arith.mulf %51, %52 : vector<20x20xf32>
    %cst_25 = arith.constant dense<0xFF800000> : vector<20xf32>
    %54 = vector.multi_reduction <maximumf>, %53, %cst_25 [1] : vector<20x20xf32> to vector<20xf32>
    %55 = vector.shape_cast %54 : vector<20xf32> to vector<20x1xf32>
    %56 = vector.broadcast %55 : vector<20x1xf32> to vector<20x20xf32>
    %57 = arith.subf %53, %56 : vector<20x20xf32>
    %58 = math.exp %57 : vector<20x20xf32>
    %cst_26 = arith.constant dense<0.000000e+00> : vector<20xf32>
    %59 = vector.multi_reduction <add>, %58, %cst_26 [1] : vector<20x20xf32> to vector<20xf32>
    %60 = vector.shape_cast %59 : vector<20xf32> to vector<20x1xf32>
    %61 = vector.broadcast %60 : vector<20x1xf32> to vector<20x20xf32>
    %62 = arith.divf %58, %61 : vector<20x20xf32>
    %cst_27 = arith.constant dense<0.000000e+00> : vector<20x16xf32>
    %63 = tpu.matmul %62, %50, %cst_27 {dimension_numbers = #tpu.dot_dimension_numbers<[1], [0], [0], [1], [0, 0, 1, 1], [], []>} : vector<20x20xf32>, vector<20x16xf32>, vector<20x16xf32> -> vector<20x16xf32>
    %c0_28 = arith.constant 0 : index
    %c16 = arith.constant 16 : index
    %64 = vector.load %arg9[%c0_28, %c16] : memref<20x128xf32, #tpu.memory_space<vmem>>, vector<20x16xf32>
    tpu.vector_store %arg9[%c0_28, %c16], %63 {strides = array<i32>} : memref<20x128xf32, #tpu.memory_space<vmem>>, vector<20x16xf32>,
    %65 = vector.extract_strided_slice %28 {offsets = [0, 32], sizes = [20, 16], strides = [1, 1]} : vector<20x128xf32> to vector<20x16xf32>
    %66 = vector.extract_strided_slice %30 {offsets = [0, 32], sizes = [20, 16], strides = [1, 1]} : vector<20x256xf32> to vector<20x16xf32>
    %67 = vector.extract_strided_slice %30 {offsets = [0, 160], sizes = [20, 16], strides = [1, 1]} : vector<20x256xf32> to vector<20x16xf32>
    %cst_29 = arith.constant dense<0.000000e+00> : vector<20x20xf32>
    %68 = tpu.matmul %65, %66, %cst_29 {dimension_numbers = #tpu.dot_dimension_numbers<[1], [1], [0], [0], [0, 0, 1, 0], [], []>} : vector<20x16xf32>, vector<20x16xf32>, vector<20x20xf32> -> vector<20x20xf32>
    %cst_30 = arith.constant 2.500000e-01 : f32
    %69 = vector.broadcast %cst_30 : f32 to vector<20x20xf32>
    %70 = arith.mulf %68, %69 : vector<20x20xf32>
    %cst_31 = arith.constant dense<0xFF800000> : vector<20xf32>
    %71 = vector.multi_reduction <maximumf>, %70, %cst_31 [1] : vector<20x20xf32> to vector<20xf32>
    %72 = vector.shape_cast %71 : vector<20xf32> to vector<20x1xf32>
    %73 = vector.broadcast %72 : vector<20x1xf32> to vector<20x20xf32>
    %74 = arith.subf %70, %73 : vector<20x20xf32>
    %75 = math.exp %74 : vector<20x20xf32>
    %cst_32 = arith.constant dense<0.000000e+00> : vector<20xf32>
    %76 = vector.multi_reduction <add>, %75, %cst_32 [1] : vector<20x20xf32> to vector<20xf32>
    %77 = vector.shape_cast %76 : vector<20xf32> to vector<20x1xf32>
    %78 = vector.broadcast %77 : vector<20x1xf32> to vector<20x20xf32>
    %79 = arith.divf %75, %78 : vector<20x20xf32>
    %cst_33 = arith.constant dense<0.000000e+00> : vector<20x16xf32>
    %80 = tpu.matmul %79, %67, %cst_33 {dimension_numbers = #tpu.dot_dimension_numbers<[1], [0], [0], [1], [0, 0, 1, 1], [], []>} : vector<20x20xf32>, vector<20x16xf32>, vector<20x16xf32> -> vector<20x16xf32>
    %c0_34 = arith.constant 0 : index
    %c32 = arith.constant 32 : index
    %81 = vector.load %arg9[%c0_34, %c32] : memref<20x128xf32, #tpu.memory_space<vmem>>, vector<20x16xf32>
    tpu.vector_store %arg9[%c0_34, %c32], %80 {strides = array<i32>} : memref<20x128xf32, #tpu.memory_space<vmem>>, vector<20x16xf32>,
    %82 = vector.extract_strided_slice %28 {offsets = [0, 48], sizes = [20, 16], strides = [1, 1]} : vector<20x128xf32> to vector<20x16xf32>
    %83 = vector.extract_strided_slice %30 {offsets = [0, 48], sizes = [20, 16], strides = [1, 1]} : vector<20x256xf32> to vector<20x16xf32>
    %84 = vector.extract_strided_slice %30 {offsets = [0, 176], sizes = [20, 16], strides = [1, 1]} : vector<20x256xf32> to vector<20x16xf32>
    %cst_35 = arith.constant dense<0.000000e+00> : vector<20x20xf32>
    %85 = tpu.matmul %82, %83, %cst_35 {dimension_numbers = #tpu.dot_dimension_numbers<[1], [1], [0], [0], [0, 0, 1, 0], [], []>} : vector<20x16xf32>, vector<20x16xf32>, vector<20x20xf32> -> vector<20x20xf32>
    %cst_36 = arith.constant 2.500000e-01 : f32
    %86 = vector.broadcast %cst_36 : f32 to vector<20x20xf32>
    %87 = arith.mulf %85, %86 : vector<20x20xf32>
    %cst_37 = arith.constant dense<0xFF800000> : vector<20xf32>
    %88 = vector.multi_reduction <maximumf>, %87, %cst_37 [1] : vector<20x20xf32> to vector<20xf32>
    %89 = vector.shape_cast %88 : vector<20xf32> to vector<20x1xf32>
    %90 = vector.broadcast %89 : vector<20x1xf32> to vector<20x20xf32>
    %91 = arith.subf %87, %90 : vector<20x20xf32>
    %92 = math.exp %91 : vector<20x20xf32>
    %cst_38 = arith.constant dense<0.000000e+00> : vector<20xf32>
    %93 = vector.multi_reduction <add>, %92, %cst_38 [1] : vector<20x20xf32> to vector<20xf32>
    %94 = vector.shape_cast %93 : vector<20xf32> to vector<20x1xf32>
    %95 = vector.broadcast %94 : vector<20x1xf32> to vector<20x20xf32>
    %96 = arith.divf %92, %95 : vector<20x20xf32>
    %cst_39 = arith.constant dense<0.000000e+00> : vector<20x16xf32>
    %97 = tpu.matmul %96, %84, %cst_39 {dimension_numbers = #tpu.dot_dimension_numbers<[1], [0], [0], [1], [0, 0, 1, 1], [], []>} : vector<20x20xf32>, vector<20x16xf32>, vector<20x16xf32> -> vector<20x16xf32>
    %c0_40 = arith.constant 0 : index
    %c48 = arith.constant 48 : index
    %98 = vector.load %arg9[%c0_40, %c48] : memref<20x128xf32, #tpu.memory_space<vmem>>, vector<20x16xf32>
    tpu.vector_store %arg9[%c0_40, %c48], %97 {strides = array<i32>} : memref<20x128xf32, #tpu.memory_space<vmem>>, vector<20x16xf32>,
    %99 = vector.extract_strided_slice %28 {offsets = [0, 64], sizes = [20, 16], strides = [1, 1]} : vector<20x128xf32> to vector<20x16xf32>
    %100 = vector.extract_strided_slice %30 {offsets = [0, 64], sizes = [20, 16], strides = [1, 1]} : vector<20x256xf32> to vector<20x16xf32>
    %101 = vector.extract_strided_slice %30 {offsets = [0, 192], sizes = [20, 16], strides = [1, 1]} : vector<20x256xf32> to vector<20x16xf32>
    %cst_41 = arith.constant dense<0.000000e+00> : vector<20x20xf32>
    %102 = tpu.matmul %99, %100, %cst_41 {dimension_numbers = #tpu.dot_dimension_numbers<[1], [1], [0], [0], [0, 0, 1, 0], [], []>} : vector<20x16xf32>, vector<20x16xf32>, vector<20x20xf32> -> vector<20x20xf32>
    %cst_42 = arith.constant 2.500000e-01 : f32
    %103 = vector.broadcast %cst_42 : f32 to vector<20x20xf32>
    %104 = arith.mulf %102, %103 : vector<20x20xf32>
    %cst_43 = arith.constant dense<0xFF800000> : vector<20xf32>
    %105 = vector.multi_reduction <maximumf>, %104, %cst_43 [1] : vector<20x20xf32> to vector<20xf32>
    %106 = vector.shape_cast %105 : vector<20xf32> to vector<20x1xf32>
    %107 = vector.broadcast %106 : vector<20x1xf32> to vector<20x20xf32>
    %108 = arith.subf %104, %107 : vector<20x20xf32>
    %109 = math.exp %108 : vector<20x20xf32>
    %cst_44 = arith.constant dense<0.000000e+00> : vector<20xf32>
    %110 = vector.multi_reduction <add>, %109, %cst_44 [1] : vector<20x20xf32> to vector<20xf32>
    %111 = vector.shape_cast %110 : vector<20xf32> to vector<20x1xf32>
    %112 = vector.broadcast %111 : vector<20x1xf32> to vector<20x20xf32>
    %113 = arith.divf %109, %112 : vector<20x20xf32>
    %cst_45 = arith.constant dense<0.000000e+00> : vector<20x16xf32>
    %114 = tpu.matmul %113, %101, %cst_45 {dimension_numbers = #tpu.dot_dimension_numbers<[1], [0], [0], [1], [0, 0, 1, 1], [], []>} : vector<20x20xf32>, vector<20x16xf32>, vector<20x16xf32> -> vector<20x16xf32>
    %c0_46 = arith.constant 0 : index
    %c64 = arith.constant 64 : index
    %115 = vector.load %arg9[%c0_46, %c64] : memref<20x128xf32, #tpu.memory_space<vmem>>, vector<20x16xf32>
    tpu.vector_store %arg9[%c0_46, %c64], %114 {strides = array<i32>} : memref<20x128xf32, #tpu.memory_space<vmem>>, vector<20x16xf32>,
    %116 = vector.extract_strided_slice %28 {offsets = [0, 80], sizes = [20, 16], strides = [1, 1]} : vector<20x128xf32> to vector<20x16xf32>
    %117 = vector.extract_strided_slice %30 {offsets = [0, 80], sizes = [20, 16], strides = [1, 1]} : vector<20x256xf32> to vector<20x16xf32>
    %118 = vector.extract_strided_slice %30 {offsets = [0, 208], sizes = [20, 16], strides = [1, 1]} : vector<20x256xf32> to vector<20x16xf32>
    %cst_47 = arith.constant dense<0.000000e+00> : vector<20x20xf32>
    %119 = tpu.matmul %116, %117, %cst_47 {dimension_numbers = #tpu.dot_dimension_numbers<[1], [1], [0], [0], [0, 0, 1, 0], [], []>} : vector<20x16xf32>, vector<20x16xf32>, vector<20x20xf32> -> vector<20x20xf32>
    %cst_48 = arith.constant 2.500000e-01 : f32
    %120 = vector.broadcast %cst_48 : f32 to vector<20x20xf32>
    %121 = arith.mulf %119, %120 : vector<20x20xf32>
    %cst_49 = arith.constant dense<0xFF800000> : vector<20xf32>
    %122 = vector.multi_reduction <maximumf>, %121, %cst_49 [1] : vector<20x20xf32> to vector<20xf32>
    %123 = vector.shape_cast %122 : vector<20xf32> to vector<20x1xf32>
    %124 = vector.broadcast %123 : vector<20x1xf32> to vector<20x20xf32>
    %125 = arith.subf %121, %124 : vector<20x20xf32>
    %126 = math.exp %125 : vector<20x20xf32>
    %cst_50 = arith.constant dense<0.000000e+00> : vector<20xf32>
    %127 = vector.multi_reduction <add>, %126, %cst_50 [1] : vector<20x20xf32> to vector<20xf32>
    %128 = vector.shape_cast %127 : vector<20xf32> to vector<20x1xf32>
    %129 = vector.broadcast %128 : vector<20x1xf32> to vector<20x20xf32>
    %130 = arith.divf %126, %129 : vector<20x20xf32>
    %cst_51 = arith.constant dense<0.000000e+00> : vector<20x16xf32>
    %131 = tpu.matmul %130, %118, %cst_51 {dimension_numbers = #tpu.dot_dimension_numbers<[1], [0], [0], [1], [0, 0, 1, 1], [], []>} : vector<20x20xf32>, vector<20x16xf32>, vector<20x16xf32> -> vector<20x16xf32>
    %c0_52 = arith.constant 0 : index
    %c80 = arith.constant 80 : index
    %132 = vector.load %arg9[%c0_52, %c80] : memref<20x128xf32, #tpu.memory_space<vmem>>, vector<20x16xf32>
    tpu.vector_store %arg9[%c0_52, %c80], %131 {strides = array<i32>} : memref<20x128xf32, #tpu.memory_space<vmem>>, vector<20x16xf32>,
    %133 = vector.extract_strided_slice %28 {offsets = [0, 96], sizes = [20, 16], strides = [1, 1]} : vector<20x128xf32> to vector<20x16xf32>
    %134 = vector.extract_strided_slice %30 {offsets = [0, 96], sizes = [20, 16], strides = [1, 1]} : vector<20x256xf32> to vector<20x16xf32>
    %135 = vector.extract_strided_slice %30 {offsets = [0, 224], sizes = [20, 16], strides = [1, 1]} : vector<20x256xf32> to vector<20x16xf32>
    %cst_53 = arith.constant dense<0.000000e+00> : vector<20x20xf32>
    %136 = tpu.matmul %133, %134, %cst_53 {dimension_numbers = #tpu.dot_dimension_numbers<[1], [1], [0], [0], [0, 0, 1, 0], [], []>} : vector<20x16xf32>, vector<20x16xf32>, vector<20x20xf32> -> vector<20x20xf32>
    %cst_54 = arith.constant 2.500000e-01 : f32
    %137 = vector.broadcast %cst_54 : f32 to vector<20x20xf32>
    %138 = arith.mulf %136, %137 : vector<20x20xf32>
    %cst_55 = arith.constant dense<0xFF800000> : vector<20xf32>
    %139 = vector.multi_reduction <maximumf>, %138, %cst_55 [1] : vector<20x20xf32> to vector<20xf32>
    %140 = vector.shape_cast %139 : vector<20xf32> to vector<20x1xf32>
    %141 = vector.broadcast %140 : vector<20x1xf32> to vector<20x20xf32>
    %142 = arith.subf %138, %141 : vector<20x20xf32>
    %143 = math.exp %142 : vector<20x20xf32>
    %cst_56 = arith.constant dense<0.000000e+00> : vector<20xf32>
    %144 = vector.multi_reduction <add>, %143, %cst_56 [1] : vector<20x20xf32> to vector<20xf32>
    %145 = vector.shape_cast %144 : vector<20xf32> to vector<20x1xf32>
    %146 = vector.broadcast %145 : vector<20x1xf32> to vector<20x20xf32>
    %147 = arith.divf %143, %146 : vector<20x20xf32>
    %cst_57 = arith.constant dense<0.000000e+00> : vector<20x16xf32>
    %148 = tpu.matmul %147, %135, %cst_57 {dimension_numbers = #tpu.dot_dimension_numbers<[1], [0], [0], [1], [0, 0, 1, 1], [], []>} : vector<20x20xf32>, vector<20x16xf32>, vector<20x16xf32> -> vector<20x16xf32>
    %c0_58 = arith.constant 0 : index
    %c96 = arith.constant 96 : index
    %149 = vector.load %arg9[%c0_58, %c96] : memref<20x128xf32, #tpu.memory_space<vmem>>, vector<20x16xf32>
    tpu.vector_store %arg9[%c0_58, %c96], %148 {strides = array<i32>} : memref<20x128xf32, #tpu.memory_space<vmem>>, vector<20x16xf32>,
    %150 = vector.extract_strided_slice %28 {offsets = [0, 112], sizes = [20, 16], strides = [1, 1]} : vector<20x128xf32> to vector<20x16xf32>
    %151 = vector.extract_strided_slice %30 {offsets = [0, 112], sizes = [20, 16], strides = [1, 1]} : vector<20x256xf32> to vector<20x16xf32>
    %152 = vector.extract_strided_slice %30 {offsets = [0, 240], sizes = [20, 16], strides = [1, 1]} : vector<20x256xf32> to vector<20x16xf32>
    %cst_59 = arith.constant dense<0.000000e+00> : vector<20x20xf32>
    %153 = tpu.matmul %150, %151, %cst_59 {dimension_numbers = #tpu.dot_dimension_numbers<[1], [1], [0], [0], [0, 0, 1, 0], [], []>} : vector<20x16xf32>, vector<20x16xf32>, vector<20x20xf32> -> vector<20x20xf32>
    %cst_60 = arith.constant 2.500000e-01 : f32
    %154 = vector.broadcast %cst_60 : f32 to vector<20x20xf32>
    %155 = arith.mulf %153, %154 : vector<20x20xf32>
    %cst_61 = arith.constant dense<0xFF800000> : vector<20xf32>
    %156 = vector.multi_reduction <maximumf>, %155, %cst_61 [1] : vector<20x20xf32> to vector<20xf32>
    %157 = vector.shape_cast %156 : vector<20xf32> to vector<20x1xf32>
    %158 = vector.broadcast %157 : vector<20x1xf32> to vector<20x20xf32>
    %159 = arith.subf %155, %158 : vector<20x20xf32>
    %160 = math.exp %159 : vector<20x20xf32>
    %cst_62 = arith.constant dense<0.000000e+00> : vector<20xf32>
    %161 = vector.multi_reduction <add>, %160, %cst_62 [1] : vector<20x20xf32> to vector<20xf32>
    %162 = vector.shape_cast %161 : vector<20xf32> to vector<20x1xf32>
    %163 = vector.broadcast %162 : vector<20x1xf32> to vector<20x20xf32>
    %164 = arith.divf %160, %163 : vector<20x20xf32>
    %cst_63 = arith.constant dense<0.000000e+00> : vector<20x16xf32>
    %165 = tpu.matmul %164, %152, %cst_63 {dimension_numbers = #tpu.dot_dimension_numbers<[1], [0], [0], [1], [0, 0, 1, 1], [], []>} : vector<20x20xf32>, vector<20x16xf32>, vector<20x16xf32> -> vector<20x16xf32>
    %c0_64 = arith.constant 0 : index
    %c112 = arith.constant 112 : index
    %166 = vector.load %arg9[%c0_64, %c112] : memref<20x128xf32, #tpu.memory_space<vmem>>, vector<20x16xf32>
    tpu.vector_store %arg9[%c0_64, %c112], %165 {strides = array<i32>} : memref<20x128xf32, #tpu.memory_space<vmem>>, vector<20x16xf32>,
    %c0_65 = arith.constant 0 : index
    %c0_66 = arith.constant 0 : index
    %167 = vector.load %arg9[%c0_65, %c0_66] : memref<20x128xf32, #tpu.memory_space<vmem>>, vector<20x128xf32>
    %168 = arith.truncf %167 : vector<20x128xf32> to vector<20x128xbf16>
    %c0_67 = arith.constant 0 : index
    %c0_68 = arith.constant 0 : index
    %169 = vector.load %arg6[%c0_67, %c0_68] : memref<128x128xbf16, #tpu.memory_space<vmem>>, vector<128x128xbf16>
    %cst_69 = arith.constant dense<0.000000e+00> : vector<20x128xf32>
    %170 = tpu.matmul %168, %169, %cst_69 {dimension_numbers = #tpu.dot_dimension_numbers<[1], [0], [0], [1], [0, 0, 1, 1], [], []>} : vector<20x128xbf16>, vector<128x128xbf16>, vector<20x128xf32> -> vector<20x128xf32>
    %c0_70 = arith.constant 0 : index
    %c0_71 = arith.constant 0 : index
    %171 = vector.load %arg7[%c0_70, %c0_71] : memref<1x128xf32, #tpu.memory_space<vmem>>, vector<1x128xf32>
    %172 = vector.broadcast %171 : vector<1x128xf32> to vector<20x128xf32>
    %173 = arith.addf %170, %172 : vector<20x128xf32>
    %174 = arith.addf %1, %173 : vector<20x128xf32>
    %c0_72 = arith.constant 0 : index
    %c0_73 = arith.constant 0 : index
    %c0_74 = arith.constant 0 : index
    %175 = vector.load %arg8[%c0_72, %c0_73, %c0_74] : memref<1x20x128xf32, #tpu.memory_space<vmem>>, vector<1x20x128xf32>
    %176 = vector.shape_cast %175 : vector<1x20x128xf32> to vector<20x128xf32>
    %177 = vector.shape_cast %174 : vector<20x128xf32> to vector<1x20x128xf32>
    tpu.vector_store %arg8[%c0_72, %c0_73, %c0_74], %177 {strides = array<i32>} : memref<1x20x128xf32, #tpu.memory_space<vmem>>, vector<1x20x128xf32>,
    return
  }
  func.func @transform_0(%arg0: i32) -> (i32, i32, i32) {
    %c0_i32 = arith.constant 0 : i32
    %c0_i32_0 = arith.constant 0 : i32
    %c0_i32_1 = arith.constant 0 : i32
    return %arg0, %c0_i32, %c0_i32_0 : i32, i32, i32
  }
  func.func @transform_1(%arg0: i32) -> (i32, i32) {
    %c0_i32 = arith.constant 0 : i32
    %c0_i32_0 = arith.constant 0 : i32
    %c0_i32_1 = arith.constant 0 : i32
    return %c0_i32, %c0_i32_0 : i32, i32
  }
  func.func @transform_2(%arg0: i32) -> (i32, i32) {
    %c0_i32 = arith.constant 0 : i32
    %c0_i32_0 = arith.constant 0 : i32
    %c0_i32_1 = arith.constant 0 : i32
    return %c0_i32, %c0_i32_0 : i32, i32
  }
  func.func @transform_3(%arg0: i32) -> (i32, i32) {
    %c0_i32 = arith.constant 0 : i32
    %c0_i32_0 = arith.constant 0 : i32
    %c0_i32_1 = arith.constant 0 : i32
    return %c0_i32, %c0_i32_0 : i32, i32
  }
  func.func @transform_4(%arg0: i32) -> (i32, i32) {
    %c0_i32 = arith.constant 0 : i32
    %c0_i32_0 = arith.constant 0 : i32
    %c0_i32_1 = arith.constant 0 : i32
    return %c0_i32, %c0_i32_0 : i32, i32
  }
  func.func @transform_5(%arg0: i32) -> (i32, i32) {
    %c0_i32 = arith.constant 0 : i32
    %c0_i32_0 = arith.constant 0 : i32
    %c0_i32_1 = arith.constant 0 : i32
    return %c0_i32, %c0_i32_0 : i32, i32
  }
  func.func @transform_6(%arg0: i32) -> (i32, i32) {
    %c0_i32 = arith.constant 0 : i32
    %c0_i32_0 = arith.constant 0 : i32
    %c0_i32_1 = arith.constant 0 : i32
    return %c0_i32, %c0_i32_0 : i32, i32
  }
  func.func @transform_7(%arg0: i32) -> (i32, i32, i32) {
    %c0_i32 = arith.constant 0 : i32
    %c0_i32_0 = arith.constant 0 : i32
    %c0_i32_1 = arith.constant 0 : i32
    return %arg0, %c0_i32, %c0_i32_0 : i32, i32, i32
  }
}

</mosaic_0001>

<llo_original>
// kernel: transformer_mapper_pallas.7
$region0: #{transformer_mapper_pallas.7}
  #allocation0 [shape = 'u32[]', space=smem, size = 0x4, offset = 0x4, fixed_abs, tag = 'smem constant byte address 0x4 - core index']
  #allocation1 [shape = 'u32[144,128]{1,0:T(1,128)}', space=vmem, size = 0x12000, scoped, tag = 'internal scratch']
  %s0 = inlined_call_operand.vmem [shape: f32[40,128], index: 0, kind: input, shape index: {}]
  %s1 = inlined_call_operand.vmem [shape: f32[1,128], index: 1, kind: input, shape index: {}]
  %s2 = inlined_call_operand.vmem [shape: f32[1,128], index: 2, kind: input, shape index: {}]
  %s3 = inlined_call_operand.vmem [shape: bf16[128,256], index: 3, kind: input, shape index: {}]
  %s4 = inlined_call_operand.vmem [shape: f32[1,256], index: 4, kind: input, shape index: {}]
  %s5 = inlined_call_operand.vmem [shape: bf16[256,128], index: 5, kind: input, shape index: {}]
  %s6 = inlined_call_operand.vmem [shape: f32[1,128], index: 6, kind: input, shape index: {}]
  %s7 = inlined_call_operand.vmem [shape: f32[40,128], index: 7, kind: output, shape index: {}]
  %s8 = sld [smem:[#allocation0]]
  $region38: #{transformer_mapper_pallas.7} parent=0
    _
  %s10 = ssub.s32 1, %s8
  %s11 = scalar_select 0, %s10, %s8
  // Predicated region
  $region2: #{transformer_mapper_pallas.7} parent=0 // pred_check
    _
  $region3: #{transformer_mapper_pallas.7} parent=0 // pred_check_branch
    %13 = sbr.rel (0) target = $region5
  $region4: #{transformer_mapper_pallas.7} parent=0 // pred_region
    _
  $region5: #{transformer_mapper_pallas.7} parent=0 // pred_fallthru
    _
  // Predicated region
  $region6: #{transformer_mapper_pallas.7} parent=0 // pred_check
    _
  $region7: #{transformer_mapper_pallas.7} parent=0 // pred_check_branch
    %15 = sbr.rel (0) target = $region9
  $region8: #{transformer_mapper_pallas.7} parent=0 // pred_region
    _
  $region9: #{transformer_mapper_pallas.7} parent=0 // pred_fallthru
    _
  // Predicated region
  $region10: #{transformer_mapper_pallas.7} parent=0 // pred_check
    _
  $region11: #{transformer_mapper_pallas.7} parent=0 // pred_check_branch
    %17 = sbr.rel (0) target = $region13
  $region12: #{transformer_mapper_pallas.7} parent=0 // pred_region
    _
  $region13: #{transformer_mapper_pallas.7} parent=0 // pred_fallthru
    _
  // Predicated region
  $region14: #{transformer_mapper_pallas.7} parent=0 // pred_check
    _
  $region15: #{transformer_mapper_pallas.7} parent=0 // pred_check_branch
    %19 = sbr.rel (0) target = $region17
  $region16: #{transformer_mapper_pallas.7} parent=0 // pred_region
    _
  $region17: #{transformer_mapper_pallas.7} parent=0 // pred_fallthru
    _
  // Predicated region
  $region18: #{transformer_mapper_pallas.7} parent=0 // pred_check
    _
  $region19: #{transformer_mapper_pallas.7} parent=0 // pred_check_branch
    %21 = sbr.rel (0) target = $region21
  $region20: #{transformer_mapper_pallas.7} parent=0 // pred_region
    _
  $region21: #{transformer_mapper_pallas.7} parent=0 // pred_fallthru
    _
  // Predicated region
  $region22: #{transformer_mapper_pallas.7} parent=0 // pred_check
    _
  $region23: #{transformer_mapper_pallas.7} parent=0 // pred_check_branch
    %23 = sbr.rel (0) target = $region25
  $region24: #{transformer_mapper_pallas.7} parent=0 // pred_region
    _
  $region25: #{transformer_mapper_pallas.7} parent=0 // pred_fallthru
    _
  // Predicated region
  $region26: #{transformer_mapper_pallas.7} parent=0 // pred_check
    _
  $region27: #{transformer_mapper_pallas.7} parent=0 // pred_check_branch
    %25 = sbr.rel (0) target = $region29
  $region28: #{transformer_mapper_pallas.7} parent=0 // pred_region
    _
  $region29: #{transformer_mapper_pallas.7} parent=0 // pred_fallthru
    _
  %v27 = vld [vmem:[%s0] sm:$0xff]
  %v28 = vld [vmem:[%s0 + $0x8] sm:$0xff]
  %v29 = vld [vmem:[%s0 + $0x10] sm:$0xff]
  %v30 = vld [vmem:[%s0 + $0x18] sm:$0xff]
  %v31 = vld [vmem:[%s0 + $0x20] sm:$0xff]
  %32 = vadd.xlane.f32.xlu0 %v27
  %v33 = vpop.xlane.xlu0 %32
  %34 = vadd.xlane.f32.xlu0 %v28
  %v35 = vpop.xlane.xlu0 %34
  %36 = vadd.xlane.f32.xlu0 %v29
  %v37 = vpop.xlane.xlu0 %36
  %38 = vadd.xlane.f32.xlu0 %v30
  %v39 = vpop.xlane.xlu0 %38
  %40 = vadd.xlane.f32.xlu0 %v31
  %v41 = vpop.xlane.xlu0 %40
  %v42 = vrcp.pop 128.0
  %v43 = vmul.f32 %v33, %v42
  %v44 = vmul.f32 %v35, %v42
  %v45 = vmul.f32 %v37, %v42
  %v46 = vmul.f32 %v39, %v42
  %v47 = vmul.f32 %v41, %v42
  %v48 = vsub.f32 %v27, %v43
  %v49 = vsub.f32 %v28, %v44
  %v50 = vsub.f32 %v29, %v45
  %v51 = vsub.f32 %v30, %v46
  %v52 = vsub.f32 %v31, %v47
  %v53 = vmul.f32 %v48, %v48
  %v54 = vmul.f32 %v49, %v49
  %v55 = vmul.f32 %v50, %v50
  %v56 = vmul.f32 %v51, %v51
  %v57 = vmul.f32 %v52, %v52
  %58 = vadd.xlane.f32.xlu0 %v53
  %v59 = vpop.xlane.xlu0 %58
  %60 = vadd.xlane.f32.xlu0 %v54
  %v61 = vpop.xlane.xlu0 %60
  %62 = vadd.xlane.f32.xlu0 %v55
  %v63 = vpop.xlane.xlu0 %62
  %64 = vadd.xlane.f32.xlu0 %v56
  %v65 = vpop.xlane.xlu0 %64
  %66 = vadd.xlane.f32.xlu0 %v57
  %v67 = vpop.xlane.xlu0 %66
  %v68 = vmul.f32 %v59, %v42
  %v69 = vmul.f32 %v61, %v42
  %v70 = vmul.f32 %v63, %v42
  %v71 = vmul.f32 %v65, %v42
  %v72 = vmul.f32 %v67, %v42
  %v73 = vadd.f32 %v68, 1e-05
  %v74 = vadd.f32 %v69, 1e-05
  %v75 = vadd.f32 %v70, 1e-05
  %v76 = vadd.f32 %v71, 1e-05
  %v77 = vadd.f32 %v72, 1e-05
  %v78 = vrsqrt.pop %v73
  %v79 = vrsqrt.pop %v74
  %v80 = vrsqrt.pop %v75
  %v81 = vrsqrt.pop %v76
  %v82 = vrsqrt.pop %v77
  %v83 = vmul.f32 %v48, %v78
  %v84 = vmul.f32 %v49, %v79
  %v85 = vmul.f32 %v50, %v80
  %v86 = vmul.f32 %v51, %v81
  %v87 = vmul.f32 %v52, %v82
  %v88 = vld [vmem:[%s1] sm:$0x1]
  %v90 = vlaneseq
  %v91 = vshrl.u32 %v90, 7
  %v92 = vsub.s32 0, %v91
  %v93 = vrot.slane %v88, %v92
  %v95 = vmul.f32 %v83, %v93
  %v96 = vmul.f32 %v84, %v93
  %v97 = vmul.f32 %v85, %v93
  %v98 = vmul.f32 %v86, %v93
  %v99 = vmul.f32 %v87, %v93
  %v100 = vld [vmem:[%s2] sm:$0x1]
  %v102 = vlaneseq
  %v103 = vshrl.u32 %v102, 7
  %v104 = vsub.s32 0, %v103
  %v105 = vrot.slane %v100, %v104
  %v107 = vadd.f32 %v95, %v105
  %v108 = vadd.f32 %v96, %v105
  %v109 = vadd.f32 %v97, %v105
  %v110 = vadd.f32 %v98, %v105
  %v111 = vadd.f32 %v99, %v105
  %v112 = vpack.c.bf16 %v108, %v107
  %v113 = vpack.c.bf16 %v110, %v109
  %v114 = vpack.c.bf16 %v111, %v111
  %v115 = vld [vmem:[%s3] sm:$0xff]
  %v116 = vld [vmem:[%s3 + $0x8] sm:$0xff]
  %v117 = vld [vmem:[%s3 + $0x10] sm:$0xff]
  %v118 = vld [vmem:[%s3 + $0x18] sm:$0xff]
  %v119 = vld [vmem:[%s3 + $0x20] sm:$0xff]
  %v120 = vld [vmem:[%s3 + $0x28] sm:$0xff]
  %v121 = vld [vmem:[%s3 + $0x30] sm:$0xff]
  %v122 = vld [vmem:[%s3 + $0x38] sm:$0xff]
  %v123 = vld [vmem:[%s3 + $0x40] sm:$0xff]
  %v124 = vld [vmem:[%s3 + $0x48] sm:$0xff]
  %v125 = vld [vmem:[%s3 + $0x50] sm:$0xff]
  %v126 = vld [vmem:[%s3 + $0x58] sm:$0xff]
  %v127 = vld [vmem:[%s3 + $0x60] sm:$0xff]
  %v128 = vld [vmem:[%s3 + $0x68] sm:$0xff]
  %v129 = vld [vmem:[%s3 + $0x70] sm:$0xff]
  %v130 = vld [vmem:[%s3 + $0x78] sm:$0xff]
  %v131 = vld [vmem:[%s4] sm:$0x3]
  %v133 = vlaneseq
  %v134 = vshrl.u32 %v133, 7
  %v135 = vsub.s32 0, %v134
  %v136 = vrot.slane %v131, %v135
  %v137 = vlaneseq
  %v138 = vshrl.u32 %v137, 7
  %v139 = vsub.s32 1, %v138
  %v140 = vrot.slane %v131, %v139
  %v159 = vunpack.c.l.b16 %v115
  %v160 = vunpack.c.h.b16 %v115
  %v161 = vunpack.c.l.b16 %v116
  %v162 = vunpack.c.h.b16 %v116
  %v163 = vunpack.c.l.b16 %v117
  %v164 = vunpack.c.h.b16 %v117
  %v165 = vunpack.c.l.b16 %v118
  %v166 = vunpack.c.h.b16 %v118
  %v167 = vunpack.c.l.b16 %v119
  %v168 = vunpack.c.h.b16 %v119
  %v169 = vunpack.c.l.b16 %v120
  %v170 = vunpack.c.h.b16 %v120
  %v171 = vunpack.c.l.b16 %v121
  %v172 = vunpack.c.h.b16 %v121
  %v173 = vunpack.c.l.b16 %v122
  %v174 = vunpack.c.h.b16 %v122
  %v175 = vunpack.c.l.b16 %v123
  %v176 = vunpack.c.h.b16 %v123
  %v177 = vunpack.c.l.b16 %v124
  %v178 = vunpack.c.h.b16 %v124
  %v179 = vunpack.c.l.b16 %v125
  %v180 = vunpack.c.h.b16 %v125
  %v181 = vunpack.c.l.b16 %v126
  %v182 = vunpack.c.h.b16 %v126
  %v183 = vunpack.c.l.b16 %v127
  %v184 = vunpack.c.h.b16 %v127
  %v185 = vunpack.c.l.b16 %v128
  %v186 = vunpack.c.h.b16 %v128
  %v187 = vunpack.c.l.b16 %v129
  %v188 = vunpack.c.h.b16 %v129
  %v189 = vunpack.c.l.b16 %v130
  %v190 = vunpack.c.h.b16 %v130
  %v191 = vpack.c.b16 %v161, %v159
  %v192 = vpack.c.b16 %v162, %v160
  %v193 = vpack.c.b16 %v165, %v163
  %v194 = vpack.c.b16 %v166, %v164
  %v195 = vpack.c.b16 %v169, %v167
  %v196 = vpack.c.b16 %v170, %v168
  %v197 = vpack.c.b16 %v173, %v171
  %v198 = vpack.c.b16 %v174, %v172
  %v199 = vpack.c.b16 %v177, %v175
  %v200 = vpack.c.b16 %v178, %v176
  %v201 = vpack.c.b16 %v181, %v179
  %v202 = vpack.c.b16 %v182, %v180
  %v203 = vpack.c.b16 %v185, %v183
  %v204 = vpack.c.b16 %v186, %v184
  %v205 = vpack.c.b16 %v189, %v187
  %v206 = vpack.c.b16 %v190, %v188
  %223 = vmatprep.subr.bf16.mxu0 %v206
  %224 = vmatpush1.bf16.msra.mxu0 %v205
  %225 = vmatprep.subr.bf16.mxu0 %v204
  %226 = vmatpush1.bf16.msra.mxu0 %v203
  %227 = vmatprep.subr.bf16.mxu0 %v202
  %228 = vmatpush1.bf16.msra.mxu0 %v201
  %229 = vmatprep.subr.bf16.mxu0 %v200
  %230 = vmatpush1.bf16.msra.mxu0 %v199
  %231 = vmatprep.subr.bf16.mxu0 %v198
  %232 = vmatpush1.bf16.msra.mxu0 %v197
  %233 = vmatprep.subr.bf16.mxu0 %v196
  %234 = vmatpush1.bf16.msra.mxu0 %v195
  %235 = vmatprep.subr.bf16.mxu0 %v194
  %236 = vmatpush1.bf16.msra.mxu0 %v193
  %237 = vmatprep.subr.bf16.mxu0 %v192
  %238 = vmatpush1.bf16.msra.mxu0 %v191
  %239 = vmatprep.subr.bf16.mxu0 0
  %240 = vmatpush2.bf16.msra.mxu0 0
  %241 = vmatprep.subr.bf16.mxu0 0
  %242 = vmatpush2.bf16.msra.mxu0 0
  %243 = vmatprep.subr.bf16.mxu0 0
  %244 = vmatpush2.bf16.msra.mxu0 0
  %245 = vmatprep.subr.bf16.mxu0 0
  %246 = vmatpush2.bf16.msra.mxu0 0
  %247 = vmatprep.subr.bf16.mxu0 0
  %248 = vmatpush2.bf16.msra.mxu0 0
  %249 = vmatprep.subr.bf16.mxu0 0
  %250 = vmatpush2.bf16.msra.mxu0 0
  %251 = vmatprep.subr.bf16.mxu0 0
  %252 = vmatpush2.bf16.msra.mxu0 0
  %253 = vmatprep.subr.bf16.mxu0 0
  %254 = vmatpush2.bf16.msra.mxu0 0
  %255 = vmatprep.mubr.bf16.mxu0 0
  %256 = vmatmul.mubr.bf16.gmra.mxu0 %v112
  %v257 = vpop.f32.mrf.mxu0
  %v258 = vadd.f32 %v136, %v257
  %v259 = vpop.f32.mrf.mxu0
  %v260 = vadd.f32 %v140, %v259
  %v261 = vpop.f32.mrf.mxu0
  %v262 = vadd.f32 %v136, %v261
  %v263 = vpop.f32.mrf.mxu0
  %v264 = vadd.f32 %v140, %v263
  %265 = vmatprep.mubr.bf16.mxu0 0
  %266 = vmatmul.mubr.bf16.gmra.mxu0 %v113
  %v267 = vpop.f32.mrf.mxu0
  %v268 = vadd.f32 %v136, %v267
  %v269 = vpop.f32.mrf.mxu0
  %v270 = vadd.f32 %v140, %v269
  %v271 = vpop.f32.mrf.mxu0
  %v272 = vadd.f32 %v136, %v271
  %v273 = vpop.f32.mrf.mxu0
  %v274 = vadd.f32 %v140, %v273
  %275 = vmatprep.mubr.bf16.mxu0 0
  %276 = vmatmul.mubr.bf16.gmra.mxu0 %v114
  %v277 = vpop.f32.mrf.mxu0
  %v278 = vadd.f32 %v136, %v277
  %v279 = vpop.f32.mrf.mxu0
  %v280 = vadd.f32 %v140, %v279
  %v281 = vpop.f32.mrf.mxu0
  %v282 = vpop.f32.mrf.mxu0
  %283 = vdwg.mxu0
  %v284 = vmul.f32 %v258, 0.5
  %v285 = vmul.f32 %v260, 0.5
  %v286 = vmul.f32 %v262, 0.5
  %v287 = vmul.f32 %v264, 0.5
  %v288 = vmul.f32 %v268, 0.5
  %v289 = vmul.f32 %v270, 0.5
  %v290 = vmul.f32 %v272, 0.5
  %v291 = vmul.f32 %v274, 0.5
  %v292 = vmul.f32 %v278, 0.5
  %v293 = vmul.f32 %v280, 0.5
  %v294 = vmul.f32 %v258, %v258
  %v295 = vmul.f32 %v260, %v260
  %v296 = vmul.f32 %v262, %v262
  %v297 = vmul.f32 %v264, %v264
  %v298 = vmul.f32 %v268, %v268
  %v299 = vmul.f32 %v270, %v270
  %v300 = vmul.f32 %v272, %v272
  %v301 = vmul.f32 %v274, %v274
  %v302 = vmul.f32 %v278, %v278
  %v303 = vmul.f32 %v280, %v280
  %v304 = vmul.f32 %v294, %v258
  %v305 = vmul.f32 %v295, %v260
  %v306 = vmul.f32 %v296, %v262
  %v307 = vmul.f32 %v297, %v264
  %v308 = vmul.f32 %v298, %v268
  %v309 = vmul.f32 %v299, %v270
  %v310 = vmul.f32 %v300, %v272
  %v311 = vmul.f32 %v301, %v274
  %v312 = vmul.f32 %v302, %v278
  %v313 = vmul.f32 %v303, %v280
  %v314 = vmul.f32 %v304, 0.044715
  %v315 = vmul.f32 %v305, 0.044715
  %v316 = vmul.f32 %v306, 0.044715
  %v317 = vmul.f32 %v307, 0.044715
  %v318 = vmul.f32 %v308, 0.044715
  %v319 = vmul.f32 %v309, 0.044715
  %v320 = vmul.f32 %v310, 0.044715
  %v321 = vmul.f32 %v311, 0.044715
  %v322 = vmul.f32 %v312, 0.044715
  %v323 = vmul.f32 %v313, 0.044715
  %v324 = vadd.f32 %v258, %v314
  %v325 = vadd.f32 %v260, %v315
  %v326 = vadd.f32 %v262, %v316
  %v327 = vadd.f32 %v264, %v317
  %v328 = vadd.f32 %v268, %v318
  %v329 = vadd.f32 %v270, %v319
  %v330 = vadd.f32 %v272, %v320
  %v331 = vadd.f32 %v274, %v321
  %v332 = vadd.f32 %v278, %v322
  %v333 = vadd.f32 %v280, %v323
  %v334 = vmul.f32 %v324, 0.7978846
  %v335 = vmul.f32 %v325, 0.7978846
  %v336 = vmul.f32 %v326, 0.7978846
  %v337 = vmul.f32 %v327, 0.7978846
  %v338 = vmul.f32 %v328, 0.7978846
  %v339 = vmul.f32 %v329, 0.7978846
  %v340 = vmul.f32 %v330, 0.7978846
  %v341 = vmul.f32 %v331, 0.7978846
  %v342 = vmul.f32 %v332, 0.7978846
  %v343 = vmul.f32 %v333, 0.7978846
  %v344 = vtanh.pop %v334
  %v345 = vtanh.pop %v335
  %v346 = vtanh.pop %v336
  %v347 = vtanh.pop %v337
  %v348 = vtanh.pop %v338
  %v349 = vtanh.pop %v339
  %v350 = vtanh.pop %v340
  %v351 = vtanh.pop %v341
  %v352 = vtanh.pop %v342
  %v353 = vtanh.pop %v343
  %v354 = vadd.f32 %v344, 1.0
  %v355 = vadd.f32 %v345, 1.0
  %v356 = vadd.f32 %v346, 1.0
  %v357 = vadd.f32 %v347, 1.0
  %v358 = vadd.f32 %v348, 1.0
  %v359 = vadd.f32 %v349, 1.0
  %v360 = vadd.f32 %v350, 1.0
  %v361 = vadd.f32 %v351, 1.0
  %v362 = vadd.f32 %v352, 1.0
  %v363 = vadd.f32 %v353, 1.0
  %v364 = vmul.f32 %v284, %v354
  %v365 = vmul.f32 %v285, %v355
  %v366 = vmul.f32 %v286, %v356
  %v367 = vmul.f32 %v287, %v357
  %v368 = vmul.f32 %v288, %v358
  %v369 = vmul.f32 %v289, %v359
  %v370 = vmul.f32 %v290, %v360
  %v371 = vmul.f32 %v291, %v361
  %v372 = vmul.f32 %v292, %v362
  %v373 = vmul.f32 %v293, %v363
  %v374 = vpack.c.bf16 %v366, %v364
  %v375 = vpack.c.bf16 %v367, %v365
  %v376 = vpack.c.bf16 %v370, %v368
  %v377 = vpack.c.bf16 %v371, %v369
  %v378 = vpack.c.bf16 %v372, %v372
  %v379 = vpack.c.bf16 %v373, %v373
  %v380 = vld [vmem:[%s5] sm:$0xf]
  %v381 = vld [vmem:[%s5 + $0x4] sm:$0xf]
  %v382 = vld [vmem:[%s5 + $0x8] sm:$0xf]
  %v383 = vld [vmem:[%s5 + $0xc] sm:$0xf]
  %v384 = vld [vmem:[%s5 + $0x10] sm:$0xf]
  %v385 = vld [vmem:[%s5 + $0x14] sm:$0xf]
  %v386 = vld [vmem:[%s5 + $0x18] sm:$0xf]
  %v387 = vld [vmem:[%s5 + $0x1c] sm:$0xf]
  %v388 = vld [vmem:[%s5 + $0x20] sm:$0xf]
  %v389 = vld [vmem:[%s5 + $0x24] sm:$0xf]
  %v390 = vld [vmem:[%s5 + $0x28] sm:$0xf]
  %v391 = vld [vmem:[%s5 + $0x2c] sm:$0xf]
  %v392 = vld [vmem:[%s5 + $0x30] sm:$0xf]
  %v393 = vld [vmem:[%s5 + $0x34] sm:$0xf]
  %v394 = vld [vmem:[%s5 + $0x38] sm:$0xf]
  %v395 = vld [vmem:[%s5 + $0x3c] sm:$0xf]
  %v396 = vld [vmem:[%s5 + $0x40] sm:$0xf]
  %v397 = vld [vmem:[%s5 + $0x44] sm:$0xf]
  %v398 = vld [vmem:[%s5 + $0x48] sm:$0xf]
  %v399 = vld [vmem:[%s5 + $0x4c] sm:$0xf]
  %v400 = vld [vmem:[%s5 + $0x50] sm:$0xf]
  %v401 = vld [vmem:[%s5 + $0x54] sm:$0xf]
  %v402 = vld [vmem:[%s5 + $0x58] sm:$0xf]
  %v403 = vld [vmem:[%s5 + $0x5c] sm:$0xf]
  %v404 = vld [vmem:[%s5 + $0x60] sm:$0xf]
  %v405 = vld [vmem:[%s5 + $0x64] sm:$0xf]
  %v406 = vld [vmem:[%s5 + $0x68] sm:$0xf]
  %v407 = vld [vmem:[%s5 + $0x6c] sm:$0xf]
  %v408 = vld [vmem:[%s5 + $0x70] sm:$0xf]
  %v409 = vld [vmem:[%s5 + $0x74] sm:$0xf]
  %v410 = vld [vmem:[%s5 + $0x78] sm:$0xf]
  %v411 = vld [vmem:[%s5 + $0x7c] sm:$0xf]
  %v412 = vld [vmem:[%s6] sm:$0x1]
  %v414 = vlaneseq
  %v415 = vshrl.u32 %v414, 7
  %v416 = vsub.s32 0, %v415
  %v417 = vrot.slane %v412, %v416
  %v451 = vunpack.c.l.b16 %v380
  %v452 = vunpack.c.l.b16 %v381
  %v453 = vunpack.c.l.b16 %v382
  %v454 = vunpack.c.l.b16 %v383
  %v455 = vunpack.c.l.b16 %v384
  %v456 = vunpack.c.l.b16 %v385
  %v457 = vunpack.c.l.b16 %v386
  %v458 = vunpack.c.l.b16 %v387
  %v459 = vunpack.c.l.b16 %v388
  %v460 = vunpack.c.l.b16 %v389
  %v461 = vunpack.c.l.b16 %v390
  %v462 = vunpack.c.l.b16 %v391
  %v463 = vunpack.c.l.b16 %v392
  %v464 = vunpack.c.l.b16 %v393
  %v465 = vunpack.c.l.b16 %v394
  %v466 = vunpack.c.l.b16 %v395
  %v467 = vunpack.c.l.b16 %v396
  %v468 = vunpack.c.l.b16 %v397
  %v469 = vunpack.c.l.b16 %v398
  %v470 = vunpack.c.l.b16 %v399
  %v471 = vunpack.c.l.b16 %v400
  %v472 = vunpack.c.l.b16 %v401
  %v473 = vunpack.c.l.b16 %v402
  %v474 = vunpack.c.l.b16 %v403
  %v475 = vunpack.c.l.b16 %v404
  %v476 = vunpack.c.l.b16 %v405
  %v477 = vunpack.c.l.b16 %v406
  %v478 = vunpack.c.l.b16 %v407
  %v479 = vunpack.c.l.b16 %v408
  %v480 = vunpack.c.l.b16 %v409
  %v481 = vunpack.c.l.b16 %v410
  %v482 = vunpack.c.l.b16 %v411
  %v483 = vpack.c.b16 %v452, %v451
  %v484 = vpack.c.b16 %v454, %v453
  %v485 = vpack.c.b16 %v456, %v455
  %v486 = vpack.c.b16 %v458, %v457
  %v487 = vpack.c.b16 %v460, %v459
  %v488 = vpack.c.b16 %v462, %v461
  %v489 = vpack.c.b16 %v464, %v463
  %v490 = vpack.c.b16 %v466, %v465
  %v491 = vpack.c.b16 %v468, %v467
  %v492 = vpack.c.b16 %v470, %v469
  %v493 = vpack.c.b16 %v472, %v471
  %v494 = vpack.c.b16 %v474, %v473
  %v495 = vpack.c.b16 %v476, %v475
  %v496 = vpack.c.b16 %v478, %v477
  %v497 = vpack.c.b16 %v480, %v479
  %v498 = vpack.c.b16 %v482, %v481
  %515 = vmatprep.subr.bf16.mxu0 0
  %516 = vmatpush1.bf16.msra.mxu0 %v490
  %517 = vmatprep.subr.bf16.mxu0 0
  %518 = vmatpush1.bf16.msra.mxu0 %v489
  %519 = vmatprep.subr.bf16.mxu0 0
  %520 = vmatpush1.bf16.msra.mxu0 %v488
  %521 = vmatprep.subr.bf16.mxu0 0
  %522 = vmatpush1.bf16.msra.mxu0 %v487
  %523 = vmatprep.subr.bf16.mxu0 0
  %524 = vmatpush1.bf16.msra.mxu0 %v486
  %525 = vmatprep.subr.bf16.mxu0 0
  %526 = vmatpush1.bf16.msra.mxu0 %v485
  %527 = vmatprep.subr.bf16.mxu0 0
  %528 = vmatpush1.bf16.msra.mxu0 %v484
  %529 = vmatprep.subr.bf16.mxu0 0
  %530 = vmatpush1.bf16.msra.mxu0 %v483
  %531 = vmatprep.subr.bf16.mxu0 0
  %532 = vmatpush2.bf16.msra.mxu0 %v498
  %533 = vmatprep.subr.bf16.mxu0 0
  %534 = vmatpush2.bf16.msra.mxu0 %v497
  %535 = vmatprep.subr.bf16.mxu0 0
  %536 = vmatpush2.bf16.msra.mxu0 %v496
  %537 = vmatprep.subr.bf16.mxu0 0
  %538 = vmatpush2.bf16.msra.mxu0 %v495
  %539 = vmatprep.subr.bf16.mxu0 0
  %540 = vmatpush2.bf16.msra.mxu0 %v494
  %541 = vmatprep.subr.bf16.mxu0 0
  %542 = vmatpush2.bf16.msra.mxu0 %v493
  %543 = vmatprep.subr.bf16.mxu0 0
  %544 = vmatpush2.bf16.msra.mxu0 %v492
  %545 = vmatprep.subr.bf16.mxu0 0
  %546 = vmatpush2.bf16.msra.mxu0 %v491
  %547 = vmatprep.mubr.bf16.mxu0 %v375
  %548 = vmatmul.mubr.bf16.gmra.mxu0 %v374
  %v549 = vpop.f32.mrf.mxu0
  %v550 = vadd.f32 %v417, %v549
  %v551 = vpop.f32.mrf.mxu0
  %v552 = vpop.f32.mrf.mxu0
  %v553 = vadd.f32 %v417, %v552
  %v554 = vpop.f32.mrf.mxu0
  %555 = vmatprep.mubr.bf16.mxu0 %v377
  %556 = vmatmul.mubr.bf16.gmra.mxu0 %v376
  %v557 = vpop.f32.mrf.mxu0
  %v558 = vadd.f32 %v417, %v557
  %v559 = vpop.f32.mrf.mxu0
  %v560 = vpop.f32.mrf.mxu0
  %v561 = vadd.f32 %v417, %v560
  %v562 = vpop.f32.mrf.mxu0
  %563 = vmatprep.mubr.bf16.mxu0 %v379
  %564 = vmatmul.mubr.bf16.gmra.mxu0 %v378
  %v565 = vpop.f32.mrf.mxu0
  %v566 = vadd.f32 %v417, %v565
  %v567 = vpop.f32.mrf.mxu0
  %v568 = vpop.f32.mrf.mxu0
  %v569 = vpop.f32.mrf.mxu0
  %570 = vdwg.mxu0
  %v571 = vadd.f32 %v27, %v550
  %v572 = vadd.f32 %v28, %v553
  %v573 = vadd.f32 %v29, %v558
  %v574 = vadd.f32 %v30, %v561
  %v575 = vadd.f32 %v31, %v566
  %576 = vst [vmem:[%s7] sm:$0xff] %v571
  %577 = vst [vmem:[%s7 + $0x8] sm:$0xff] %v572
  %578 = vst [vmem:[%s7 + $0x10] sm:$0xff] %v573
  %579 = vst [vmem:[%s7 + $0x18] sm:$0xff] %v574
  %580 = vst [vmem:[%s7 + $0x20] sm:$0xff] %v575
  // Predicated region
  $region30: #{transformer_mapper_pallas.7} parent=0 // pred_check
    _
  $region31: #{transformer_mapper_pallas.7} parent=0 // pred_check_branch
    %582 = sbr.rel (0) target = $region33
  $region32: #{transformer_mapper_pallas.7} parent=0 // pred_region
    _
  $region33: #{transformer_mapper_pallas.7} parent=0 // pred_fallthru
    _
  // Predicated region
  $region34: #{transformer_mapper_pallas.7} parent=0 // pred_check
    _
  $region35: #{transformer_mapper_pallas.7} parent=0 // pred_check_branch
    %584 = sbr.rel (0) target = $region37
  $region36: #{transformer_mapper_pallas.7} parent=0 // pred_region
    _
  $region37: #{transformer_mapper_pallas.7} parent=0 // pred_fallthru
    _

// kernel: transformer_mapper_pallas.6
$region0: #{transformer_mapper_pallas.6}
  #allocation0 [shape = 'u32[]', space=smem, size = 0x4, offset = 0x4, fixed_abs, tag = 'smem constant byte address 0x4 - core index']
  #allocation1 [shape = 'u32[144,128]{1,0:T(1,128)}', space=vmem, size = 0x12000, scoped, tag = 'internal scratch']
  #allocation2 [shape = 'f32[20,128]{1,0:T(8,128)}', space=vmem, size = 0x3000, scoped, tag = 'scratch operand']
  %s0 = inlined_call_operand.vmem [shape: f32[2,20,128], index: 0, kind: input, shape index: {}]
  %s1 = inlined_call_operand.vmem [shape: f32[1,128], index: 1, kind: input, shape index: {}]
  %s2 = inlined_call_operand.vmem [shape: f32[1,128], index: 2, kind: input, shape index: {}]
  %s3 = inlined_call_operand.vmem [shape: bf16[128,128], index: 3, kind: input, shape index: {}]
  %s4 = inlined_call_operand.vmem [shape: bf16[128,256], index: 4, kind: input, shape index: {}]
  %s5 = inlined_call_operand.vmem [shape: bf16[128,128], index: 5, kind: input, shape index: {}]
  %s6 = inlined_call_operand.vmem [shape: f32[1,128], index: 6, kind: input, shape index: {}]
  %s7 = inlined_call_operand.vmem [shape: f32[2,20,128], index: 7, kind: output, shape index: {}]
  %s8 = sld [smem:[#allocation0]]
  $region61: #{transformer_mapper_pallas.6} parent=0
    _
  %s10 = ssub.s32 1, %s8
  %s11 = scalar_select 0, %s10, %s8
  loop: start=0, step=1, limit=4
  $region2: #{transformer_mapper_pallas.6} parent=0 // loop_pre_header
    _
  $region3: #{transformer_mapper_pallas.6} parent=0 // loop_header
    %s13 = sphi 0, %s17
    %p14 = scmp.ge.s32.totalorder %s13, 4
    %s23 = sphi 0, %s25
    %s26 = sphi 0, %s23
    %s27 = sphi 0, %s26
    %s43 = sphi 0, %s27
    %s47 = sphi 0, %s47
    %s49 = sphi 0, %s47
    %s50 = sphi 0, %s49
    %s64 = sphi 0, %s50
    %s68 = sphi 0, %s68
    %s70 = sphi 0, %s68
    %s71 = sphi 0, %s70
    %s85 = sphi 0, %s71
    %s89 = sphi 0, %s89
    %s91 = sphi 0, %s89
    %s92 = sphi 0, %s91
    %s106 = sphi 0, %s92
    %s110 = sphi 0, %s110
    %s112 = sphi 0, %s110
    %s113 = sphi 0, %s112
    %s127 = sphi 0, %s113
    %s131 = sphi 0, %s131
    %s133 = sphi 0, %s131
    %s134 = sphi 0, %s133
    %s148 = sphi 0, %s134
    %s152 = sphi 0, %s152
    %s154 = sphi 0, %s152
    %s155 = sphi 0, %s154
    %s169 = sphi 0, %s155
    %s175 = sphi 0, %s177
    %s178 = sphi 0, %s175
    %s179 = sphi 0, %s178
    %s195 = sphi 0, %s179
  $region4: #{transformer_mapper_pallas.6} parent=0 // loop_header_branch
    %16 = sbr.rel (%p14) target = $region8
  $region5: #{transformer_mapper_pallas.6} parent=0 // loop_body
    %s18 = ssub.s32 %s13, 1
    %s19 = ssub.s32 %s13, 2
    %s20 = sadd.s32 %s13, 1
    %s21 = ssub.s32 %s13, %s20
    %p22 = scmp.eq.s32.totalorder %s21, 0
    %s24 = sadd.s32 %s23, 1
    %s25 = scalar_select %p22, %s23, %s24
    %p28 = pneg %p22
    %p29 = scmp.eq.s32.totalorder %s13, 1
    %p30 = por %p28, %p29
    %p31 = scmp.ne.s32.totalorder %s23, %s26
    %p32 = scmp.eq.s32.totalorder %s13, 0
    %p33 = por %p31, %p32
    %p34 = scmp.ne.s32.totalorder %s23, %s26
    %p35 = scmp.eq.s32.totalorder %s18, 1
    %p36 = por %p34, %p35
    %p37 = scmp.ne.s32.totalorder %s26, %s27
    %p38 = scmp.eq.s32.totalorder %s18, 0
    %p39 = por %p37, %p38
    %p40 = scmp.ne.s32.totalorder %s26, %s27
    %p41 = scmp.eq.s32.totalorder %s19, 1
    %p42 = por %p40, %p41
    %p44 = scmp.ne.s32.totalorder %s27, %s43
    %p45 = scmp.eq.s32.totalorder %s19, 0
    %p46 = por %p44, %p45
    %s48 = sadd.s32 %s47, 1
    %p51 = scmp.eq.s32.totalorder %s13, 1
    %p52 = scmp.ne.s32.totalorder %s47, %s49
    %p53 = scmp.eq.s32.totalorder %s13, 0
    %p54 = por %p52, %p53
    %p55 = scmp.ne.s32.totalorder %s47, %s49
    %p56 = scmp.eq.s32.totalorder %s18, 1
    %p57 = por %p55, %p56
    %p58 = scmp.ne.s32.totalorder %s49, %s50
    %p59 = scmp.eq.s32.totalorder %s18, 0
    %p60 = por %p58, %p59
    %p61 = scmp.ne.s32.totalorder %s49, %s50
    %p62 = scmp.eq.s32.totalorder %s19, 1
    %p63 = por %p61, %p62
    %p65 = scmp.ne.s32.totalorder %s50, %s64
    %p66 = scmp.eq.s32.totalorder %s19, 0
    %p67 = por %p65, %p66
    %s69 = sadd.s32 %s68, 1
    %p72 = scmp.eq.s32.totalorder %s13, 1
    %p73 = scmp.ne.s32.totalorder %s68, %s70
    %p74 = scmp.eq.s32.totalorder %s13, 0
    %p75 = por %p73, %p74
    %p76 = scmp.ne.s32.totalorder %s68, %s70
    %p77 = scmp.eq.s32.totalorder %s18, 1
    %p78 = por %p76, %p77
    %p79 = scmp.ne.s32.totalorder %s70, %s71
    %p80 = scmp.eq.s32.totalorder %s18, 0
    %p81 = por %p79, %p80
    %p82 = scmp.ne.s32.totalorder %s70, %s71
    %p83 = scmp.eq.s32.totalorder %s19, 1
    %p84 = por %p82, %p83
    %p86 = scmp.ne.s32.totalorder %s71, %s85
    %p87 = scmp.eq.s32.totalorder %s19, 0
    %p88 = por %p86, %p87
    %s90 = sadd.s32 %s89, 1
    %p93 = scmp.eq.s32.totalorder %s13, 1
    %p94 = scmp.ne.s32.totalorder %s89, %s91
    %p95 = scmp.eq.s32.totalorder %s13, 0
    %p96 = por %p94, %p95
    %p97 = scmp.ne.s32.totalorder %s89, %s91
    %p98 = scmp.eq.s32.totalorder %s18, 1
    %p99 = por %p97, %p98
    %p100 = scmp.ne.s32.totalorder %s91, %s92
    %p101 = scmp.eq.s32.totalorder %s18, 0
    %p102 = por %p100, %p101
    %p103 = scmp.ne.s32.totalorder %s91, %s92
    %p104 = scmp.eq.s32.totalorder %s19, 1
    %p105 = por %p103, %p104
    %p107 = scmp.ne.s32.totalorder %s92, %s106
    %p108 = scmp.eq.s32.totalorder %s19, 0
    %p109 = por %p107, %p108
    %s111 = sadd.s32 %s110, 1
    %p114 = scmp.eq.s32.totalorder %s13, 1
    %p115 = scmp.ne.s32.totalorder %s110, %s112
    %p116 = scmp.eq.s32.totalorder %s13, 0
    %p117 = por %p115, %p116
    %p118 = scmp.ne.s32.totalorder %s110, %s112
    %p119 = scmp.eq.s32.totalorder %s18, 1
    %p120 = por %p118, %p119
    %p121 = scmp.ne.s32.totalorder %s112, %s113
    %p122 = scmp.eq.s32.totalorder %s18, 0
    %p123 = por %p121, %p122
    %p124 = scmp.ne.s32.totalorder %s112, %s113
    %p125 = scmp.eq.s32.totalorder %s19, 1
    %p126 = por %p124, %p125
    %p128 = scmp.ne.s32.totalorder %s113, %s127
    %p129 = scmp.eq.s32.totalorder %s19, 0
    %p130 = por %p128, %p129
    %s132 = sadd.s32 %s131, 1
    %p135 = scmp.eq.s32.totalorder %s13, 1
    %p136 = scmp.ne.s32.totalorder %s131, %s133
    %p137 = scmp.eq.s32.totalorder %s13, 0
    %p138 = por %p136, %p137
    %p139 = scmp.ne.s32.totalorder %s131, %s133
    %p140 = scmp.eq.s32.totalorder %s18, 1
    %p141 = por %p139, %p140
    %p142 = scmp.ne.s32.totalorder %s133, %s134
    %p143 = scmp.eq.s32.totalorder %s18, 0
    %p144 = por %p142, %p143
    %p145 = scmp.ne.s32.totalorder %s133, %s134
    %p146 = scmp.eq.s32.totalorder %s19, 1
    %p147 = por %p145, %p146
    %p149 = scmp.ne.s32.totalorder %s134, %s148
    %p150 = scmp.eq.s32.totalorder %s19, 0
    %p151 = por %p149, %p150
    %s153 = sadd.s32 %s152, 1
    %p156 = scmp.eq.s32.totalorder %s13, 1
    %p157 = scmp.ne.s32.totalorder %s152, %s154
    %p158 = scmp.eq.s32.totalorder %s13, 0
    %p159 = por %p157, %p158
    %p160 = scmp.ne.s32.totalorder %s152, %s154
    %p161 = scmp.eq.s32.totalorder %s18, 1
    %p162 = por %p160, %p161
    %p163 = scmp.ne.s32.totalorder %s154, %s155
    %p164 = scmp.eq.s32.totalorder %s18, 0
    %p165 = por %p163, %p164
    %p166 = scmp.ne.s32.totalorder %s154, %s155
    %p167 = scmp.eq.s32.totalorder %s19, 1
    %p168 = por %p166, %p167
    %p170 = scmp.ne.s32.totalorder %s155, %s169
    %p171 = scmp.eq.s32.totalorder %s19, 0
    %p172 = por %p170, %p171
    %s173 = ssub.s32 %s13, %s20
    %p174 = scmp.eq.s32.totalorder %s173, 0
    %s176 = sadd.s32 %s175, 1
    %s177 = scalar_select %p174, %s175, %s176
    %p180 = pneg %p174
    %p181 = scmp.eq.s32.totalorder %s13, 1
    %p182 = por %p180, %p181
    %p183 = scmp.ne.s32.totalorder %s175, %s178
    %p184 = scmp.eq.s32.totalorder %s13, 0
    %p185 = por %p183, %p184
    %p186 = scmp.ne.s32.totalorder %s175, %s178
    %p187 = scmp.eq.s32.totalorder %s18, 1
    %p188 = por %p186, %p187
    %p189 = scmp.ne.s32.totalorder %s178, %s179
    %p190 = scmp.eq.s32.totalorder %s18, 0
    %p191 = por %p189, %p190
    %p192 = scmp.ne.s32.totalorder %s178, %s179
    %p193 = scmp.eq.s32.totalorder %s19, 1
    %p194 = por %p192, %p193
    %p196 = scmp.ne.s32.totalorder %s179, %s195
    %p197 = scmp.eq.s32.totalorder %s19, 0
    %p198 = por %p196, %p197
    %p199 = scmp.le.s32.totalorder 1, %s13
    %p200 = scmp.lt.s32.totalorder %s13, 3
    %p201 = pnand %p199, %p200
    %p202 = pneg %p201
    // Predicated region
    $region9: #{transformer_mapper_pallas.6} parent=5 // pred_check
      _
    $region10: #{transformer_mapper_pallas.6} parent=5 // pred_check_branch
      %204 = sbr.rel (%p201) target = $region12
    $region11: #{transformer_mapper_pallas.6} parent=5 // pred_region
      %s205 = ssub.s32 %s13, 1
      // Predicated region
      $region13: #{transformer_mapper_pallas.6} parent=11 // pred_check
        %p206 = pneg %p60
      $region14: #{transformer_mapper_pallas.6} parent=11 // pred_check_branch
        %208 = sbr.rel (%p206) target = $region16
      $region15: #{transformer_mapper_pallas.6} parent=11 // pred_region
        _
      $region16: #{transformer_mapper_pallas.6} parent=11 // pred_fallthru
        _
      // Predicated region
      $region17: #{transformer_mapper_pallas.6} parent=11 // pred_check
        %p209 = pneg %p81
      $region18: #{transformer_mapper_pallas.6} parent=11 // pred_check_branch
        %211 = sbr.rel (%p209) target = $region20
      $region19: #{transformer_mapper_pallas.6} parent=11 // pred_region
        _
      $region20: #{transformer_mapper_pallas.6} parent=11 // pred_fallthru
        _
      // Predicated region
      $region21: #{transformer_mapper_pallas.6} parent=11 // pred_check
        %p212 = pneg %p102
      $region22: #{transformer_mapper_pallas.6} parent=11 // pred_check_branch
        %214 = sbr.rel (%p212) target = $region24
      $region23: #{transformer_mapper_pallas.6} parent=11 // pred_region
        _
      $region24: #{transformer_mapper_pallas.6} parent=11 // pred_fallthru
        _
      // Predicated region
      $region25: #{transformer_mapper_pallas.6} parent=11 // pred_check
        %p215 = pneg %p123
      $region26: #{transformer_mapper_pallas.6} parent=11 // pred_check_branch
        %217 = sbr.rel (%p215) target = $region28
      $region27: #{transformer_mapper_pallas.6} parent=11 // pred_region
        _
      $region28: #{transformer_mapper_pallas.6} parent=11 // pred_fallthru
        _
      // Predicated region
      $region29: #{transformer_mapper_pallas.6} parent=11 // pred_check
        %p218 = pneg %p144
      $region30: #{transformer_mapper_pallas.6} parent=11 // pred_check_branch
        %220 = sbr.rel (%p218) target = $region32
      $region31: #{transformer_mapper_pallas.6} parent=11 // pred_region
        _
      $region32: #{transformer_mapper_pallas.6} parent=11 // pred_fallthru
        _
      // Predicated region
      $region33: #{transformer_mapper_pallas.6} parent=11 // pred_check
        %p221 = pneg %p165
      $region34: #{transformer_mapper_pallas.6} parent=11 // pred_check_branch
        %223 = sbr.rel (%p221) target = $region36
      $region35: #{transformer_mapper_pallas.6} parent=11 // pred_region
        _
      $region36: #{transformer_mapper_pallas.6} parent=11 // pred_fallthru
        _
    $region12: #{transformer_mapper_pallas.6} parent=5 // pred_fallthru
      _
    %p224 = scmp.lt.s32.totalorder %s13, 2
    // Predicated region
    $region37: #{transformer_mapper_pallas.6} parent=5 // pred_check
      %p225 = pneg %p224
    $region38: #{transformer_mapper_pallas.6} parent=5 // pred_check_branch
      %227 = sbr.rel (%p225) target = $region40
    $region39: #{transformer_mapper_pallas.6} parent=5 // pred_region
      // Predicated region
      $region41: #{transformer_mapper_pallas.6} parent=39 // pred_check
        %p228 = pneg %p33
      $region42: #{transformer_mapper_pallas.6} parent=39 // pred_check_branch
        %230 = sbr.rel (%p228) target = $region44
      $region43: #{transformer_mapper_pallas.6} parent=39 // pred_region
        %p231 = scmp.lt.s32.totalorder %s13, 1
        %s232 = scalar_select %p231, %s13, 1
        %s233 = smul.addr %s232, 3
        %s234 = smul.addr %s233, 8
        %s235 = scalar_lea.vmem %s0, %s234
      $region44: #{transformer_mapper_pallas.6} parent=39 // pred_fallthru
        _
    $region40: #{transformer_mapper_pallas.6} parent=5 // pred_fallthru
      _
    %p236 = scmp.le.s32.totalorder 1, %s13
    %p237 = scmp.lt.s32.totalorder %s13, 3
    %p238 = pnand %p236, %p237
    %p239 = pneg %p238
    // Predicated region
    $region45: #{transformer_mapper_pallas.6} parent=5 // pred_check
      _
    $region46: #{transformer_mapper_pallas.6} parent=5 // pred_check_branch
      %241 = sbr.rel (%p238) target = $region48
    $region47: #{transformer_mapper_pallas.6} parent=5 // pred_region
      %s242 = ssub.s32 %s13, 1
      %p243 = scmp.lt.s32.totalorder %s18, 1
      %s244 = scalar_select %p243, %s18, 1
      %s245 = smul.addr %s244, 3
      %s246 = smul.addr %s245, 8
      %s247 = scalar_lea.vmem %s0, %s246
      %p248 = pneg %p39
      %p249 = pneg %p36
      %p250 = pneg %p60
      %p251 = pneg %p57
      %p252 = pneg %p81
      %p253 = pneg %p78
      %p254 = pneg %p102
      %p255 = pneg %p99
      %p256 = pneg %p123
      %p257 = pneg %p120
      %p258 = pneg %p144
      %p259 = pneg %p141
      %p260 = pneg %p165
      %p261 = pneg %p162
      %p262 = pneg %p191
      %p263 = pneg %p188
      %p264 = scmp.lt.s32.totalorder %s18, 1
      %s265 = scalar_select %p264, %s18, 1
      %s266 = smul.addr %s265, 3
      %s267 = smul.addr %s266, 8
      %s268 = scalar_lea.vmem %s7, %s267
      %p269 = scmp.lt.s32.totalorder %s18, 1
      %s270 = scalar_select %p269, %s18, 1
      %s271 = smul.addr %s270, 3
      %s272 = smul.addr %s271, 8
      %s273 = scalar_lea.vmem %s0, %s272
      %p274 = scmp.lt.s32.totalorder %s18, 1
      %s275 = scalar_select %p274, %s18, 1
      %s276 = smul.addr %s275, 3
      %s277 = smul.addr %s276, 8
      %s278 = scalar_lea.vmem %s7, %s277
      %v280 = vld [vmem:[%s273] sm:$0xff]
      %v281 = vld [vmem:[%s273 + $0x8] sm:$0xff]
      %v282 = vld [vmem:[%s273 + $0x10] sm:$0xf]
      %283 = vadd.xlane.f32.xlu0 %v280
      %v284 = vpop.xlane.xlu0 %283
      %285 = vadd.xlane.f32.xlu0 %v281
      %v286 = vpop.xlane.xlu0 %285
      %vm287 = vcmask 1043456
      %v288 = vsel %vm287, %v282, 0.0
      %289 = vadd.xlane.f32.xlu0 %v288
      %v290 = vpop.xlane.xlu0 %289
      %v291 = vrcp.pop 128.0
      %v292 = vmul.f32 %v284, %v291
      %v293 = vmul.f32 %v286, %v291
      %v294 = vmul.f32 %v290, %v291
      %v295 = vsub.f32 %v280, %v292
      %v296 = vsub.f32 %v281, %v293
      %v297 = vsub.f32 %v282, %v294
      %v298 = vmul.f32 %v295, %v295
      %v299 = vmul.f32 %v296, %v296
      %v300 = vmul.f32 %v297, %v297
      %301 = vadd.xlane.f32.xlu0 %v298
      %v302 = vpop.xlane.xlu0 %301
      %303 = vadd.xlane.f32.xlu0 %v299
      %v304 = vpop.xlane.xlu0 %303
      %v305 = vsel %vm287, %v300, 0.0
      %306 = vadd.xlane.f32.xlu0 %v305
      %v307 = vpop.xlane.xlu0 %306
      %v308 = vmul.f32 %v302, %v291
      %v309 = vmul.f32 %v304, %v291
      %v310 = vmul.f32 %v307, %v291
      %v311 = vadd.f32 %v308, 1e-05
      %v312 = vadd.f32 %v309, 1e-05
      %v313 = vadd.f32 %v310, 1e-05
      %v314 = vrsqrt.pop %v311
      %v315 = vrsqrt.pop %v312
      %v316 = vrsqrt.pop %v313
      %v317 = vmul.f32 %v295, %v314
      %v318 = vmul.f32 %v296, %v315
      %v319 = vmul.f32 %v297, %v316
      %v320 = vld [vmem:[%s1] sm:$0x1]
      %v322 = vlaneseq
      %v323 = vshrl.u32 %v322, 7
      %v324 = vsub.s32 0, %v323
      %v325 = vrot.slane %v320, %v324
      %v327 = vmul.f32 %v317, %v325
      %v328 = vmul.f32 %v318, %v325
      %v329 = vmul.f32 %v319, %v325
      %v330 = vld [vmem:[%s2] sm:$0x1]
      %v332 = vlaneseq
      %v333 = vshrl.u32 %v332, 7
      %v334 = vsub.s32 0, %v333
      %v335 = vrot.slane %v330, %v334
      %v337 = vadd.f32 %v327, %v335
      %v338 = vadd.f32 %v328, %v335
      %v339 = vadd.f32 %v329, %v335
      %v340 = vpack.c.bf16 %v338, %v337
      %v341 = vpack.c.bf16 %v339, %v339
      %v342 = vld [vmem:[%s3] sm:$0xf]
      %v343 = vld [vmem:[%s3 + $0x4] sm:$0xf]
      %v344 = vld [vmem:[%s3 + $0x8] sm:$0xf]
      %v345 = vld [vmem:[%s3 + $0xc] sm:$0xf]
      %v346 = vld [vmem:[%s3 + $0x10] sm:$0xf]
      %v347 = vld [vmem:[%s3 + $0x14] sm:$0xf]
      %v348 = vld [vmem:[%s3 + $0x18] sm:$0xf]
      %v349 = vld [vmem:[%s3 + $0x1c] sm:$0xf]
      %v350 = vld [vmem:[%s3 + $0x20] sm:$0xf]
      %v351 = vld [vmem:[%s3 + $0x24] sm:$0xf]
      %v352 = vld [vmem:[%s3 + $0x28] sm:$0xf]
      %v353 = vld [vmem:[%s3 + $0x2c] sm:$0xf]
      %v354 = vld [vmem:[%s3 + $0x30] sm:$0xf]
      %v355 = vld [vmem:[%s3 + $0x34] sm:$0xf]
      %v356 = vld [vmem:[%s3 + $0x38] sm:$0xf]
      %v357 = vld [vmem:[%s3 + $0x3c] sm:$0xf]
      %v374 = vunpack.c.l.b16 %v342
      %v375 = vunpack.c.l.b16 %v343
      %v376 = vunpack.c.l.b16 %v344
      %v377 = vunpack.c.l.b16 %v345
      %v378 = vunpack.c.l.b16 %v346
      %v379 = vunpack.c.l.b16 %v347
      %v380 = vunpack.c.l.b16 %v348
      %v381 = vunpack.c.l.b16 %v349
      %v382 = vunpack.c.l.b16 %v350
      %v383 = vunpack.c.l.b16 %v351
      %v384 = vunpack.c.l.b16 %v352
      %v385 = vunpack.c.l.b16 %v353
      %v386 = vunpack.c.l.b16 %v354
      %v387 = vunpack.c.l.b16 %v355
      %v388 = vunpack.c.l.b16 %v356
      %v389 = vunpack.c.l.b16 %v357
      %v390 = vpack.c.b16 %v375, %v374
      %v391 = vpack.c.b16 %v377, %v376
      %v392 = vpack.c.b16 %v379, %v378
      %v393 = vpack.c.b16 %v381, %v380
      %v394 = vpack.c.b16 %v383, %v382
      %v395 = vpack.c.b16 %v385, %v384
      %v396 = vpack.c.b16 %v387, %v386
      %v397 = vpack.c.b16 %v389, %v388
      %406 = vmatprep.subr.bf16.mxu0 0
      %407 = vmatpush1.bf16.msra.mxu0 %v397
      %408 = vmatprep.subr.bf16.mxu0 0
      %409 = vmatpush1.bf16.msra.mxu0 %v396
      %410 = vmatprep.subr.bf16.mxu0 0
      %411 = vmatpush1.bf16.msra.mxu0 %v395
      %412 = vmatprep.subr.bf16.mxu0 0
      %413 = vmatpush1.bf16.msra.mxu0 %v394
      %414 = vmatprep.subr.bf16.mxu0 0
      %415 = vmatpush1.bf16.msra.mxu0 %v393
      %416 = vmatprep.subr.bf16.mxu0 0
      %417 = vmatpush1.bf16.msra.mxu0 %v392
      %418 = vmatprep.subr.bf16.mxu0 0
      %419 = vmatpush1.bf16.msra.mxu0 %v391
      %420 = vmatprep.subr.bf16.mxu0 0
      %421 = vmatpush1.bf16.msra.mxu0 %v390
      %422 = vmatprep.subr.bf16.mxu0 0
      %423 = vmatpush2.bf16.msra.mxu0 0
      %424 = vmatprep.subr.bf16.mxu0 0
      %425 = vmatpush2.bf16.msra.mxu0 0
      %426 = vmatprep.subr.bf16.mxu0 0
      %427 = vmatpush2.bf16.msra.mxu0 0
      %428 = vmatprep.subr.bf16.mxu0 0
      %429 = vmatpush2.bf16.msra.mxu0 0
      %430 = vmatprep.subr.bf16.mxu0 0
      %431 = vmatpush2.bf16.msra.mxu0 0
      %432 = vmatprep.subr.bf16.mxu0 0
      %433 = vmatpush2.bf16.msra.mxu0 0
      %434 = vmatprep.subr.bf16.mxu0 0
      %435 = vmatpush2.bf16.msra.mxu0 0
      %436 = vmatprep.subr.bf16.mxu0 0
      %437 = vmatpush2.bf16.msra.mxu0 0
      %438 = vmatprep.mubr.bf16.mxu0 0
      %439 = vmatmul.mubr.bf16.gmra.mxu0 %v340
      %v440 = vpop.f32.mrf.mxu0
      %v441 = vadd.f32 0.0, %v440
      %v442 = vpop.f32.mrf.mxu0
      %v443 = vpop.f32.mrf.mxu0
      %v444 = vadd.f32 0.0, %v443
      %v445 = vpop.f32.mrf.mxu0
      %446 = vmatprep.mubr.bf16.mxu0 0
      %447 = vmatmul.mubr.bf16.gmra.mxu0 %v341
      %v448 = vpop.f32.mrf.mxu0
      %v449 = vadd.f32 0.0, %v448
      %v450 = vpop.f32.mrf.mxu0
      %v451 = vpop.f32.mrf.mxu0
      %v452 = vpop.f32.mrf.mxu0
      %453 = vdwg.mxu0
      %v454 = vld [vmem:[%s4] sm:$0xff]
      %v455 = vld [vmem:[%s4 + $0x8] sm:$0xff]
      %v456 = vld [vmem:[%s4 + $0x10] sm:$0xff]
      %v457 = vld [vmem:[%s4 + $0x18] sm:$0xff]
      %v458 = vld [vmem:[%s4 + $0x20] sm:$0xff]
      %v459 = vld [vmem:[%s4 + $0x28] sm:$0xff]
      %v460 = vld [vmem:[%s4 + $0x30] sm:$0xff]
      %v461 = vld [vmem:[%s4 + $0x38] sm:$0xff]
      %v462 = vld [vmem:[%s4 + $0x40] sm:$0xff]
      %v463 = vld [vmem:[%s4 + $0x48] sm:$0xff]
      %v464 = vld [vmem:[%s4 + $0x50] sm:$0xff]
      %v465 = vld [vmem:[%s4 + $0x58] sm:$0xff]
      %v466 = vld [vmem:[%s4 + $0x60] sm:$0xff]
      %v467 = vld [vmem:[%s4 + $0x68] sm:$0xff]
      %v468 = vld [vmem:[%s4 + $0x70] sm:$0xff]
      %v469 = vld [vmem:[%s4 + $0x78] sm:$0xff]
      %v486 = vunpack.c.l.b16 %v454
      %v487 = vunpack.c.h.b16 %v454
      %v488 = vunpack.c.l.b16 %v455
      %v489 = vunpack.c.h.b16 %v455
      %v490 = vunpack.c.l.b16 %v456
      %v491 = vunpack.c.h.b16 %v456
      %v492 = vunpack.c.l.b16 %v457
      %v493 = vunpack.c.h.b16 %v457
      %v494 = vunpack.c.l.b16 %v458
      %v495 = vunpack.c.h.b16 %v458
      %v496 = vunpack.c.l.b16 %v459
      %v497 = vunpack.c.h.b16 %v459
      %v498 = vunpack.c.l.b16 %v460
      %v499 = vunpack.c.h.b16 %v460
      %v500 = vunpack.c.l.b16 %v461
      %v501 = vunpack.c.h.b16 %v461
      %v502 = vunpack.c.l.b16 %v462
      %v503 = vunpack.c.h.b16 %v462
      %v504 = vunpack.c.l.b16 %v463
      %v505 = vunpack.c.h.b16 %v463
      %v506 = vunpack.c.l.b16 %v464
      %v507 = vunpack.c.h.b16 %v464
      %v508 = vunpack.c.l.b16 %v465
      %v509 = vunpack.c.h.b16 %v465
      %v510 = vunpack.c.l.b16 %v466
      %v511 = vunpack.c.h.b16 %v466
      %v512 = vunpack.c.l.b16 %v467
      %v513 = vunpack.c.h.b16 %v467
      %v514 = vunpack.c.l.b16 %v468
      %v515 = vunpack.c.h.b16 %v468
      %v516 = vunpack.c.l.b16 %v469
      %v517 = vunpack.c.h.b16 %v469
      %v518 = vpack.c.b16 %v488, %v486
      %v519 = vpack.c.b16 %v489, %v487
      %v520 = vpack.c.b16 %v492, %v490
      %v521 = vpack.c.b16 %v493, %v491
      %v522 = vpack.c.b16 %v496, %v494
      %v523 = vpack.c.b16 %v497, %v495
      %v524 = vpack.c.b16 %v500, %v498
      %v525 = vpack.c.b16 %v501, %v499
      %v526 = vpack.c.b16 %v504, %v502
      %v527 = vpack.c.b16 %v505, %v503
      %v528 = vpack.c.b16 %v508, %v506
      %v529 = vpack.c.b16 %v509, %v507
      %v530 = vpack.c.b16 %v512, %v510
      %v531 = vpack.c.b16 %v513, %v511
      %v532 = vpack.c.b16 %v516, %v514
      %v533 = vpack.c.b16 %v517, %v515
      %550 = vmatprep.subr.bf16.mxu0 %v533
      %551 = vmatpush1.bf16.msra.mxu0 %v532
      %552 = vmatprep.subr.bf16.mxu0 %v531
      %553 = vmatpush1.bf16.msra.mxu0 %v530
      %554 = vmatprep.subr.bf16.mxu0 %v529
      %555 = vmatpush1.bf16.msra.mxu0 %v528
      %556 = vmatprep.subr.bf16.mxu0 %v527
      %557 = vmatpush1.bf16.msra.mxu0 %v526
      %558 = vmatprep.subr.bf16.mxu0 %v525
      %559 = vmatpush1.bf16.msra.mxu0 %v524
      %560 = vmatprep.subr.bf16.mxu0 %v523
      %561 = vmatpush1.bf16.msra.mxu0 %v522
      %562 = vmatprep.subr.bf16.mxu0 %v521
      %563 = vmatpush1.bf16.msra.mxu0 %v520
      %564 = vmatprep.subr.bf16.mxu0 %v519
      %565 = vmatpush1.bf16.msra.mxu0 %v518
      %566 = vmatprep.subr.bf16.mxu0 0
      %567 = vmatpush2.bf16.msra.mxu0 0
      %568 = vmatprep.subr.bf16.mxu0 0
      %569 = vmatpush2.bf16.msra.mxu0 0
      %570 = vmatprep.subr.bf16.mxu0 0
      %571 = vmatpush2.bf16.msra.mxu0 0
      %572 = vmatprep.subr.bf16.mxu0 0
      %573 = vmatpush2.bf16.msra.mxu0 0
      %574 = vmatprep.subr.bf16.mxu0 0
      %575 = vmatpush2.bf16.msra.mxu0 0
      %576 = vmatprep.subr.bf16.mxu0 0
      %577 = vmatpush2.bf16.msra.mxu0 0
      %578 = vmatprep.subr.bf16.mxu0 0
      %579 = vmatpush2.bf16.msra.mxu0 0
      %580 = vmatprep.subr.bf16.mxu0 0
      %581 = vmatpush2.bf16.msra.mxu0 0
      %582 = vmatprep.mubr.bf16.mxu0 0
      %583 = vmatmul.mubr.bf16.gmra.mxu0 %v340
      %v584 = vpop.f32.mrf.mxu0
      %v585 = vadd.f32 0.0, %v584
      %v586 = vpop.f32.mrf.mxu0
      %v587 = vadd.f32 0.0, %v586
      %v588 = vpop.f32.mrf.mxu0
      %v589 = vadd.f32 0.0, %v588
      %v590 = vpop.f32.mrf.mxu0
      %v591 = vadd.f32 0.0, %v590
      %592 = vmatprep.mubr.bf16.mxu0 0
      %593 = vmatmul.mubr.bf16.gmra.mxu0 %v341
      %v594 = vpop.f32.mrf.mxu0
      %v595 = vadd.f32 0.0, %v594
      %v596 = vpop.f32.mrf.mxu0
      %v597 = vadd.f32 0.0, %v596
      %v598 = vpop.f32.mrf.mxu0
      %v599 = vpop.f32.mrf.mxu0
      %600 = vdwg.mxu0
      %vm601 = vcmask 130048
      %v603 = vsel %vm601, %v441, 0
      %v606 = vsel %vm601, %v444, 0
      %v609 = vsel %vm601, %v449, 0
      %v612 = vsel %vm601, %v585, 0
      %v615 = vsel %vm601, %v589, 0
      %v618 = vsel %vm601, %v595, 0
      %620 = vmatprep.subr.mxu0 0.0
      %621 = vmatpush1.xpose.msra.mxu0 0.0
      %622 = vmatprep.subr.mxu0 0.0
      %623 = vmatpush1.xpose.msra.mxu0 0.0
      %624 = vmatprep.subr.mxu0 0.0
      %625 = vmatpush1.xpose.msra.mxu0 0.0
      %626 = vmatprep.subr.mxu0 0.0
      %627 = vmatpush1.xpose.msra.mxu0 0.0
      %628 = vmatprep.subr.mxu0 0.0
      %629 = vmatpush1.xpose.msra.mxu0 0.0
      %630 = vmatprep.subr.mxu0 0.0
      %631 = vmatpush1.xpose.msra.mxu0 0.0
      %632 = vmatprep.subr.mxu0 0.0
      %633 = vmatpush1.xpose.msra.mxu0 0.0
      %634 = vmatprep.subr.mxu0 0.0
      %635 = vmatpush1.xpose.msra.mxu0 0.0
      %636 = vmatprep.subr.mxu0 0.0
      %637 = vmatpush1.xpose.msra.mxu0 0.0
      %638 = vmatprep.subr.mxu0 0.0
      %639 = vmatpush1.xpose.msra.mxu0 0.0
      %640 = vmatprep.subr.mxu0 0.0
      %641 = vmatpush1.xpose.msra.mxu0 0.0
      %642 = vmatprep.subr.mxu0 0.0
      %643 = vmatpush1.xpose.msra.mxu0 0.0
      %644 = vmatprep.subr.mxu0 0.0
      %645 = vmatpush1.xpose.msra.mxu0 0.0
      %646 = vmatprep.subr.mxu0 0.0
      %647 = vmatpush1.xpose.msra.mxu0 %v618
      %648 = vmatprep.subr.mxu0 0.0
      %649 = vmatpush1.xpose.msra.mxu0 %v615
      %650 = vmatprep.subr.mxu0 0.0
      %651 = vmatpush1.xpose.msra.mxu0 %v612
      %652 = vmatprep.subr.mxu0 0.0
      %653 = vmatpush2.xpose.msra.mxu0 0.0
      %654 = vmatprep.subr.mxu0 0.0
      %655 = vmatpush2.xpose.msra.mxu0 0.0
      %656 = vmatprep.subr.mxu0 0.0
      %657 = vmatpush2.xpose.msra.mxu0 0.0
      %658 = vmatprep.subr.mxu0 0.0
      %659 = vmatpush2.xpose.msra.mxu0 0.0
      %660 = vmatprep.subr.mxu0 0.0
      %661 = vmatpush2.xpose.msra.mxu0 0.0
      %662 = vmatprep.subr.mxu0 0.0
      %663 = vmatpush2.xpose.msra.mxu0 0.0
      %664 = vmatprep.subr.mxu0 0.0
      %665 = vmatpush2.xpose.msra.mxu0 0.0
      %666 = vmatprep.subr.mxu0 0.0
      %667 = vmatpush2.xpose.msra.mxu0 0.0
      %668 = vmatprep.subr.mxu0 0.0
      %669 = vmatpush2.xpose.msra.mxu0 0.0
      %670 = vmatprep.subr.mxu0 0.0
      %671 = vmatpush2.xpose.msra.mxu0 0.0
      %672 = vmatprep.subr.mxu0 0.0
      %673 = vmatpush2.xpose.msra.mxu0 0.0
      %674 = vmatprep.subr.mxu0 0.0
      %675 = vmatpush2.xpose.msra.mxu0 0.0
      %676 = vmatprep.subr.mxu0 0.0
      %677 = vmatpush2.xpose.msra.mxu0 0.0
      %678 = vmatprep.subr.mxu0 0.0
      %679 = vmatpush2.xpose.msra.mxu0 0.0
      %680 = vmatprep.subr.mxu0 0.0
      %681 = vmatpush2.xpose.msra.mxu0 0.0
      %682 = vmatprep.subr.mxu0 0.0
      %683 = vmatpush2.xpose.msra.mxu0 0.0
      %684 = vmatprep.mubr.f32.mxu0 0.0
      %685 = vmatmul.mubr.f32.gmra.mxu0 %v603
      %v686 = vpop.f32.mrf.mxu0
      %v687 = vadd.f32 0.0, %v686
      %v688 = vpop.f32.mrf.mxu0
      %689 = vmatprep.mubr.f32.mxu0 0.0
      %690 = vmatmul.mubr.f32.gmra.mxu0 %v606
      %v691 = vpop.f32.mrf.mxu0
      %v692 = vadd.f32 0.0, %v691
      %v693 = vpop.f32.mrf.mxu0
      %694 = vmatprep.mubr.f32.mxu0 0.0
      %695 = vmatmul.mubr.f32.gmra.mxu0 %v609
      %v696 = vpop.f32.mrf.mxu0
      %v697 = vadd.f32 0.0, %v696
      %v698 = vpop.f32.mrf.mxu0
      %699 = vdwg.mxu0
      %v700 = vmul.f32 %v687, 0.25
      %v701 = vmul.f32 %v692, 0.25
      %v702 = vmul.f32 %v697, 0.25
      %vm703 = vcmask 162816
      %v704 = vsel %vm703, %v700, -inf
      %705 = vmax.xlane.f32.xlu0 %v704
      %v706 = vpop.xlane.xlu0 %705
      %v707 = vsel %vm703, %v701, -inf
      %708 = vmax.xlane.f32.xlu0 %v707
      %v709 = vpop.xlane.xlu0 %708
      %vm710 = vcmask 158720
      %v711 = vsel %vm710, %v702, -inf
      %712 = vmax.xlane.f32.xlu0 %v711
      %v713 = vpop.xlane.xlu0 %712
      %v714 = vsub.f32 %v700, %v706
      %v715 = vsub.f32 %v701, %v709
      %v716 = vsub.f32 %v702, %v713
      %v717 = vmul.f32 %v714, 1.442695
      %v718 = vpow.pop %v717
      %v719 = vmul.f32 %v715, 1.442695
      %v720 = vpow.pop %v719
      %v721 = vmul.f32 %v716, 1.442695
      %v722 = vpow.pop %v721
      %v723 = vsel %vm703, %v718, 0.0
      %724 = vadd.xlane.f32.xlu0 %v723
      %v725 = vpop.xlane.xlu0 %724
      %v726 = vsel %vm703, %v720, 0.0
      %727 = vadd.xlane.f32.xlu0 %v726
      %v728 = vpop.xlane.xlu0 %727
      %v729 = vsel %vm710, %v722, 0.0
      %730 = vadd.xlane.f32.xlu0 %v729
      %v731 = vpop.xlane.xlu0 %730
      %v732 = vrcp.pop %v725
      %v733 = vmul.f32 %v718, %v732
      %v734 = vrcp.pop %v728
      %v735 = vmul.f32 %v720, %v734
      %v736 = vrcp.pop %v731
      %v737 = vmul.f32 %v722, %v736
      %v739 = vsel %vm703, %v733, 0
      %v742 = vsel %vm703, %v735, 0
      %v745 = vsel %vm703, %v737, 0
      %v748 = vsel %vm287, %v597, 0
      %750 = vmatprep.subr.mxu0 0.0
      %751 = vmatpush1.msra.mxu0 0.0
      %752 = vmatprep.subr.mxu0 0.0
      %753 = vmatpush1.msra.mxu0 0.0
      %754 = vmatprep.subr.mxu0 0.0
      %755 = vmatpush1.msra.mxu0 0.0
      %756 = vmatprep.subr.mxu0 0.0
      %757 = vmatpush1.msra.mxu0 0.0
      %758 = vmatprep.subr.mxu0 0.0
      %759 = vmatpush1.msra.mxu0 0.0
      %760 = vmatprep.subr.mxu0 0.0
      %761 = vmatpush1.msra.mxu0 0.0
      %762 = vmatprep.subr.mxu0 0.0
      %763 = vmatpush1.msra.mxu0 0.0
      %764 = vmatprep.subr.mxu0 0.0
      %765 = vmatpush1.msra.mxu0 0.0
      %766 = vmatprep.subr.mxu0 0.0
      %767 = vmatpush1.msra.mxu0 0.0
      %768 = vmatprep.subr.mxu0 0.0
      %769 = vmatpush1.msra.mxu0 0.0
      %770 = vmatprep.subr.mxu0 0.0
      %771 = vmatpush1.msra.mxu0 0.0
      %772 = vmatprep.subr.mxu0 0.0
      %773 = vmatpush1.msra.mxu0 0.0
      %774 = vmatprep.subr.mxu0 0.0
      %775 = vmatpush1.msra.mxu0 0.0
      %776 = vmatprep.subr.mxu0 0.0
      %777 = vmatpush1.msra.mxu0 %v748
      %778 = vmatprep.subr.mxu0 0.0
      %779 = vmatpush1.msra.mxu0 %v591
      %780 = vmatprep.subr.mxu0 0.0
      %781 = vmatpush1.msra.mxu0 %v587
      %782 = vmatprep.subr.mxu0 0.0
      %783 = vmatpush2.msra.mxu0 0.0
      %784 = vmatprep.subr.mxu0 0.0
      %785 = vmatpush2.msra.mxu0 0.0
      %786 = vmatprep.subr.mxu0 0.0
      %787 = vmatpush2.msra.mxu0 0.0
      %788 = vmatprep.subr.mxu0 0.0
      %789 = vmatpush2.msra.mxu0 0.0
      %790 = vmatprep.subr.mxu0 0.0
      %791 = vmatpush2.msra.mxu0 0.0
      %792 = vmatprep.subr.mxu0 0.0
      %793 = vmatpush2.msra.mxu0 0.0
      %794 = vmatprep.subr.mxu0 0.0
      %795 = vmatpush2.msra.mxu0 0.0
      %796 = vmatprep.subr.mxu0 0.0
      %797 = vmatpush2.msra.mxu0 0.0
      %798 = vmatprep.subr.mxu0 0.0
      %799 = vmatpush2.msra.mxu0 0.0
      %800 = vmatprep.subr.mxu0 0.0
      %801 = vmatpush2.msra.mxu0 0.0
      %802 = vmatprep.subr.mxu0 0.0
      %803 = vmatpush2.msra.mxu0 0.0
      %804 = vmatprep.subr.mxu0 0.0
      %805 = vmatpush2.msra.mxu0 0.0
      %806 = vmatprep.subr.mxu0 0.0
      %807 = vmatpush2.msra.mxu0 0.0
      %808 = vmatprep.subr.mxu0 0.0
      %809 = vmatpush2.msra.mxu0 0.0
      %810 = vmatprep.subr.mxu0 0.0
      %811 = vmatpush2.msra.mxu0 0.0
      %812 = vmatprep.subr.mxu0 0.0
      %813 = vmatpush2.msra.mxu0 0.0
      %814 = vmatprep.mubr.f32.mxu0 0.0
      %815 = vmatmul.mubr.f32.gmra.mxu0 %v739
      %v816 = vpop.f32.mrf.mxu0
      %v817 = vadd.f32 0.0, %v816
      %v818 = vpop.f32.mrf.mxu0
      %819 = vmatprep.mubr.f32.mxu0 0.0
      %820 = vmatmul.mubr.f32.gmra.mxu0 %v742
      %v821 = vpop.f32.mrf.mxu0
      %v822 = vadd.f32 0.0, %v821
      %v823 = vpop.f32.mrf.mxu0
      %824 = vmatprep.mubr.f32.mxu0 0.0
      %825 = vmatmul.mubr.f32.gmra.mxu0 %v745
      %v826 = vpop.f32.mrf.mxu0
      %v827 = vadd.f32 0.0, %v826
      %v828 = vpop.f32.mrf.mxu0
      %829 = vdwg.mxu0
      %830 = vst.msk [vmem:[#allocation2] sm:$0xff] %vm601, %v817
      %831 = vst.msk [vmem:[#allocation2 + $0x8] sm:$0xff] %vm601, %v822
      %vm832 = vcmask 125952
      %833 = vst.msk [vmem:[#allocation2 + $0x10] sm:$0xf] %vm832, %v827
      %834 = vrot.lane.b32.xlu0 %v441, 112
      %v835 = vpop.permute.xlu0 %834
      %836 = vrot.lane.b32.xlu0 %v444, 112
      %v837 = vpop.permute.xlu0 %836
      %838 = vrot.lane.b32.xlu0 %v449, 112
      %v839 = vpop.permute.xlu0 %838
      %840 = vrot.lane.b32.xlu0 %v585, 112
      %v841 = vpop.permute.xlu0 %840
      %842 = vrot.lane.b32.xlu0 %v589, 112
      %v843 = vpop.permute.xlu0 %842
      %844 = vrot.lane.b32.xlu0 %v595, 112
      %v845 = vpop.permute.xlu0 %844
      %v846 = vsel %vm601, %v835, 0
      %v848 = vsel %vm601, %v837, 0
      %v850 = vsel %vm601, %v839, 0
      %v852 = vsel %vm601, %v841, 0
      %v854 = vsel %vm601, %v843, 0
      %v856 = vsel %vm601, %v845, 0
      %858 = vmatprep.subr.mxu0 0.0
      %859 = vmatpush1.xpose.msra.mxu0 0.0
      %860 = vmatprep.subr.mxu0 0.0
      %861 = vmatpush1.xpose.msra.mxu0 0.0
      %862 = vmatprep.subr.mxu0 0.0
      %863 = vmatpush1.xpose.msra.mxu0 0.0
      %864 = vmatprep.subr.mxu0 0.0
      %865 = vmatpush1.xpose.msra.mxu0 0.0
      %866 = vmatprep.subr.mxu0 0.0
      %867 = vmatpush1.xpose.msra.mxu0 0.0
      %868 = vmatprep.subr.mxu0 0.0
      %869 = vmatpush1.xpose.msra.mxu0 0.0
      %870 = vmatprep.subr.mxu0 0.0
      %871 = vmatpush1.xpose.msra.mxu0 0.0
      %872 = vmatprep.subr.mxu0 0.0
      %873 = vmatpush1.xpose.msra.mxu0 0.0
      %874 = vmatprep.subr.mxu0 0.0
      %875 = vmatpush1.xpose.msra.mxu0 0.0
      %876 = vmatprep.subr.mxu0 0.0
      %877 = vmatpush1.xpose.msra.mxu0 0.0
      %878 = vmatprep.subr.mxu0 0.0
      %879 = vmatpush1.xpose.msra.mxu0 0.0
      %880 = vmatprep.subr.mxu0 0.0
      %881 = vmatpush1.xpose.msra.mxu0 0.0
      %882 = vmatprep.subr.mxu0 0.0
      %883 = vmatpush1.xpose.msra.mxu0 0.0
      %884 = vmatprep.subr.mxu0 0.0
      %885 = vmatpush1.xpose.msra.mxu0 %v856
      %886 = vmatprep.subr.mxu0 0.0
      %887 = vmatpush1.xpose.msra.mxu0 %v854
      %888 = vmatprep.subr.mxu0 0.0
      %889 = vmatpush1.xpose.msra.mxu0 %v852
      %890 = vmatprep.subr.mxu0 0.0
      %891 = vmatpush2.xpose.msra.mxu0 0.0
      %892 = vmatprep.subr.mxu0 0.0
      %893 = vmatpush2.xpose.msra.mxu0 0.0
      %894 = vmatprep.subr.mxu0 0.0
      %895 = vmatpush2.xpose.msra.mxu0 0.0
      %896 = vmatprep.subr.mxu0 0.0
      %897 = vmatpush2.xpose.msra.mxu0 0.0
      %898 = vmatprep.subr.mxu0 0.0
      %899 = vmatpush2.xpose.msra.mxu0 0.0
      %900 = vmatprep.subr.mxu0 0.0
      %901 = vmatpush2.xpose.msra.mxu0 0.0
      %902 = vmatprep.subr.mxu0 0.0
      %903 = vmatpush2.xpose.msra.mxu0 0.0
      %904 = vmatprep.subr.mxu0 0.0
      %905 = vmatpush2.xpose.msra.mxu0 0.0
      %906 = vmatprep.subr.mxu0 0.0
      %907 = vmatpush2.xpose.msra.mxu0 0.0
      %908 = vmatprep.subr.mxu0 0.0
      %909 = vmatpush2.xpose.msra.mxu0 0.0
      %910 = vmatprep.subr.mxu0 0.0
      %911 = vmatpush2.xpose.msra.mxu0 0.0
      %912 = vmatprep.subr.mxu0 0.0
      %913 = vmatpush2.xpose.msra.mxu0 0.0
      %914 = vmatprep.subr.mxu0 0.0
      %915 = vmatpush2.xpose.msra.mxu0 0.0
      %916 = vmatprep.subr.mxu0 0.0
      %917 = vmatpush2.xpose.msra.mxu0 0.0
      %918 = vmatprep.subr.mxu0 0.0
      %919 = vmatpush2.xpose.msra.mxu0 0.0
      %920 = vmatprep.subr.mxu0 0.0
      %921 = vmatpush2.xpose.msra.mxu0 0.0
      %922 = vmatprep.mubr.f32.mxu0 0.0
      %923 = vmatmul.mubr.f32.gmra.mxu0 %v846
      %v924 = vpop.f32.mrf.mxu0
      %v925 = vadd.f32 0.0, %v924
      %v926 = vpop.f32.mrf.mxu0
      %927 = vmatprep.mubr.f32.mxu0 0.0
      %928 = vmatmul.mubr.f32.gmra.mxu0 %v848
      %v929 = vpop.f32.mrf.mxu0
      %v930 = vadd.f32 0.0, %v929
      %v931 = vpop.f32.mrf.mxu0
      %932 = vmatprep.mubr.f32.mxu0 0.0
      %933 = vmatmul.mubr.f32.gmra.mxu0 %v850
      %v934 = vpop.f32.mrf.mxu0
      %v935 = vadd.f32 0.0, %v934
      %v936 = vpop.f32.mrf.mxu0
      %937 = vdwg.mxu0
      %v938 = vmul.f32 %v925, 0.25
      %v939 = vmul.f32 %v930, 0.25
      %v940 = vmul.f32 %v935, 0.25
      %v941 = vsel %vm703, %v938, -inf
      %942 = vmax.xlane.f32.xlu0 %v941
      %v943 = vpop.xlane.xlu0 %942
      %v944 = vsel %vm703, %v939, -inf
      %945 = vmax.xlane.f32.xlu0 %v944
      %v946 = vpop.xlane.xlu0 %945
      %v947 = vsel %vm710, %v940, -inf
      %948 = vmax.xlane.f32.xlu0 %v947
      %v949 = vpop.xlane.xlu0 %948
      %v950 = vsub.f32 %v938, %v943
      %v951 = vsub.f32 %v939, %v946
      %v952 = vsub.f32 %v940, %v949
      %v953 = vmul.f32 %v950, 1.442695
      %v954 = vpow.pop %v953
      %v955 = vmul.f32 %v951, 1.442695
      %v956 = vpow.pop %v955
      %v957 = vmul.f32 %v952, 1.442695
      %v958 = vpow.pop %v957
      %v959 = vsel %vm703, %v954, 0.0
      %960 = vadd.xlane.f32.xlu0 %v959
      %v961 = vpop.xlane.xlu0 %960
      %v962 = vsel %vm703, %v956, 0.0
      %963 = vadd.xlane.f32.xlu0 %v962
      %v964 = vpop.xlane.xlu0 %963
      %v965 = vsel %vm710, %v958, 0.0
      %966 = vadd.xlane.f32.xlu0 %v965
      %v967 = vpop.xlane.xlu0 %966
      %v968 = vrcp.pop %v961
      %v969 = vmul.f32 %v954, %v968
      %v970 = vrcp.pop %v964
      %v971 = vmul.f32 %v956, %v970
      %v972 = vrcp.pop %v967
      %v973 = vmul.f32 %v958, %v972
      %976 = vrot.lane.b32.xlu0 %v587, 112
      %v977 = vpop.permute.xlu0 %976
      %978 = vrot.lane.b32.xlu0 %v591, 112
      %v979 = vpop.permute.xlu0 %978
      %980 = vrot.lane.b32.xlu0 %v597, 112
      %v981 = vpop.permute.xlu0 %980
      %v985 = vsel %vm703, %v969, 0
      %v988 = vsel %vm703, %v971, 0
      %v991 = vsel %vm703, %v973, 0
      %v993 = vsel %vm287, %v981, 0
      %995 = vmatprep.subr.mxu0 0.0
      %996 = vmatpush1.msra.mxu0 0.0
      %997 = vmatprep.subr.mxu0 0.0
      %998 = vmatpush1.msra.mxu0 0.0
      %999 = vmatprep.subr.mxu0 0.0
      %1000 = vmatpush1.msra.mxu0 0.0
      %1001 = vmatprep.subr.mxu0 0.0
      %1002 = vmatpush1.msra.mxu0 0.0
      %1003 = vmatprep.subr.mxu0 0.0
      %1004 = vmatpush1.msra.mxu0 0.0
      %1005 = vmatprep.subr.mxu0 0.0
      %1006 = vmatpush1.msra.mxu0 0.0
      %1007 = vmatprep.subr.mxu0 0.0
      %1008 = vmatpush1.msra.mxu0 0.0
      %1009 = vmatprep.subr.mxu0 0.0
      %1010 = vmatpush1.msra.mxu0 0.0
      %1011 = vmatprep.subr.mxu0 0.0
      %1012 = vmatpush1.msra.mxu0 0.0
      %1013 = vmatprep.subr.mxu0 0.0
      %1014 = vmatpush1.msra.mxu0 0.0
      %1015 = vmatprep.subr.mxu0 0.0
      %1016 = vmatpush1.msra.mxu0 0.0
      %1017 = vmatprep.subr.mxu0 0.0
      %1018 = vmatpush1.msra.mxu0 0.0
      %1019 = vmatprep.subr.mxu0 0.0
      %1020 = vmatpush1.msra.mxu0 0.0
      %1021 = vmatprep.subr.mxu0 0.0
      %1022 = vmatpush1.msra.mxu0 %v993
      %1023 = vmatprep.subr.mxu0 0.0
      %1024 = vmatpush1.msra.mxu0 %v979
      %1025 = vmatprep.subr.mxu0 0.0
      %1026 = vmatpush1.msra.mxu0 %v977
      %1027 = vmatprep.subr.mxu0 0.0
      %1028 = vmatpush2.msra.mxu0 0.0
      %1029 = vmatprep.subr.mxu0 0.0
      %1030 = vmatpush2.msra.mxu0 0.0
      %1031 = vmatprep.subr.mxu0 0.0
      %1032 = vmatpush2.msra.mxu0 0.0
      %1033 = vmatprep.subr.mxu0 0.0
      %1034 = vmatpush2.msra.mxu0 0.0
      %1035 = vmatprep.subr.mxu0 0.0
      %1036 = vmatpush2.msra.mxu0 0.0
      %1037 = vmatprep.subr.mxu0 0.0
      %1038 = vmatpush2.msra.mxu0 0.0
      %1039 = vmatprep.subr.mxu0 0.0
      %1040 = vmatpush2.msra.mxu0 0.0
      %1041 = vmatprep.subr.mxu0 0.0
      %1042 = vmatpush2.msra.mxu0 0.0
      %1043 = vmatprep.subr.mxu0 0.0
      %1044 = vmatpush2.msra.mxu0 0.0
      %1045 = vmatprep.subr.mxu0 0.0
      %1046 = vmatpush2.msra.mxu0 0.0
      %1047 = vmatprep.subr.mxu0 0.0
      %1048 = vmatpush2.msra.mxu0 0.0
      %1049 = vmatprep.subr.mxu0 0.0
      %1050 = vmatpush2.msra.mxu0 0.0
      %1051 = vmatprep.subr.mxu0 0.0
      %1052 = vmatpush2.msra.mxu0 0.0
      %1053 = vmatprep.subr.mxu0 0.0
      %1054 = vmatpush2.msra.mxu0 0.0
      %1055 = vmatprep.subr.mxu0 0.0
      %1056 = vmatpush2.msra.mxu0 0.0
      %1057 = vmatprep.subr.mxu0 0.0
      %1058 = vmatpush2.msra.mxu0 0.0
      %1059 = vmatprep.mubr.f32.mxu0 0.0
      %1060 = vmatmul.mubr.f32.gmra.mxu0 %v985
      %v1061 = vpop.f32.mrf.mxu0
      %v1062 = vadd.f32 0.0, %v1061
      %v1063 = vpop.f32.mrf.mxu0
      %1064 = vmatprep.mubr.f32.mxu0 0.0
      %1065 = vmatmul.mubr.f32.gmra.mxu0 %v988
      %v1066 = vpop.f32.mrf.mxu0
      %v1067 = vadd.f32 0.0, %v1066
      %v1068 = vpop.f32.mrf.mxu0
      %1069 = vmatprep.mubr.f32.mxu0 0.0
      %1070 = vmatmul.mubr.f32.gmra.mxu0 %v991
      %v1071 = vpop.f32.mrf.mxu0
      %v1072 = vadd.f32 0.0, %v1071
      %v1073 = vpop.f32.mrf.mxu0
      %1074 = vdwg.mxu0
      %1078 = vrot.lane.b32.xlu0 %v1062, 16
      %v1079 = vpop.permute.xlu0 %1078
      %1080 = vrot.lane.b32.xlu0 %v1067, 16
      %v1081 = vpop.permute.xlu0 %1080
      %1082 = vrot.lane.b32.xlu0 %v1072, 16
      %v1083 = vpop.permute.xlu0 %1082
      %vm1087 = vcmask 261248
      %1088 = vst.msk [vmem:[#allocation2] sm:$0xff] %vm1087, %v1079
      %1089 = vst.msk [vmem:[#allocation2 + $0x8] sm:$0xff] %vm1087, %v1081
      %vm1090 = vcmask 257152
      %1091 = vst.msk [vmem:[#allocation2 + $0x10] sm:$0xf] %vm1090, %v1083
      %1092 = vrot.lane.b32.xlu0 %v441, 96
      %v1093 = vpop.permute.xlu0 %1092
      %1094 = vrot.lane.b32.xlu0 %v444, 96
      %v1095 = vpop.permute.xlu0 %1094
      %1096 = vrot.lane.b32.xlu0 %v449, 96
      %v1097 = vpop.permute.xlu0 %1096
      %1098 = vrot.lane.b32.xlu0 %v585, 96
      %v1099 = vpop.permute.xlu0 %1098
      %1100 = vrot.lane.b32.xlu0 %v589, 96
      %v1101 = vpop.permute.xlu0 %1100
      %1102 = vrot.lane.b32.xlu0 %v595, 96
      %v1103 = vpop.permute.xlu0 %1102
      %v1104 = vsel %vm601, %v1093, 0
      %v1106 = vsel %vm601, %v1095, 0
      %v1108 = vsel %vm601, %v1097, 0
      %v1110 = vsel %vm601, %v1099, 0
      %v1112 = vsel %vm601, %v1101, 0
      %v1114 = vsel %vm601, %v1103, 0
      %1116 = vmatprep.subr.mxu0 0.0
      %1117 = vmatpush1.xpose.msra.mxu0 0.0
      %1118 = vmatprep.subr.mxu0 0.0
      %1119 = vmatpush1.xpose.msra.mxu0 0.0
      %1120 = vmatprep.subr.mxu0 0.0
      %1121 = vmatpush1.xpose.msra.mxu0 0.0
      %1122 = vmatprep.subr.mxu0 0.0
      %1123 = vmatpush1.xpose.msra.mxu0 0.0
      %1124 = vmatprep.subr.mxu0 0.0
      %1125 = vmatpush1.xpose.msra.mxu0 0.0
      %1126 = vmatprep.subr.mxu0 0.0
      %1127 = vmatpush1.xpose.msra.mxu0 0.0
      %1128 = vmatprep.subr.mxu0 0.0
      %1129 = vmatpush1.xpose.msra.mxu0 0.0
      %1130 = vmatprep.subr.mxu0 0.0
      %1131 = vmatpush1.xpose.msra.mxu0 0.0
      %1132 = vmatprep.subr.mxu0 0.0
      %1133 = vmatpush1.xpose.msra.mxu0 0.0
      %1134 = vmatprep.subr.mxu0 0.0
      %1135 = vmatpush1.xpose.msra.mxu0 0.0
      %1136 = vmatprep.subr.mxu0 0.0
      %1137 = vmatpush1.xpose.msra.mxu0 0.0
      %1138 = vmatprep.subr.mxu0 0.0
      %1139 = vmatpush1.xpose.msra.mxu0 0.0
      %1140 = vmatprep.subr.mxu0 0.0
      %1141 = vmatpush1.xpose.msra.mxu0 0.0
      %1142 = vmatprep.subr.mxu0 0.0
      %1143 = vmatpush1.xpose.msra.mxu0 %v1114
      %1144 = vmatprep.subr.mxu0 0.0
      %1145 = vmatpush1.xpose.msra.mxu0 %v1112
      %1146 = vmatprep.subr.mxu0 0.0
      %1147 = vmatpush1.xpose.msra.mxu0 %v1110
      %1148 = vmatprep.subr.mxu0 0.0
      %1149 = vmatpush2.xpose.msra.mxu0 0.0
      %1150 = vmatprep.subr.mxu0 0.0
      %1151 = vmatpush2.xpose.msra.mxu0 0.0
      %1152 = vmatprep.subr.mxu0 0.0
      %1153 = vmatpush2.xpose.msra.mxu0 0.0
      %1154 = vmatprep.subr.mxu0 0.0
      %1155 = vmatpush2.xpose.msra.mxu0 0.0
      %1156 = vmatprep.subr.mxu0 0.0
      %1157 = vmatpush2.xpose.msra.mxu0 0.0
      %1158 = vmatprep.subr.mxu0 0.0
      %1159 = vmatpush2.xpose.msra.mxu0 0.0
      %1160 = vmatprep.subr.mxu0 0.0
      %1161 = vmatpush2.xpose.msra.mxu0 0.0
      %1162 = vmatprep.subr.mxu0 0.0
      %1163 = vmatpush2.xpose.msra.mxu0 0.0
      %1164 = vmatprep.subr.mxu0 0.0
      %1165 = vmatpush2.xpose.msra.mxu0 0.0
      %1166 = vmatprep.subr.mxu0 0.0
      %1167 = vmatpush2.xpose.msra.mxu0 0.0
      %1168 = vmatprep.subr.mxu0 0.0
      %1169 = vmatpush2.xpose.msra.mxu0 0.0
      %1170 = vmatprep.subr.mxu0 0.0
      %1171 = vmatpush2.xpose.msra.mxu0 0.0
      %1172 = vmatprep.subr.mxu0 0.0
      %1173 = vmatpush2.xpose.msra.mxu0 0.0
      %1174 = vmatprep.subr.mxu0 0.0
      %1175 = vmatpush2.xpose.msra.mxu0 0.0
      %1176 = vmatprep.subr.mxu0 0.0
      %1177 = vmatpush2.xpose.msra.mxu0 0.0
      %1178 = vmatprep.subr.mxu0 0.0
      %1179 = vmatpush2.xpose.msra.mxu0 0.0
      %1180 = vmatprep.mubr.f32.mxu0 0.0
      %1181 = vmatmul.mubr.f32.gmra.mxu0 %v1104
      %v1182 = vpop.f32.mrf.mxu0
      %v1183 = vadd.f32 0.0, %v1182
      %v1184 = vpop.f32.mrf.mxu0
      %1185 = vmatprep.mubr.f32.mxu0 0.0
      %1186 = vmatmul.mubr.f32.gmra.mxu0 %v1106
      %v1187 = vpop.f32.mrf.mxu0
      %v1188 = vadd.f32 0.0, %v1187
      %v1189 = vpop.f32.mrf.mxu0
      %1190 = vmatprep.mubr.f32.mxu0 0.0
      %1191 = vmatmul.mubr.f32.gmra.mxu0 %v1108
      %v1192 = vpop.f32.mrf.mxu0
      %v1193 = vadd.f32 0.0, %v1192
      %v1194 = vpop.f32.mrf.mxu0
      %1195 = vdwg.mxu0
      %v1196 = vmul.f32 %v1183, 0.25
      %v1197 = vmul.f32 %v1188, 0.25
      %v1198 = vmul.f32 %v1193, 0.25
      %v1199 = vsel %vm703, %v1196, -inf
      %1200 = vmax.xlane.f32.xlu0 %v1199
      %v1201 = vpop.xlane.xlu0 %1200
      %v1202 = vsel %vm703, %v1197, -inf
      %1203 = vmax.xlane.f32.xlu0 %v1202
      %v1204 = vpop.xlane.xlu0 %1203
      %v1205 = vsel %vm710, %v1198, -inf
      %1206 = vmax.xlane.f32.xlu0 %v1205
      %v1207 = vpop.xlane.xlu0 %1206
      %v1208 = vsub.f32 %v1196, %v1201
      %v1209 = vsub.f32 %v1197, %v1204
      %v1210 = vsub.f32 %v1198, %v1207
      %v1211 = vmul.f32 %v1208, 1.442695
      %v1212 = vpow.pop %v1211
      %v1213 = vmul.f32 %v1209, 1.442695
      %v1214 = vpow.pop %v1213
      %v1215 = vmul.f32 %v1210, 1.442695
      %v1216 = vpow.pop %v1215
      %v1217 = vsel %vm703, %v1212, 0.0
      %1218 = vadd.xlane.f32.xlu0 %v1217
      %v1219 = vpop.xlane.xlu0 %1218
      %v1220 = vsel %vm703, %v1214, 0.0
      %1221 = vadd.xlane.f32.xlu0 %v1220
      %v1222 = vpop.xlane.xlu0 %1221
      %v1223 = vsel %vm710, %v1216, 0.0
      %1224 = vadd.xlane.f32.xlu0 %v1223
      %v1225 = vpop.xlane.xlu0 %1224
      %v1226 = vrcp.pop %v1219
      %v1227 = vmul.f32 %v1212, %v1226
      %v1228 = vrcp.pop %v1222
      %v1229 = vmul.f32 %v1214, %v1228
      %v1230 = vrcp.pop %v1225
      %v1231 = vmul.f32 %v1216, %v1230
      %1232 = vrot.lane.b32.xlu0 %v587, 96
      %v1233 = vpop.permute.xlu0 %1232
      %1234 = vrot.lane.b32.xlu0 %v591, 96
      %v1235 = vpop.permute.xlu0 %1234
      %1236 = vrot.lane.b32.xlu0 %v597, 96
      %v1237 = vpop.permute.xlu0 %1236
      %v1241 = vsel %vm703, %v1227, 0
      %v1244 = vsel %vm703, %v1229, 0
      %v1247 = vsel %vm703, %v1231, 0
      %v1249 = vsel %vm287, %v1237, 0
      %1251 = vmatprep.subr.mxu0 0.0
      %1252 = vmatpush1.msra.mxu0 0.0
      %1253 = vmatprep.subr.mxu0 0.0
      %1254 = vmatpush1.msra.mxu0 0.0
      %1255 = vmatprep.subr.mxu0 0.0
      %1256 = vmatpush1.msra.mxu0 0.0
      %1257 = vmatprep.subr.mxu0 0.0
      %1258 = vmatpush1.msra.mxu0 0.0
      %1259 = vmatprep.subr.mxu0 0.0
      %1260 = vmatpush1.msra.mxu0 0.0
      %1261 = vmatprep.subr.mxu0 0.0
      %1262 = vmatpush1.msra.mxu0 0.0
      %1263 = vmatprep.subr.mxu0 0.0
      %1264 = vmatpush1.msra.mxu0 0.0
      %1265 = vmatprep.subr.mxu0 0.0
      %1266 = vmatpush1.msra.mxu0 0.0
      %1267 = vmatprep.subr.mxu0 0.0
      %1268 = vmatpush1.msra.mxu0 0.0
      %1269 = vmatprep.subr.mxu0 0.0
      %1270 = vmatpush1.msra.mxu0 0.0
      %1271 = vmatprep.subr.mxu0 0.0
      %1272 = vmatpush1.msra.mxu0 0.0
      %1273 = vmatprep.subr.mxu0 0.0
      %1274 = vmatpush1.msra.mxu0 0.0
      %1275 = vmatprep.subr.mxu0 0.0
      %1276 = vmatpush1.msra.mxu0 0.0
      %1277 = vmatprep.subr.mxu0 0.0
      %1278 = vmatpush1.msra.mxu0 %v1249
      %1279 = vmatprep.subr.mxu0 0.0
      %1280 = vmatpush1.msra.mxu0 %v1235
      %1281 = vmatprep.subr.mxu0 0.0
      %1282 = vmatpush1.msra.mxu0 %v1233
      %1283 = vmatprep.subr.mxu0 0.0
      %1284 = vmatpush2.msra.mxu0 0.0
      %1285 = vmatprep.subr.mxu0 0.0
      %1286 = vmatpush2.msra.mxu0 0.0
      %1287 = vmatprep.subr.mxu0 0.0
      %1288 = vmatpush2.msra.mxu0 0.0
      %1289 = vmatprep.subr.mxu0 0.0
      %1290 = vmatpush2.msra.mxu0 0.0
      %1291 = vmatprep.subr.mxu0 0.0
      %1292 = vmatpush2.msra.mxu0 0.0
      %1293 = vmatprep.subr.mxu0 0.0
      %1294 = vmatpush2.msra.mxu0 0.0
      %1295 = vmatprep.subr.mxu0 0.0
      %1296 = vmatpush2.msra.mxu0 0.0
      %1297 = vmatprep.subr.mxu0 0.0
      %1298 = vmatpush2.msra.mxu0 0.0
      %1299 = vmatprep.subr.mxu0 0.0
      %1300 = vmatpush2.msra.mxu0 0.0
      %1301 = vmatprep.subr.mxu0 0.0
      %1302 = vmatpush2.msra.mxu0 0.0
      %1303 = vmatprep.subr.mxu0 0.0
      %1304 = vmatpush2.msra.mxu0 0.0
      %1305 = vmatprep.subr.mxu0 0.0
      %1306 = vmatpush2.msra.mxu0 0.0
      %1307 = vmatprep.subr.mxu0 0.0
      %1308 = vmatpush2.msra.mxu0 0.0
      %1309 = vmatprep.subr.mxu0 0.0
      %1310 = vmatpush2.msra.mxu0 0.0
      %1311 = vmatprep.subr.mxu0 0.0
      %1312 = vmatpush2.msra.mxu0 0.0
      %1313 = vmatprep.subr.mxu0 0.0
      %1314 = vmatpush2.msra.mxu0 0.0
      %1315 = vmatprep.mubr.f32.mxu0 0.0
      %1316 = vmatmul.mubr.f32.gmra.mxu0 %v1241
      %v1317 = vpop.f32.mrf.mxu0
      %v1318 = vadd.f32 0.0, %v1317
      %v1319 = vpop.f32.mrf.mxu0
      %1320 = vmatprep.mubr.f32.mxu0 0.0
      %1321 = vmatmul.mubr.f32.gmra.mxu0 %v1244
      %v1322 = vpop.f32.mrf.mxu0
      %v1323 = vadd.f32 0.0, %v1322
      %v1324 = vpop.f32.mrf.mxu0
      %1325 = vmatprep.mubr.f32.mxu0 0.0
      %1326 = vmatmul.mubr.f32.gmra.mxu0 %v1247
      %v1327 = vpop.f32.mrf.mxu0
      %v1328 = vadd.f32 0.0, %v1327
      %v1329 = vpop.f32.mrf.mxu0
      %1330 = vdwg.mxu0
      %1334 = vrot.lane.b32.xlu0 %v1318, 32
      %v1335 = vpop.permute.xlu0 %1334
      %1336 = vrot.lane.b32.xlu0 %v1323, 32
      %v1337 = vpop.permute.xlu0 %1336
      %1338 = vrot.lane.b32.xlu0 %v1328, 32
      %v1339 = vpop.permute.xlu0 %1338
      %vm1343 = vcmask 392448
      %1344 = vst.msk [vmem:[#allocation2] sm:$0xff] %vm1343, %v1335
      %1345 = vst.msk [vmem:[#allocation2 + $0x8] sm:$0xff] %vm1343, %v1337
      %vm1346 = vcmask 388352
      %1347 = vst.msk [vmem:[#allocation2 + $0x10] sm:$0xf] %vm1346, %v1339
      %1348 = vrot.lane.b32.xlu0 %v441, 80
      %v1349 = vpop.permute.xlu0 %1348
      %1350 = vrot.lane.b32.xlu0 %v444, 80
      %v1351 = vpop.permute.xlu0 %1350
      %1352 = vrot.lane.b32.xlu0 %v449, 80
      %v1353 = vpop.permute.xlu0 %1352
      %1354 = vrot.lane.b32.xlu0 %v585, 80
      %v1355 = vpop.permute.xlu0 %1354
      %1356 = vrot.lane.b32.xlu0 %v589, 80
      %v1357 = vpop.permute.xlu0 %1356
      %1358 = vrot.lane.b32.xlu0 %v595, 80
      %v1359 = vpop.permute.xlu0 %1358
      %v1360 = vsel %vm601, %v1349, 0
      %v1362 = vsel %vm601, %v1351, 0
      %v1364 = vsel %vm601, %v1353, 0
      %v1366 = vsel %vm601, %v1355, 0
      %v1368 = vsel %vm601, %v1357, 0
      %v1370 = vsel %vm601, %v1359, 0
      %1372 = vmatprep.subr.mxu0 0.0
      %1373 = vmatpush1.xpose.msra.mxu0 0.0
      %1374 = vmatprep.subr.mxu0 0.0
      %1375 = vmatpush1.xpose.msra.mxu0 0.0
      %1376 = vmatprep.subr.mxu0 0.0
      %1377 = vmatpush1.xpose.msra.mxu0 0.0
      %1378 = vmatprep.subr.mxu0 0.0
      %1379 = vmatpush1.xpose.msra.mxu0 0.0
      %1380 = vmatprep.subr.mxu0 0.0
      %1381 = vmatpush1.xpose.msra.mxu0 0.0
      %1382 = vmatprep.subr.mxu0 0.0
      %1383 = vmatpush1.xpose.msra.mxu0 0.0
      %1384 = vmatprep.subr.mxu0 0.0
      %1385 = vmatpush1.xpose.msra.mxu0 0.0
      %1386 = vmatprep.subr.mxu0 0.0
      %1387 = vmatpush1.xpose.msra.mxu0 0.0
      %1388 = vmatprep.subr.mxu0 0.0
      %1389 = vmatpush1.xpose.msra.mxu0 0.0
      %1390 = vmatprep.subr.mxu0 0.0
      %1391 = vmatpush1.xpose.msra.mxu0 0.0
      %1392 = vmatprep.subr.mxu0 0.0
      %1393 = vmatpush1.xpose.msra.mxu0 0.0
      %1394 = vmatprep.subr.mxu0 0.0
      %1395 = vmatpush1.xpose.msra.mxu0 0.0
      %1396 = vmatprep.subr.mxu0 0.0
      %1397 = vmatpush1.xpose.msra.mxu0 0.0
      %1398 = vmatprep.subr.mxu0 0.0
      %1399 = vmatpush1.xpose.msra.mxu0 %v1370
      %1400 = vmatprep.subr.mxu0 0.0
      %1401 = vmatpush1.xpose.msra.mxu0 %v1368
      %1402 = vmatprep.subr.mxu0 0.0
      %1403 = vmatpush1.xpose.msra.mxu0 %v1366
      %1404 = vmatprep.subr.mxu0 0.0
      %1405 = vmatpush2.xpose.msra.mxu0 0.0
      %1406 = vmatprep.subr.mxu0 0.0
      %1407 = vmatpush2.xpose.msra.mxu0 0.0
      %1408 = vmatprep.subr.mxu0 0.0
      %1409 = vmatpush2.xpose.msra.mxu0 0.0
      %1410 = vmatprep.subr.mxu0 0.0
      %1411 = vmatpush2.xpose.msra.mxu0 0.0
      %1412 = vmatprep.subr.mxu0 0.0
      %1413 = vmatpush2.xpose.msra.mxu0 0.0
      %1414 = vmatprep.subr.mxu0 0.0
      %1415 = vmatpush2.xpose.msra.mxu0 0.0
      %1416 = vmatprep.subr.mxu0 0.0
      %1417 = vmatpush2.xpose.msra.mxu0 0.0
      %1418 = vmatprep.subr.mxu0 0.0
      %1419 = vmatpush2.xpose.msra.mxu0 0.0
      %1420 = vmatprep.subr.mxu0 0.0
      %1421 = vmatpush2.xpose.msra.mxu0 0.0
      %1422 = vmatprep.subr.mxu0 0.0
      %1423 = vmatpush2.xpose.msra.mxu0 0.0
      %1424 = vmatprep.subr.mxu0 0.0
      %1425 = vmatpush2.xpose.msra.mxu0 0.0
      %1426 = vmatprep.subr.mxu0 0.0
      %1427 = vmatpush2.xpose.msra.mxu0 0.0
      %1428 = vmatprep.subr.mxu0 0.0
      %1429 = vmatpush2.xpose.msra.mxu0 0.0
      %1430 = vmatprep.subr.mxu0 0.0
      %1431 = vmatpush2.xpose.msra.mxu0 0.0
      %1432 = vmatprep.subr.mxu0 0.0
      %1433 = vmatpush2.xpose.msra.mxu0 0.0
      %1434 = vmatprep.subr.mxu0 0.0
      %1435 = vmatpush2.xpose.msra.mxu0 0.0
      %1436 = vmatprep.mubr.f32.mxu0 0.0
      %1437 = vmatmul.mubr.f32.gmra.mxu0 %v1360
      %v1438 = vpop.f32.mrf.mxu0
      %v1439 = vadd.f32 0.0, %v1438
      %v1440 = vpop.f32.mrf.mxu0
      %1441 = vmatprep.mubr.f32.mxu0 0.0
      %1442 = vmatmul.mubr.f32.gmra.mxu0 %v1362
      %v1443 = vpop.f32.mrf.mxu0
      %v1444 = vadd.f32 0.0, %v1443
      %v1445 = vpop.f32.mrf.mxu0
      %1446 = vmatprep.mubr.f32.mxu0 0.0
      %1447 = vmatmul.mubr.f32.gmra.mxu0 %v1364
      %v1448 = vpop.f32.mrf.mxu0
      %v1449 = vadd.f32 0.0, %v1448
      %v1450 = vpop.f32.mrf.mxu0
      %1451 = vdwg.mxu0
      %v1452 = vmul.f32 %v1439, 0.25
      %v1453 = vmul.f32 %v1444, 0.25
      %v1454 = vmul.f32 %v1449, 0.25
      %v1455 = vsel %vm703, %v1452, -inf
      %1456 = vmax.xlane.f32.xlu0 %v1455
      %v1457 = vpop.xlane.xlu0 %1456
      %v1458 = vsel %vm703, %v1453, -inf
      %1459 = vmax.xlane.f32.xlu0 %v1458
      %v1460 = vpop.xlane.xlu0 %1459
      %v1461 = vsel %vm710, %v1454, -inf
      %1462 = vmax.xlane.f32.xlu0 %v1461
      %v1463 = vpop.xlane.xlu0 %1462
      %v1464 = vsub.f32 %v1452, %v1457
      %v1465 = vsub.f32 %v1453, %v1460
      %v1466 = vsub.f32 %v1454, %v1463
      %v1467 = vmul.f32 %v1464, 1.442695
      %v1468 = vpow.pop %v1467
      %v1469 = vmul.f32 %v1465, 1.442695
      %v1470 = vpow.pop %v1469
      %v1471 = vmul.f32 %v1466, 1.442695
      %v1472 = vpow.pop %v1471
      %v1473 = vsel %vm703, %v1468, 0.0
      %1474 = vadd.xlane.f32.xlu0 %v1473
      %v1475 = vpop.xlane.xlu0 %1474
      %v1476 = vsel %vm703, %v1470, 0.0
      %1477 = vadd.xlane.f32.xlu0 %v1476
      %v1478 = vpop.xlane.xlu0 %1477
      %v1479 = vsel %vm710, %v1472, 0.0
      %1480 = vadd.xlane.f32.xlu0 %v1479
      %v1481 = vpop.xlane.xlu0 %1480
      %v1482 = vrcp.pop %v1475
      %v1483 = vmul.f32 %v1468, %v1482
      %v1484 = vrcp.pop %v1478
      %v1485 = vmul.f32 %v1470, %v1484
      %v1486 = vrcp.pop %v1481
      %v1487 = vmul.f32 %v1472, %v1486
      %1488 = vrot.lane.b32.xlu0 %v587, 80
      %v1489 = vpop.permute.xlu0 %1488
      %1490 = vrot.lane.b32.xlu0 %v591, 80
      %v1491 = vpop.permute.xlu0 %1490
      %1492 = vrot.lane.b32.xlu0 %v597, 80
      %v1493 = vpop.permute.xlu0 %1492
      %v1497 = vsel %vm703, %v1483, 0
      %v1500 = vsel %vm703, %v1485, 0
      %v1503 = vsel %vm703, %v1487, 0
      %v1505 = vsel %vm287, %v1493, 0
      %1507 = vmatprep.subr.mxu0 0.0
      %1508 = vmatpush1.msra.mxu0 0.0
      %1509 = vmatprep.subr.mxu0 0.0
      %1510 = vmatpush1.msra.mxu0 0.0
      %1511 = vmatprep.subr.mxu0 0.0
      %1512 = vmatpush1.msra.mxu0 0.0
      %1513 = vmatprep.subr.mxu0 0.0
      %1514 = vmatpush1.msra.mxu0 0.0
      %1515 = vmatprep.subr.mxu0 0.0
      %1516 = vmatpush1.msra.mxu0 0.0
      %1517 = vmatprep.subr.mxu0 0.0
      %1518 = vmatpush1.msra.mxu0 0.0
      %1519 = vmatprep.subr.mxu0 0.0
      %1520 = vmatpush1.msra.mxu0 0.0
      %1521 = vmatprep.subr.mxu0 0.0
      %1522 = vmatpush1.msra.mxu0 0.0
      %1523 = vmatprep.subr.mxu0 0.0
      %1524 = vmatpush1.msra.mxu0 0.0
      %1525 = vmatprep.subr.mxu0 0.0
      %1526 = vmatpush1.msra.mxu0 0.0
      %1527 = vmatprep.subr.mxu0 0.0
      %1528 = vmatpush1.msra.mxu0 0.0
      %1529 = vmatprep.subr.mxu0 0.0
      %1530 = vmatpush1.msra.mxu0 0.0
      %1531 = vmatprep.subr.mxu0 0.0
      %1532 = vmatpush1.msra.mxu0 0.0
      %1533 = vmatprep.subr.mxu0 0.0
      %1534 = vmatpush1.msra.mxu0 %v1505
      %1535 = vmatprep.subr.mxu0 0.0
      %1536 = vmatpush1.msra.mxu0 %v1491
      %1537 = vmatprep.subr.mxu0 0.0
      %1538 = vmatpush1.msra.mxu0 %v1489
      %1539 = vmatprep.subr.mxu0 0.0
      %1540 = vmatpush2.msra.mxu0 0.0
      %1541 = vmatprep.subr.mxu0 0.0
      %1542 = vmatpush2.msra.mxu0 0.0
      %1543 = vmatprep.subr.mxu0 0.0
      %1544 = vmatpush2.msra.mxu0 0.0
      %1545 = vmatprep.subr.mxu0 0.0
      %1546 = vmatpush2.msra.mxu0 0.0
      %1547 = vmatprep.subr.mxu0 0.0
      %1548 = vmatpush2.msra.mxu0 0.0
      %1549 = vmatprep.subr.mxu0 0.0
      %1550 = vmatpush2.msra.mxu0 0.0
      %1551 = vmatprep.subr.mxu0 0.0
      %1552 = vmatpush2.msra.mxu0 0.0
      %1553 = vmatprep.subr.mxu0 0.0
      %1554 = vmatpush2.msra.mxu0 0.0
      %1555 = vmatprep.subr.mxu0 0.0
      %1556 = vmatpush2.msra.mxu0 0.0
      %1557 = vmatprep.subr.mxu0 0.0
      %1558 = vmatpush2.msra.mxu0 0.0
      %1559 = vmatprep.subr.mxu0 0.0
      %1560 = vmatpush2.msra.mxu0 0.0
      %1561 = vmatprep.subr.mxu0 0.0
      %1562 = vmatpush2.msra.mxu0 0.0
      %1563 = vmatprep.subr.mxu0 0.0
      %1564 = vmatpush2.msra.mxu0 0.0
      %1565 = vmatprep.subr.mxu0 0.0
      %1566 = vmatpush2.msra.mxu0 0.0
      %1567 = vmatprep.subr.mxu0 0.0
      %1568 = vmatpush2.msra.mxu0 0.0
      %1569 = vmatprep.subr.mxu0 0.0
      %1570 = vmatpush2.msra.mxu0 0.0
      %1571 = vmatprep.mubr.f32.mxu0 0.0
      %1572 = vmatmul.mubr.f32.gmra.mxu0 %v1497
      %v1573 = vpop.f32.mrf.mxu0
      %v1574 = vadd.f32 0.0, %v1573
      %v1575 = vpop.f32.mrf.mxu0
      %1576 = vmatprep.mubr.f32.mxu0 0.0
      %1577 = vmatmul.mubr.f32.gmra.mxu0 %v1500
      %v1578 = vpop.f32.mrf.mxu0
      %v1579 = vadd.f32 0.0, %v1578
      %v1580 = vpop.f32.mrf.mxu0
      %1581 = vmatprep.mubr.f32.mxu0 0.0
      %1582 = vmatmul.mubr.f32.gmra.mxu0 %v1503
      %v1583 = vpop.f32.mrf.mxu0
      %v1584 = vadd.f32 0.0, %v1583
      %v1585 = vpop.f32.mrf.mxu0
      %1586 = vdwg.mxu0
      %1590 = vrot.lane.b32.xlu0 %v1574, 48
      %v1591 = vpop.permute.xlu0 %1590
      %1592 = vrot.lane.b32.xlu0 %v1579, 48
      %v1593 = vpop.permute.xlu0 %1592
      %1594 = vrot.lane.b32.xlu0 %v1584, 48
      %v1595 = vpop.permute.xlu0 %1594
      %vm1599 = vcmask 523648
      %1600 = vst.msk [vmem:[#allocation2] sm:$0xff] %vm1599, %v1591
      %1601 = vst.msk [vmem:[#allocation2 + $0x8] sm:$0xff] %vm1599, %v1593
      %vm1602 = vcmask 519552
      %1603 = vst.msk [vmem:[#allocation2 + $0x10] sm:$0xf] %vm1602, %v1595
      %1604 = vrot.lane.b32.xlu0 %v441, 64
      %v1605 = vpop.permute.xlu0 %1604
      %1606 = vrot.lane.b32.xlu0 %v444, 64
      %v1607 = vpop.permute.xlu0 %1606
      %1608 = vrot.lane.b32.xlu0 %v449, 64
      %v1609 = vpop.permute.xlu0 %1608
      %1610 = vrot.lane.b32.xlu0 %v585, 64
      %v1611 = vpop.permute.xlu0 %1610
      %1612 = vrot.lane.b32.xlu0 %v589, 64
      %v1613 = vpop.permute.xlu0 %1612
      %1614 = vrot.lane.b32.xlu0 %v595, 64
      %v1615 = vpop.permute.xlu0 %1614
      %v1616 = vsel %vm601, %v1605, 0
      %v1618 = vsel %vm601, %v1607, 0
      %v1620 = vsel %vm601, %v1609, 0
      %v1622 = vsel %vm601, %v1611, 0
      %v1624 = vsel %vm601, %v1613, 0
      %v1626 = vsel %vm601, %v1615, 0
      %1628 = vmatprep.subr.mxu0 0.0
      %1629 = vmatpush1.xpose.msra.mxu0 0.0
      %1630 = vmatprep.subr.mxu0 0.0
      %1631 = vmatpush1.xpose.msra.mxu0 0.0
      %1632 = vmatprep.subr.mxu0 0.0
      %1633 = vmatpush1.xpose.msra.mxu0 0.0
      %1634 = vmatprep.subr.mxu0 0.0
      %1635 = vmatpush1.xpose.msra.mxu0 0.0
      %1636 = vmatprep.subr.mxu0 0.0
      %1637 = vmatpush1.xpose.msra.mxu0 0.0
      %1638 = vmatprep.subr.mxu0 0.0
      %1639 = vmatpush1.xpose.msra.mxu0 0.0
      %1640 = vmatprep.subr.mxu0 0.0
      %1641 = vmatpush1.xpose.msra.mxu0 0.0
      %1642 = vmatprep.subr.mxu0 0.0
      %1643 = vmatpush1.xpose.msra.mxu0 0.0
      %1644 = vmatprep.subr.mxu0 0.0
      %1645 = vmatpush1.xpose.msra.mxu0 0.0
      %1646 = vmatprep.subr.mxu0 0.0
      %1647 = vmatpush1.xpose.msra.mxu0 0.0
      %1648 = vmatprep.subr.mxu0 0.0
      %1649 = vmatpush1.xpose.msra.mxu0 0.0
      %1650 = vmatprep.subr.mxu0 0.0
      %1651 = vmatpush1.xpose.msra.mxu0 0.0
      %1652 = vmatprep.subr.mxu0 0.0
      %1653 = vmatpush1.xpose.msra.mxu0 0.0
      %1654 = vmatprep.subr.mxu0 0.0
      %1655 = vmatpush1.xpose.msra.mxu0 %v1626
      %1656 = vmatprep.subr.mxu0 0.0
      %1657 = vmatpush1.xpose.msra.mxu0 %v1624
      %1658 = vmatprep.subr.mxu0 0.0
      %1659 = vmatpush1.xpose.msra.mxu0 %v1622
      %1660 = vmatprep.subr.mxu0 0.0
      %1661 = vmatpush2.xpose.msra.mxu0 0.0
      %1662 = vmatprep.subr.mxu0 0.0
      %1663 = vmatpush2.xpose.msra.mxu0 0.0
      %1664 = vmatprep.subr.mxu0 0.0
      %1665 = vmatpush2.xpose.msra.mxu0 0.0
      %1666 = vmatprep.subr.mxu0 0.0
      %1667 = vmatpush2.xpose.msra.mxu0 0.0
      %1668 = vmatprep.subr.mxu0 0.0
      %1669 = vmatpush2.xpose.msra.mxu0 0.0
      %1670 = vmatprep.subr.mxu0 0.0
      %1671 = vmatpush2.xpose.msra.mxu0 0.0
      %1672 = vmatprep.subr.mxu0 0.0
      %1673 = vmatpush2.xpose.msra.mxu0 0.0
      %1674 = vmatprep.subr.mxu0 0.0
      %1675 = vmatpush2.xpose.msra.mxu0 0.0
      %1676 = vmatprep.subr.mxu0 0.0
      %1677 = vmatpush2.xpose.msra.mxu0 0.0
      %1678 = vmatprep.subr.mxu0 0.0
      %1679 = vmatpush2.xpose.msra.mxu0 0.0
      %1680 = vmatprep.subr.mxu0 0.0
      %1681 = vmatpush2.xpose.msra.mxu0 0.0
      %1682 = vmatprep.subr.mxu0 0.0
      %1683 = vmatpush2.xpose.msra.mxu0 0.0
      %1684 = vmatprep.subr.mxu0 0.0
      %1685 = vmatpush2.xpose.msra.mxu0 0.0
      %1686 = vmatprep.subr.mxu0 0.0
      %1687 = vmatpush2.xpose.msra.mxu0 0.0
      %1688 = vmatprep.subr.mxu0 0.0
      %1689 = vmatpush2.xpose.msra.mxu0 0.0
      %1690 = vmatprep.subr.mxu0 0.0
      %1691 = vmatpush2.xpose.msra.mxu0 0.0
      %1692 = vmatprep.mubr.f32.mxu0 0.0
      %1693 = vmatmul.mubr.f32.gmra.mxu0 %v1616
      %v1694 = vpop.f32.mrf.mxu0
      %v1695 = vadd.f32 0.0, %v1694
      %v1696 = vpop.f32.mrf.mxu0
      %1697 = vmatprep.mubr.f32.mxu0 0.0
      %1698 = vmatmul.mubr.f32.gmra.mxu0 %v1618
      %v1699 = vpop.f32.mrf.mxu0
      %v1700 = vadd.f32 0.0, %v1699
      %v1701 = vpop.f32.mrf.mxu0
      %1702 = vmatprep.mubr.f32.mxu0 0.0
      %1703 = vmatmul.mubr.f32.gmra.mxu0 %v1620
      %v1704 = vpop.f32.mrf.mxu0
      %v1705 = vadd.f32 0.0, %v1704
      %v1706 = vpop.f32.mrf.mxu0
      %1707 = vdwg.mxu0
      %v1708 = vmul.f32 %v1695, 0.25
      %v1709 = vmul.f32 %v1700, 0.25
      %v1710 = vmul.f32 %v1705, 0.25
      %v1711 = vsel %vm703, %v1708, -inf
      %1712 = vmax.xlane.f32.xlu0 %v1711
      %v1713 = vpop.xlane.xlu0 %1712
      %v1714 = vsel %vm703, %v1709, -inf
      %1715 = vmax.xlane.f32.xlu0 %v1714
      %v1716 = vpop.xlane.xlu0 %1715
      %v1717 = vsel %vm710, %v1710, -inf
      %1718 = vmax.xlane.f32.xlu0 %v1717
      %v1719 = vpop.xlane.xlu0 %1718
      %v1720 = vsub.f32 %v1708, %v1713
      %v1721 = vsub.f32 %v1709, %v1716
      %v1722 = vsub.f32 %v1710, %v1719
      %v1723 = vmul.f32 %v1720, 1.442695
      %v1724 = vpow.pop %v1723
      %v1725 = vmul.f32 %v1721, 1.442695
      %v1726 = vpow.pop %v1725
      %v1727 = vmul.f32 %v1722, 1.442695
      %v1728 = vpow.pop %v1727
      %v1729 = vsel %vm703, %v1724, 0.0
      %1730 = vadd.xlane.f32.xlu0 %v1729
      %v1731 = vpop.xlane.xlu0 %1730
      %v1732 = vsel %vm703, %v1726, 0.0
      %1733 = vadd.xlane.f32.xlu0 %v1732
      %v1734 = vpop.xlane.xlu0 %1733
      %v1735 = vsel %vm710, %v1728, 0.0
      %1736 = vadd.xlane.f32.xlu0 %v1735
      %v1737 = vpop.xlane.xlu0 %1736
      %v1738 = vrcp.pop %v1731
      %v1739 = vmul.f32 %v1724, %v1738
      %v1740 = vrcp.pop %v1734
      %v1741 = vmul.f32 %v1726, %v1740
      %v1742 = vrcp.pop %v1737
      %v1743 = vmul.f32 %v1728, %v1742
      %1744 = vrot.lane.b32.xlu0 %v587, 64
      %v1745 = vpop.permute.xlu0 %1744
      %1746 = vrot.lane.b32.xlu0 %v591, 64
      %v1747 = vpop.permute.xlu0 %1746
      %1748 = vrot.lane.b32.xlu0 %v597, 64
      %v1749 = vpop.permute.xlu0 %1748
      %v1753 = vsel %vm703, %v1739, 0
      %v1756 = vsel %vm703, %v1741, 0
      %v1759 = vsel %vm703, %v1743, 0
      %v1761 = vsel %vm287, %v1749, 0
      %1763 = vmatprep.subr.mxu0 0.0
      %1764 = vmatpush1.msra.mxu0 0.0
      %1765 = vmatprep.subr.mxu0 0.0
      %1766 = vmatpush1.msra.mxu0 0.0
      %1767 = vmatprep.subr.mxu0 0.0
      %1768 = vmatpush1.msra.mxu0 0.0
      %1769 = vmatprep.subr.mxu0 0.0
      %1770 = vmatpush1.msra.mxu0 0.0
      %1771 = vmatprep.subr.mxu0 0.0
      %1772 = vmatpush1.msra.mxu0 0.0
      %1773 = vmatprep.subr.mxu0 0.0
      %1774 = vmatpush1.msra.mxu0 0.0
      %1775 = vmatprep.subr.mxu0 0.0
      %1776 = vmatpush1.msra.mxu0 0.0
      %1777 = vmatprep.subr.mxu0 0.0
      %1778 = vmatpush1.msra.mxu0 0.0
      %1779 = vmatprep.subr.mxu0 0.0
      %1780 = vmatpush1.msra.mxu0 0.0
      %1781 = vmatprep.subr.mxu0 0.0
      %1782 = vmatpush1.msra.mxu0 0.0
      %1783 = vmatprep.subr.mxu0 0.0
      %1784 = vmatpush1.msra.mxu0 0.0
      %1785 = vmatprep.subr.mxu0 0.0
      %1786 = vmatpush1.msra.mxu0 0.0
      %1787 = vmatprep.subr.mxu0 0.0
      %1788 = vmatpush1.msra.mxu0 0.0
      %1789 = vmatprep.subr.mxu0 0.0
      %1790 = vmatpush1.msra.mxu0 %v1761
      %1791 = vmatprep.subr.mxu0 0.0
      %1792 = vmatpush1.msra.mxu0 %v1747
      %1793 = vmatprep.subr.mxu0 0.0
      %1794 = vmatpush1.msra.mxu0 %v1745
      %1795 = vmatprep.subr.mxu0 0.0
      %1796 = vmatpush2.msra.mxu0 0.0
      %1797 = vmatprep.subr.mxu0 0.0
      %1798 = vmatpush2.msra.mxu0 0.0
      %1799 = vmatprep.subr.mxu0 0.0
      %1800 = vmatpush2.msra.mxu0 0.0
      %1801 = vmatprep.subr.mxu0 0.0
      %1802 = vmatpush2.msra.mxu0 0.0
      %1803 = vmatprep.subr.mxu0 0.0
      %1804 = vmatpush2.msra.mxu0 0.0
      %1805 = vmatprep.subr.mxu0 0.0
      %1806 = vmatpush2.msra.mxu0 0.0
      %1807 = vmatprep.subr.mxu0 0.0
      %1808 = vmatpush2.msra.mxu0 0.0
      %1809 = vmatprep.subr.mxu0 0.0
      %1810 = vmatpush2.msra.mxu0 0.0
      %1811 = vmatprep.subr.mxu0 0.0
      %1812 = vmatpush2.msra.mxu0 0.0
      %1813 = vmatprep.subr.mxu0 0.0
      %1814 = vmatpush2.msra.mxu0 0.0
      %1815 = vmatprep.subr.mxu0 0.0
      %1816 = vmatpush2.msra.mxu0 0.0
      %1817 = vmatprep.subr.mxu0 0.0
      %1818 = vmatpush2.msra.mxu0 0.0
      %1819 = vmatprep.subr.mxu0 0.0
      %1820 = vmatpush2.msra.mxu0 0.0
      %1821 = vmatprep.subr.mxu0 0.0
      %1822 = vmatpush2.msra.mxu0 0.0
      %1823 = vmatprep.subr.mxu0 0.0
      %1824 = vmatpush2.msra.mxu0 0.0
      %1825 = vmatprep.subr.mxu0 0.0
      %1826 = vmatpush2.msra.mxu0 0.0
      %1827 = vmatprep.mubr.f32.mxu0 0.0
      %1828 = vmatmul.mubr.f32.gmra.mxu0 %v1753
      %v1829 = vpop.f32.mrf.mxu0
      %v1830 = vadd.f32 0.0, %v1829
      %v1831 = vpop.f32.mrf.mxu0
      %1832 = vmatprep.mubr.f32.mxu0 0.0
      %1833 = vmatmul.mubr.f32.gmra.mxu0 %v1756
      %v1834 = vpop.f32.mrf.mxu0
      %v1835 = vadd.f32 0.0, %v1834
      %v1836 = vpop.f32.mrf.mxu0
      %1837 = vmatprep.mubr.f32.mxu0 0.0
      %1838 = vmatmul.mubr.f32.gmra.mxu0 %v1759
      %v1839 = vpop.f32.mrf.mxu0
      %v1840 = vadd.f32 0.0, %v1839
      %v1841 = vpop.f32.mrf.mxu0
      %1842 = vdwg.mxu0
      %1846 = vrot.lane.b32.xlu0 %v1830, 64
      %v1847 = vpop.permute.xlu0 %1846
      %1848 = vrot.lane.b32.xlu0 %v1835, 64
      %v1849 = vpop.permute.xlu0 %1848
      %1850 = vrot.lane.b32.xlu0 %v1840, 64
      %v1851 = vpop.permute.xlu0 %1850
      %vm1855 = vcmask 654848
      %1856 = vst.msk [vmem:[#allocation2] sm:$0xff] %vm1855, %v1847
      %1857 = vst.msk [vmem:[#allocation2 + $0x8] sm:$0xff] %vm1855, %v1849
      %vm1858 = vcmask 650752
      %1859 = vst.msk [vmem:[#allocation2 + $0x10] sm:$0xf] %vm1858, %v1851
      %1860 = vrot.lane.b32.xlu0 %v441, 48
      %v1861 = vpop.permute.xlu0 %1860
      %1862 = vrot.lane.b32.xlu0 %v444, 48
      %v1863 = vpop.permute.xlu0 %1862
      %1864 = vrot.lane.b32.xlu0 %v449, 48
      %v1865 = vpop.permute.xlu0 %1864
      %1866 = vrot.lane.b32.xlu0 %v585, 48
      %v1867 = vpop.permute.xlu0 %1866
      %1868 = vrot.lane.b32.xlu0 %v589, 48
      %v1869 = vpop.permute.xlu0 %1868
      %1870 = vrot.lane.b32.xlu0 %v595, 48
      %v1871 = vpop.permute.xlu0 %1870
      %v1872 = vsel %vm601, %v1861, 0
      %v1874 = vsel %vm601, %v1863, 0
      %v1876 = vsel %vm601, %v1865, 0
      %v1878 = vsel %vm601, %v1867, 0
      %v1880 = vsel %vm601, %v1869, 0
      %v1882 = vsel %vm601, %v1871, 0
      %1884 = vmatprep.subr.mxu0 0.0
      %1885 = vmatpush1.xpose.msra.mxu0 0.0
      %1886 = vmatprep.subr.mxu0 0.0
      %1887 = vmatpush1.xpose.msra.mxu0 0.0
      %1888 = vmatprep.subr.mxu0 0.0
      %1889 = vmatpush1.xpose.msra.mxu0 0.0
      %1890 = vmatprep.subr.mxu0 0.0
      %1891 = vmatpush1.xpose.msra.mxu0 0.0
      %1892 = vmatprep.subr.mxu0 0.0
      %1893 = vmatpush1.xpose.msra.mxu0 0.0
      %1894 = vmatprep.subr.mxu0 0.0
      %1895 = vmatpush1.xpose.msra.mxu0 0.0
      %1896 = vmatprep.subr.mxu0 0.0
      %1897 = vmatpush1.xpose.msra.mxu0 0.0
      %1898 = vmatprep.subr.mxu0 0.0
      %1899 = vmatpush1.xpose.msra.mxu0 0.0
      %1900 = vmatprep.subr.mxu0 0.0
      %1901 = vmatpush1.xpose.msra.mxu0 0.0
      %1902 = vmatprep.subr.mxu0 0.0
      %1903 = vmatpush1.xpose.msra.mxu0 0.0
      %1904 = vmatprep.subr.mxu0 0.0
      %1905 = vmatpush1.xpose.msra.mxu0 0.0
      %1906 = vmatprep.subr.mxu0 0.0
      %1907 = vmatpush1.xpose.msra.mxu0 0.0
      %1908 = vmatprep.subr.mxu0 0.0
      %1909 = vmatpush1.xpose.msra.mxu0 0.0
      %1910 = vmatprep.subr.mxu0 0.0
      %1911 = vmatpush1.xpose.msra.mxu0 %v1882
      %1912 = vmatprep.subr.mxu0 0.0
      %1913 = vmatpush1.xpose.msra.mxu0 %v1880
      %1914 = vmatprep.subr.mxu0 0.0
      %1915 = vmatpush1.xpose.msra.mxu0 %v1878
      %1916 = vmatprep.subr.mxu0 0.0
      %1917 = vmatpush2.xpose.msra.mxu0 0.0
      %1918 = vmatprep.subr.mxu0 0.0
      %1919 = vmatpush2.xpose.msra.mxu0 0.0
      %1920 = vmatprep.subr.mxu0 0.0
      %1921 = vmatpush2.xpose.msra.mxu0 0.0
      %1922 = vmatprep.subr.mxu0 0.0
      %1923 = vmatpush2.xpose.msra.mxu0 0.0
      %1924 = vmatprep.subr.mxu0 0.0
      %1925 = vmatpush2.xpose.msra.mxu0 0.0
      %1926 = vmatprep.subr.mxu0 0.0
      %1927 = vmatpush2.xpose.msra.mxu0 0.0
      %1928 = vmatprep.subr.mxu0 0.0
      %1929 = vmatpush2.xpose.msra.mxu0 0.0
      %1930 = vmatprep.subr.mxu0 0.0
      %1931 = vmatpush2.xpose.msra.mxu0 0.0
      %1932 = vmatprep.subr.mxu0 0.0
      %1933 = vmatpush2.xpose.msra.mxu0 0.0
      %1934 = vmatprep.subr.mxu0 0.0
      %1935 = vmatpush2.xpose.msra.mxu0 0.0
      %1936 = vmatprep.subr.mxu0 0.0
      %1937 = vmatpush2.xpose.msra.mxu0 0.0
      %1938 = vmatprep.subr.mxu0 0.0
      %1939 = vmatpush2.xpose.msra.mxu0 0.0
      %1940 = vmatprep.subr.mxu0 0.0
      %1941 = vmatpush2.xpose.msra.mxu0 0.0
      %1942 = vmatprep.subr.mxu0 0.0
      %1943 = vmatpush2.xpose.msra.mxu0 0.0
      %1944 = vmatprep.subr.mxu0 0.0
      %1945 = vmatpush2.xpose.msra.mxu0 0.0
      %1946 = vmatprep.subr.mxu0 0.0
      %1947 = vmatpush2.xpose.msra.mxu0 0.0
      %1948 = vmatprep.mubr.f32.mxu0 0.0
      %1949 = vmatmul.mubr.f32.gmra.mxu0 %v1872
      %v1950 = vpop.f32.mrf.mxu0
      %v1951 = vadd.f32 0.0, %v1950
      %v1952 = vpop.f32.mrf.mxu0
      %1953 = vmatprep.mubr.f32.mxu0 0.0
      %1954 = vmatmul.mubr.f32.gmra.mxu0 %v1874
      %v1955 = vpop.f32.mrf.mxu0
      %v1956 = vadd.f32 0.0, %v1955
      %v1957 = vpop.f32.mrf.mxu0
      %1958 = vmatprep.mubr.f32.mxu0 0.0
      %1959 = vmatmul.mubr.f32.gmra.mxu0 %v1876
      %v1960 = vpop.f32.mrf.mxu0
      %v1961 = vadd.f32 0.0, %v1960
      %v1962 = vpop.f32.mrf.mxu0
      %1963 = vdwg.mxu0
      %v1964 = vmul.f32 %v1951, 0.25
      %v1965 = vmul.f32 %v1956, 0.25
      %v1966 = vmul.f32 %v1961, 0.25
      %v1967 = vsel %vm703, %v1964, -inf
      %1968 = vmax.xlane.f32.xlu0 %v1967
      %v1969 = vpop.xlane.xlu0 %1968
      %v1970 = vsel %vm703, %v1965, -inf
      %1971 = vmax.xlane.f32.xlu0 %v1970
      %v1972 = vpop.xlane.xlu0 %1971
      %v1973 = vsel %vm710, %v1966, -inf
      %1974 = vmax.xlane.f32.xlu0 %v1973
      %v1975 = vpop.xlane.xlu0 %1974
      %v1976 = vsub.f32 %v1964, %v1969
      %v1977 = vsub.f32 %v1965, %v1972
      %v1978 = vsub.f32 %v1966, %v1975
      %v1979 = vmul.f32 %v1976, 1.442695
      %v1980 = vpow.pop %v1979
      %v1981 = vmul.f32 %v1977, 1.442695
      %v1982 = vpow.pop %v1981
      %v1983 = vmul.f32 %v1978, 1.442695
      %v1984 = vpow.pop %v1983
      %v1985 = vsel %vm703, %v1980, 0.0
      %1986 = vadd.xlane.f32.xlu0 %v1985
      %v1987 = vpop.xlane.xlu0 %1986
      %v1988 = vsel %vm703, %v1982, 0.0
      %1989 = vadd.xlane.f32.xlu0 %v1988
      %v1990 = vpop.xlane.xlu0 %1989
      %v1991 = vsel %vm710, %v1984, 0.0
      %1992 = vadd.xlane.f32.xlu0 %v1991
      %v1993 = vpop.xlane.xlu0 %1992
      %v1994 = vrcp.pop %v1987
      %v1995 = vmul.f32 %v1980, %v1994
      %v1996 = vrcp.pop %v1990
      %v1997 = vmul.f32 %v1982, %v1996
      %v1998 = vrcp.pop %v1993
      %v1999 = vmul.f32 %v1984, %v1998
      %2000 = vrot.lane.b32.xlu0 %v587, 48
      %v2001 = vpop.permute.xlu0 %2000
      %2002 = vrot.lane.b32.xlu0 %v591, 48
      %v2003 = vpop.permute.xlu0 %2002
      %2004 = vrot.lane.b32.xlu0 %v597, 48
      %v2005 = vpop.permute.xlu0 %2004
      %v2009 = vsel %vm703, %v1995, 0
      %v2012 = vsel %vm703, %v1997, 0
      %v2015 = vsel %vm703, %v1999, 0
      %v2017 = vsel %vm287, %v2005, 0
      %2019 = vmatprep.subr.mxu0 0.0
      %2020 = vmatpush1.msra.mxu0 0.0
      %2021 = vmatprep.subr.mxu0 0.0
      %2022 = vmatpush1.msra.mxu0 0.0
      %2023 = vmatprep.subr.mxu0 0.0
      %2024 = vmatpush1.msra.mxu0 0.0
      %2025 = vmatprep.subr.mxu0 0.0
      %2026 = vmatpush1.msra.mxu0 0.0
      %2027 = vmatprep.subr.mxu0 0.0
      %2028 = vmatpush1.msra.mxu0 0.0
      %2029 = vmatprep.subr.mxu0 0.0
      %2030 = vmatpush1.msra.mxu0 0.0
      %2031 = vmatprep.subr.mxu0 0.0
      %2032 = vmatpush1.msra.mxu0 0.0
      %2033 = vmatprep.subr.mxu0 0.0
      %2034 = vmatpush1.msra.mxu0 0.0
      %2035 = vmatprep.subr.mxu0 0.0
      %2036 = vmatpush1.msra.mxu0 0.0
      %2037 = vmatprep.subr.mxu0 0.0
      %2038 = vmatpush1.msra.mxu0 0.0
      %2039 = vmatprep.subr.mxu0 0.0
      %2040 = vmatpush1.msra.mxu0 0.0
      %2041 = vmatprep.subr.mxu0 0.0
      %2042 = vmatpush1.msra.mxu0 0.0
      %2043 = vmatprep.subr.mxu0 0.0
      %2044 = vmatpush1.msra.mxu0 0.0
      %2045 = vmatprep.subr.mxu0 0.0
      %2046 = vmatpush1.msra.mxu0 %v2017
      %2047 = vmatprep.subr.mxu0 0.0
      %2048 = vmatpush1.msra.mxu0 %v2003
      %2049 = vmatprep.subr.mxu0 0.0
      %2050 = vmatpush1.msra.mxu0 %v2001
      %2051 = vmatprep.subr.mxu0 0.0
      %2052 = vmatpush2.msra.mxu0 0.0
      %2053 = vmatprep.subr.mxu0 0.0
      %2054 = vmatpush2.msra.mxu0 0.0
      %2055 = vmatprep.subr.mxu0 0.0
      %2056 = vmatpush2.msra.mxu0 0.0
      %2057 = vmatprep.subr.mxu0 0.0
      %2058 = vmatpush2.msra.mxu0 0.0
      %2059 = vmatprep.subr.mxu0 0.0
      %2060 = vmatpush2.msra.mxu0 0.0
      %2061 = vmatprep.subr.mxu0 0.0
      %2062 = vmatpush2.msra.mxu0 0.0
      %2063 = vmatprep.subr.mxu0 0.0
      %2064 = vmatpush2.msra.mxu0 0.0
      %2065 = vmatprep.subr.mxu0 0.0
      %2066 = vmatpush2.msra.mxu0 0.0
      %2067 = vmatprep.subr.mxu0 0.0
      %2068 = vmatpush2.msra.mxu0 0.0
      %2069 = vmatprep.subr.mxu0 0.0
      %2070 = vmatpush2.msra.mxu0 0.0
      %2071 = vmatprep.subr.mxu0 0.0
      %2072 = vmatpush2.msra.mxu0 0.0
      %2073 = vmatprep.subr.mxu0 0.0
      %2074 = vmatpush2.msra.mxu0 0.0
      %2075 = vmatprep.subr.mxu0 0.0
      %2076 = vmatpush2.msra.mxu0 0.0
      %2077 = vmatprep.subr.mxu0 0.0
      %2078 = vmatpush2.msra.mxu0 0.0
      %2079 = vmatprep.subr.mxu0 0.0
      %2080 = vmatpush2.msra.mxu0 0.0
      %2081 = vmatprep.subr.mxu0 0.0
      %2082 = vmatpush2.msra.mxu0 0.0
      %2083 = vmatprep.mubr.f32.mxu0 0.0
      %2084 = vmatmul.mubr.f32.gmra.mxu0 %v2009
      %v2085 = vpop.f32.mrf.mxu0
      %v2086 = vadd.f32 0.0, %v2085
      %v2087 = vpop.f32.mrf.mxu0
      %2088 = vmatprep.mubr.f32.mxu0 0.0
      %2089 = vmatmul.mubr.f32.gmra.mxu0 %v2012
      %v2090 = vpop.f32.mrf.mxu0
      %v2091 = vadd.f32 0.0, %v2090
      %v2092 = vpop.f32.mrf.mxu0
      %2093 = vmatprep.mubr.f32.mxu0 0.0
      %2094 = vmatmul.mubr.f32.gmra.mxu0 %v2015
      %v2095 = vpop.f32.mrf.mxu0
      %v2096 = vadd.f32 0.0, %v2095
      %v2097 = vpop.f32.mrf.mxu0
      %2098 = vdwg.mxu0
      %2102 = vrot.lane.b32.xlu0 %v2086, 80
      %v2103 = vpop.permute.xlu0 %2102
      %2104 = vrot.lane.b32.xlu0 %v2091, 80
      %v2105 = vpop.permute.xlu0 %2104
      %2106 = vrot.lane.b32.xlu0 %v2096, 80
      %v2107 = vpop.permute.xlu0 %2106
      %vm2111 = vcmask 786048
      %2112 = vst.msk [vmem:[#allocation2] sm:$0xff] %vm2111, %v2103
      %2113 = vst.msk [vmem:[#allocation2 + $0x8] sm:$0xff] %vm2111, %v2105
      %vm2114 = vcmask 781952
      %2115 = vst.msk [vmem:[#allocation2 + $0x10] sm:$0xf] %vm2114, %v2107
      %2116 = vrot.lane.b32.xlu0 %v441, 32
      %v2117 = vpop.permute.xlu0 %2116
      %2118 = vrot.lane.b32.xlu0 %v444, 32
      %v2119 = vpop.permute.xlu0 %2118
      %2120 = vrot.lane.b32.xlu0 %v449, 32
      %v2121 = vpop.permute.xlu0 %2120
      %2122 = vrot.lane.b32.xlu0 %v585, 32
      %v2123 = vpop.permute.xlu0 %2122
      %2124 = vrot.lane.b32.xlu0 %v589, 32
      %v2125 = vpop.permute.xlu0 %2124
      %2126 = vrot.lane.b32.xlu0 %v595, 32
      %v2127 = vpop.permute.xlu0 %2126
      %v2128 = vsel %vm601, %v2117, 0
      %v2130 = vsel %vm601, %v2119, 0
      %v2132 = vsel %vm601, %v2121, 0
      %v2134 = vsel %vm601, %v2123, 0
      %v2136 = vsel %vm601, %v2125, 0
      %v2138 = vsel %vm601, %v2127, 0
      %2140 = vmatprep.subr.mxu0 0.0
      %2141 = vmatpush1.xpose.msra.mxu0 0.0
      %2142 = vmatprep.subr.mxu0 0.0
      %2143 = vmatpush1.xpose.msra.mxu0 0.0
      %2144 = vmatprep.subr.mxu0 0.0
      %2145 = vmatpush1.xpose.msra.mxu0 0.0
      %2146 = vmatprep.subr.mxu0 0.0
      %2147 = vmatpush1.xpose.msra.mxu0 0.0
      %2148 = vmatprep.subr.mxu0 0.0
      %2149 = vmatpush1.xpose.msra.mxu0 0.0
      %2150 = vmatprep.subr.mxu0 0.0
      %2151 = vmatpush1.xpose.msra.mxu0 0.0
      %2152 = vmatprep.subr.mxu0 0.0
      %2153 = vmatpush1.xpose.msra.mxu0 0.0
      %2154 = vmatprep.subr.mxu0 0.0
      %2155 = vmatpush1.xpose.msra.mxu0 0.0
      %2156 = vmatprep.subr.mxu0 0.0
      %2157 = vmatpush1.xpose.msra.mxu0 0.0
      %2158 = vmatprep.subr.mxu0 0.0
      %2159 = vmatpush1.xpose.msra.mxu0 0.0
      %2160 = vmatprep.subr.mxu0 0.0
      %2161 = vmatpush1.xpose.msra.mxu0 0.0
      %2162 = vmatprep.subr.mxu0 0.0
      %2163 = vmatpush1.xpose.msra.mxu0 0.0
      %2164 = vmatprep.subr.mxu0 0.0
      %2165 = vmatpush1.xpose.msra.mxu0 0.0
      %2166 = vmatprep.subr.mxu0 0.0
      %2167 = vmatpush1.xpose.msra.mxu0 %v2138
      %2168 = vmatprep.subr.mxu0 0.0
      %2169 = vmatpush1.xpose.msra.mxu0 %v2136
      %2170 = vmatprep.subr.mxu0 0.0
      %2171 = vmatpush1.xpose.msra.mxu0 %v2134
      %2172 = vmatprep.subr.mxu0 0.0
      %2173 = vmatpush2.xpose.msra.mxu0 0.0
      %2174 = vmatprep.subr.mxu0 0.0
      %2175 = vmatpush2.xpose.msra.mxu0 0.0
      %2176 = vmatprep.subr.mxu0 0.0
      %2177 = vmatpush2.xpose.msra.mxu0 0.0
      %2178 = vmatprep.subr.mxu0 0.0
      %2179 = vmatpush2.xpose.msra.mxu0 0.0
      %2180 = vmatprep.subr.mxu0 0.0
      %2181 = vmatpush2.xpose.msra.mxu0 0.0
      %2182 = vmatprep.subr.mxu0 0.0
      %2183 = vmatpush2.xpose.msra.mxu0 0.0
      %2184 = vmatprep.subr.mxu0 0.0
      %2185 = vmatpush2.xpose.msra.mxu0 0.0
      %2186 = vmatprep.subr.mxu0 0.0
      %2187 = vmatpush2.xpose.msra.mxu0 0.0
      %2188 = vmatprep.subr.mxu0 0.0
      %2189 = vmatpush2.xpose.msra.mxu0 0.0
      %2190 = vmatprep.subr.mxu0 0.0
      %2191 = vmatpush2.xpose.msra.mxu0 0.0
      %2192 = vmatprep.subr.mxu0 0.0
      %2193 = vmatpush2.xpose.msra.mxu0 0.0
      %2194 = vmatprep.subr.mxu0 0.0
      %2195 = vmatpush2.xpose.msra.mxu0 0.0
      %2196 = vmatprep.subr.mxu0 0.0
      %2197 = vmatpush2.xpose.msra.mxu0 0.0
      %2198 = vmatprep.subr.mxu0 0.0
      %2199 = vmatpush2.xpose.msra.mxu0 0.0
      %2200 = vmatprep.subr.mxu0 0.0
      %2201 = vmatpush2.xpose.msra.mxu0 0.0
      %2202 = vmatprep.subr.mxu0 0.0
      %2203 = vmatpush2.xpose.msra.mxu0 0.0
      %2204 = vmatprep.mubr.f32.mxu0 0.0
      %2205 = vmatmul.mubr.f32.gmra.mxu0 %v2128
      %v2206 = vpop.f32.mrf.mxu0
      %v2207 = vadd.f32 0.0, %v2206
      %v2208 = vpop.f32.mrf.mxu0
      %2209 = vmatprep.mubr.f32.mxu0 0.0
      %2210 = vmatmul.mubr.f32.gmra.mxu0 %v2130
      %v2211 = vpop.f32.mrf.mxu0
      %v2212 = vadd.f32 0.0, %v2211
      %v2213 = vpop.f32.mrf.mxu0
      %2214 = vmatprep.mubr.f32.mxu0 0.0
      %2215 = vmatmul.mubr.f32.gmra.mxu0 %v2132
      %v2216 = vpop.f32.mrf.mxu0
      %v2217 = vadd.f32 0.0, %v2216
      %v2218 = vpop.f32.mrf.mxu0
      %2219 = vdwg.mxu0
      %v2220 = vmul.f32 %v2207, 0.25
      %v2221 = vmul.f32 %v2212, 0.25
      %v2222 = vmul.f32 %v2217, 0.25
      %v2223 = vsel %vm703, %v2220, -inf
      %2224 = vmax.xlane.f32.xlu0 %v2223
      %v2225 = vpop.xlane.xlu0 %2224
      %v2226 = vsel %vm703, %v2221, -inf
      %2227 = vmax.xlane.f32.xlu0 %v2226
      %v2228 = vpop.xlane.xlu0 %2227
      %v2229 = vsel %vm710, %v2222, -inf
      %2230 = vmax.xlane.f32.xlu0 %v2229
      %v2231 = vpop.xlane.xlu0 %2230
      %v2232 = vsub.f32 %v2220, %v2225
      %v2233 = vsub.f32 %v2221, %v2228
      %v2234 = vsub.f32 %v2222, %v2231
      %v2235 = vmul.f32 %v2232, 1.442695
      %v2236 = vpow.pop %v2235
      %v2237 = vmul.f32 %v2233, 1.442695
      %v2238 = vpow.pop %v2237
      %v2239 = vmul.f32 %v2234, 1.442695
      %v2240 = vpow.pop %v2239
      %v2241 = vsel %vm703, %v2236, 0.0
      %2242 = vadd.xlane.f32.xlu0 %v2241
      %v2243 = vpop.xlane.xlu0 %2242
      %v2244 = vsel %vm703, %v2238, 0.0
      %2245 = vadd.xlane.f32.xlu0 %v2244
      %v2246 = vpop.xlane.xlu0 %2245
      %v2247 = vsel %vm710, %v2240, 0.0
      %2248 = vadd.xlane.f32.xlu0 %v2247
      %v2249 = vpop.xlane.xlu0 %2248
      %v2250 = vrcp.pop %v2243
      %v2251 = vmul.f32 %v2236, %v2250
      %v2252 = vrcp.pop %v2246
      %v2253 = vmul.f32 %v2238, %v2252
      %v2254 = vrcp.pop %v2249
      %v2255 = vmul.f32 %v2240, %v2254
      %2256 = vrot.lane.b32.xlu0 %v587, 32
      %v2257 = vpop.permute.xlu0 %2256
      %2258 = vrot.lane.b32.xlu0 %v591, 32
      %v2259 = vpop.permute.xlu0 %2258
      %2260 = vrot.lane.b32.xlu0 %v597, 32
      %v2261 = vpop.permute.xlu0 %2260
      %v2265 = vsel %vm703, %v2251, 0
      %v2268 = vsel %vm703, %v2253, 0
      %v2271 = vsel %vm703, %v2255, 0
      %v2273 = vsel %vm287, %v2261, 0
      %2275 = vmatprep.subr.mxu0 0.0
      %2276 = vmatpush1.msra.mxu0 0.0
      %2277 = vmatprep.subr.mxu0 0.0
      %2278 = vmatpush1.msra.mxu0 0.0
      %2279 = vmatprep.subr.mxu0 0.0
      %2280 = vmatpush1.msra.mxu0 0.0
      %2281 = vmatprep.subr.mxu0 0.0
      %2282 = vmatpush1.msra.mxu0 0.0
      %2283 = vmatprep.subr.mxu0 0.0
      %2284 = vmatpush1.msra.mxu0 0.0
      %2285 = vmatprep.subr.mxu0 0.0
      %2286 = vmatpush1.msra.mxu0 0.0
      %2287 = vmatprep.subr.mxu0 0.0
      %2288 = vmatpush1.msra.mxu0 0.0
      %2289 = vmatprep.subr.mxu0 0.0
      %2290 = vmatpush1.msra.mxu0 0.0
      %2291 = vmatprep.subr.mxu0 0.0
      %2292 = vmatpush1.msra.mxu0 0.0
      %2293 = vmatprep.subr.mxu0 0.0
      %2294 = vmatpush1.msra.mxu0 0.0
      %2295 = vmatprep.subr.mxu0 0.0
      %2296 = vmatpush1.msra.mxu0 0.0
      %2297 = vmatprep.subr.mxu0 0.0
      %2298 = vmatpush1.msra.mxu0 0.0
      %2299 = vmatprep.subr.mxu0 0.0
      %2300 = vmatpush1.msra.mxu0 0.0
      %2301 = vmatprep.subr.mxu0 0.0
      %2302 = vmatpush1.msra.mxu0 %v2273
      %2303 = vmatprep.subr.mxu0 0.0
      %2304 = vmatpush1.msra.mxu0 %v2259
      %2305 = vmatprep.subr.mxu0 0.0
      %2306 = vmatpush1.msra.mxu0 %v2257
      %2307 = vmatprep.subr.mxu0 0.0
      %2308 = vmatpush2.msra.mxu0 0.0
      %2309 = vmatprep.subr.mxu0 0.0
      %2310 = vmatpush2.msra.mxu0 0.0
      %2311 = vmatprep.subr.mxu0 0.0
      %2312 = vmatpush2.msra.mxu0 0.0
      %2313 = vmatprep.subr.mxu0 0.0
      %2314 = vmatpush2.msra.mxu0 0.0
      %2315 = vmatprep.subr.mxu0 0.0
      %2316 = vmatpush2.msra.mxu0 0.0
      %2317 = vmatprep.subr.mxu0 0.0
      %2318 = vmatpush2.msra.mxu0 0.0
      %2319 = vmatprep.subr.mxu0 0.0
      %2320 = vmatpush2.msra.mxu0 0.0
      %2321 = vmatprep.subr.mxu0 0.0
      %2322 = vmatpush2.msra.mxu0 0.0
      %2323 = vmatprep.subr.mxu0 0.0
      %2324 = vmatpush2.msra.mxu0 0.0
      %2325 = vmatprep.subr.mxu0 0.0
      %2326 = vmatpush2.msra.mxu0 0.0
      %2327 = vmatprep.subr.mxu0 0.0
      %2328 = vmatpush2.msra.mxu0 0.0
      %2329 = vmatprep.subr.mxu0 0.0
      %2330 = vmatpush2.msra.mxu0 0.0
      %2331 = vmatprep.subr.mxu0 0.0
      %2332 = vmatpush2.msra.mxu0 0.0
      %2333 = vmatprep.subr.mxu0 0.0
      %2334 = vmatpush2.msra.mxu0 0.0
      %2335 = vmatprep.subr.mxu0 0.0
      %2336 = vmatpush2.msra.mxu0 0.0
      %2337 = vmatprep.subr.mxu0 0.0
      %2338 = vmatpush2.msra.mxu0 0.0
      %2339 = vmatprep.mubr.f32.mxu0 0.0
      %2340 = vmatmul.mubr.f32.gmra.mxu0 %v2265
      %v2341 = vpop.f32.mrf.mxu0
      %v2342 = vadd.f32 0.0, %v2341
      %v2343 = vpop.f32.mrf.mxu0
      %2344 = vmatprep.mubr.f32.mxu0 0.0
      %2345 = vmatmul.mubr.f32.gmra.mxu0 %v2268
      %v2346 = vpop.f32.mrf.mxu0
      %v2347 = vadd.f32 0.0, %v2346
      %v2348 = vpop.f32.mrf.mxu0
      %2349 = vmatprep.mubr.f32.mxu0 0.0
      %2350 = vmatmul.mubr.f32.gmra.mxu0 %v2271
      %v2351 = vpop.f32.mrf.mxu0
      %v2352 = vadd.f32 0.0, %v2351
      %v2353 = vpop.f32.mrf.mxu0
      %2354 = vdwg.mxu0
      %2358 = vrot.lane.b32.xlu0 %v2342, 96
      %v2359 = vpop.permute.xlu0 %2358
      %2360 = vrot.lane.b32.xlu0 %v2347, 96
      %v2361 = vpop.permute.xlu0 %2360
      %2362 = vrot.lane.b32.xlu0 %v2352, 96
      %v2363 = vpop.permute.xlu0 %2362
      %vm2367 = vcmask 917248
      %2368 = vst.msk [vmem:[#allocation2] sm:$0xff] %vm2367, %v2359
      %2369 = vst.msk [vmem:[#allocation2 + $0x8] sm:$0xff] %vm2367, %v2361
      %vm2370 = vcmask 913152
      %2371 = vst.msk [vmem:[#allocation2 + $0x10] sm:$0xf] %vm2370, %v2363
      %2372 = vrot.lane.b32.xlu0 %v441, 16
      %v2373 = vpop.permute.xlu0 %2372
      %2374 = vrot.lane.b32.xlu0 %v444, 16
      %v2375 = vpop.permute.xlu0 %2374
      %2376 = vrot.lane.b32.xlu0 %v449, 16
      %v2377 = vpop.permute.xlu0 %2376
      %2378 = vrot.lane.b32.xlu0 %v585, 16
      %v2379 = vpop.permute.xlu0 %2378
      %2380 = vrot.lane.b32.xlu0 %v589, 16
      %v2381 = vpop.permute.xlu0 %2380
      %2382 = vrot.lane.b32.xlu0 %v595, 16
      %v2383 = vpop.permute.xlu0 %2382
      %v2384 = vsel %vm601, %v2373, 0
      %v2386 = vsel %vm601, %v2375, 0
      %v2388 = vsel %vm601, %v2377, 0
      %v2390 = vsel %vm601, %v2379, 0
      %v2392 = vsel %vm601, %v2381, 0
      %v2394 = vsel %vm601, %v2383, 0
      %2396 = vmatprep.subr.mxu0 0.0
      %2397 = vmatpush1.xpose.msra.mxu0 0.0
      %2398 = vmatprep.subr.mxu0 0.0
      %2399 = vmatpush1.xpose.msra.mxu0 0.0
      %2400 = vmatprep.subr.mxu0 0.0
      %2401 = vmatpush1.xpose.msra.mxu0 0.0
      %2402 = vmatprep.subr.mxu0 0.0
      %2403 = vmatpush1.xpose.msra.mxu0 0.0
      %2404 = vmatprep.subr.mxu0 0.0
      %2405 = vmatpush1.xpose.msra.mxu0 0.0
      %2406 = vmatprep.subr.mxu0 0.0
      %2407 = vmatpush1.xpose.msra.mxu0 0.0
      %2408 = vmatprep.subr.mxu0 0.0
      %2409 = vmatpush1.xpose.msra.mxu0 0.0
      %2410 = vmatprep.subr.mxu0 0.0
      %2411 = vmatpush1.xpose.msra.mxu0 0.0
      %2412 = vmatprep.subr.mxu0 0.0
      %2413 = vmatpush1.xpose.msra.mxu0 0.0
      %2414 = vmatprep.subr.mxu0 0.0
      %2415 = vmatpush1.xpose.msra.mxu0 0.0
      %2416 = vmatprep.subr.mxu0 0.0
      %2417 = vmatpush1.xpose.msra.mxu0 0.0
      %2418 = vmatprep.subr.mxu0 0.0
      %2419 = vmatpush1.xpose.msra.mxu0 0.0
      %2420 = vmatprep.subr.mxu0 0.0
      %2421 = vmatpush1.xpose.msra.mxu0 0.0
      %2422 = vmatprep.subr.mxu0 0.0
      %2423 = vmatpush1.xpose.msra.mxu0 %v2394
      %2424 = vmatprep.subr.mxu0 0.0
      %2425 = vmatpush1.xpose.msra.mxu0 %v2392
      %2426 = vmatprep.subr.mxu0 0.0
      %2427 = vmatpush1.xpose.msra.mxu0 %v2390
      %2428 = vmatprep.subr.mxu0 0.0
      %2429 = vmatpush2.xpose.msra.mxu0 0.0
      %2430 = vmatprep.subr.mxu0 0.0
      %2431 = vmatpush2.xpose.msra.mxu0 0.0
      %2432 = vmatprep.subr.mxu0 0.0
      %2433 = vmatpush2.xpose.msra.mxu0 0.0
      %2434 = vmatprep.subr.mxu0 0.0
      %2435 = vmatpush2.xpose.msra.mxu0 0.0
      %2436 = vmatprep.subr.mxu0 0.0
      %2437 = vmatpush2.xpose.msra.mxu0 0.0
      %2438 = vmatprep.subr.mxu0 0.0
      %2439 = vmatpush2.xpose.msra.mxu0 0.0
      %2440 = vmatprep.subr.mxu0 0.0
      %2441 = vmatpush2.xpose.msra.mxu0 0.0
      %2442 = vmatprep.subr.mxu0 0.0
      %2443 = vmatpush2.xpose.msra.mxu0 0.0
      %2444 = vmatprep.subr.mxu0 0.0
      %2445 = vmatpush2.xpose.msra.mxu0 0.0
      %2446 = vmatprep.subr.mxu0 0.0
      %2447 = vmatpush2.xpose.msra.mxu0 0.0
      %2448 = vmatprep.subr.mxu0 0.0
      %2449 = vmatpush2.xpose.msra.mxu0 0.0
      %2450 = vmatprep.subr.mxu0 0.0
      %2451 = vmatpush2.xpose.msra.mxu0 0.0
      %2452 = vmatprep.subr.mxu0 0.0
      %2453 = vmatpush2.xpose.msra.mxu0 0.0
      %2454 = vmatprep.subr.mxu0 0.0
      %2455 = vmatpush2.xpose.msra.mxu0 0.0
      %2456 = vmatprep.subr.mxu0 0.0
      %2457 = vmatpush2.xpose.msra.mxu0 0.0
      %2458 = vmatprep.subr.mxu0 0.0
      %2459 = vmatpush2.xpose.msra.mxu0 0.0
      %2460 = vmatprep.mubr.f32.mxu0 0.0
      %2461 = vmatmul.mubr.f32.gmra.mxu0 %v2384
      %v2462 = vpop.f32.mrf.mxu0
      %v2463 = vadd.f32 0.0, %v2462
      %v2464 = vpop.f32.mrf.mxu0
      %2465 = vmatprep.mubr.f32.mxu0 0.0
      %2466 = vmatmul.mubr.f32.gmra.mxu0 %v2386
      %v2467 = vpop.f32.mrf.mxu0
      %v2468 = vadd.f32 0.0, %v2467
      %v2469 = vpop.f32.mrf.mxu0
      %2470 = vmatprep.mubr.f32.mxu0 0.0
      %2471 = vmatmul.mubr.f32.gmra.mxu0 %v2388
      %v2472 = vpop.f32.mrf.mxu0
      %v2473 = vadd.f32 0.0, %v2472
      %v2474 = vpop.f32.mrf.mxu0
      %2475 = vdwg.mxu0
      %v2476 = vmul.f32 %v2463, 0.25
      %v2477 = vmul.f32 %v2468, 0.25
      %v2478 = vmul.f32 %v2473, 0.25
      %v2479 = vsel %vm703, %v2476, -inf
      %2480 = vmax.xlane.f32.xlu0 %v2479
      %v2481 = vpop.xlane.xlu0 %2480
      %v2482 = vsel %vm703, %v2477, -inf
      %2483 = vmax.xlane.f32.xlu0 %v2482
      %v2484 = vpop.xlane.xlu0 %2483
      %v2485 = vsel %vm710, %v2478, -inf
      %2486 = vmax.xlane.f32.xlu0 %v2485
      %v2487 = vpop.xlane.xlu0 %2486
      %v2488 = vsub.f32 %v2476, %v2481
      %v2489 = vsub.f32 %v2477, %v2484
      %v2490 = vsub.f32 %v2478, %v2487
      %v2491 = vmul.f32 %v2488, 1.442695
      %v2492 = vpow.pop %v2491
      %v2493 = vmul.f32 %v2489, 1.442695
      %v2494 = vpow.pop %v2493
      %v2495 = vmul.f32 %v2490, 1.442695
      %v2496 = vpow.pop %v2495
      %v2497 = vsel %vm703, %v2492, 0.0
      %2498 = vadd.xlane.f32.xlu0 %v2497
      %v2499 = vpop.xlane.xlu0 %2498
      %v2500 = vsel %vm703, %v2494, 0.0
      %2501 = vadd.xlane.f32.xlu0 %v2500
      %v2502 = vpop.xlane.xlu0 %2501
      %v2503 = vsel %vm710, %v2496, 0.0
      %2504 = vadd.xlane.f32.xlu0 %v2503
      %v2505 = vpop.xlane.xlu0 %2504
      %v2506 = vrcp.pop %v2499
      %v2507 = vmul.f32 %v2492, %v2506
      %v2508 = vrcp.pop %v2502
      %v2509 = vmul.f32 %v2494, %v2508
      %v2510 = vrcp.pop %v2505
      %v2511 = vmul.f32 %v2496, %v2510
      %2512 = vrot.lane.b32.xlu0 %v587, 16
      %v2513 = vpop.permute.xlu0 %2512
      %2514 = vrot.lane.b32.xlu0 %v591, 16
      %v2515 = vpop.permute.xlu0 %2514
      %2516 = vrot.lane.b32.xlu0 %v597, 16
      %v2517 = vpop.permute.xlu0 %2516
      %v2521 = vsel %vm703, %v2507, 0
      %v2524 = vsel %vm703, %v2509, 0
      %v2527 = vsel %vm703, %v2511, 0
      %v2529 = vsel %vm287, %v2517, 0
      %2531 = vmatprep.subr.mxu0 0.0
      %2532 = vmatpush1.msra.mxu0 0.0
      %2533 = vmatprep.subr.mxu0 0.0
      %2534 = vmatpush1.msra.mxu0 0.0
      %2535 = vmatprep.subr.mxu0 0.0
      %2536 = vmatpush1.msra.mxu0 0.0
      %2537 = vmatprep.subr.mxu0 0.0
      %2538 = vmatpush1.msra.mxu0 0.0
      %2539 = vmatprep.subr.mxu0 0.0
      %2540 = vmatpush1.msra.mxu0 0.0
      %2541 = vmatprep.subr.mxu0 0.0
      %2542 = vmatpush1.msra.mxu0 0.0
      %2543 = vmatprep.subr.mxu0 0.0
      %2544 = vmatpush1.msra.mxu0 0.0
      %2545 = vmatprep.subr.mxu0 0.0
      %2546 = vmatpush1.msra.mxu0 0.0
      %2547 = vmatprep.subr.mxu0 0.0
      %2548 = vmatpush1.msra.mxu0 0.0
      %2549 = vmatprep.subr.mxu0 0.0
      %2550 = vmatpush1.msra.mxu0 0.0
      %2551 = vmatprep.subr.mxu0 0.0
      %2552 = vmatpush1.msra.mxu0 0.0
      %2553 = vmatprep.subr.mxu0 0.0
      %2554 = vmatpush1.msra.mxu0 0.0
      %2555 = vmatprep.subr.mxu0 0.0
      %2556 = vmatpush1.msra.mxu0 0.0
      %2557 = vmatprep.subr.mxu0 0.0
      %2558 = vmatpush1.msra.mxu0 %v2529
      %2559 = vmatprep.subr.mxu0 0.0
      %2560 = vmatpush1.msra.mxu0 %v2515
      %2561 = vmatprep.subr.mxu0 0.0
      %2562 = vmatpush1.msra.mxu0 %v2513
      %2563 = vmatprep.subr.mxu0 0.0
      %2564 = vmatpush2.msra.mxu0 0.0
      %2565 = vmatprep.subr.mxu0 0.0
      %2566 = vmatpush2.msra.mxu0 0.0
      %2567 = vmatprep.subr.mxu0 0.0
      %2568 = vmatpush2.msra.mxu0 0.0
      %2569 = vmatprep.subr.mxu0 0.0
      %2570 = vmatpush2.msra.mxu0 0.0
      %2571 = vmatprep.subr.mxu0 0.0
      %2572 = vmatpush2.msra.mxu0 0.0
      %2573 = vmatprep.subr.mxu0 0.0
      %2574 = vmatpush2.msra.mxu0 0.0
      %2575 = vmatprep.subr.mxu0 0.0
      %2576 = vmatpush2.msra.mxu0 0.0
      %2577 = vmatprep.subr.mxu0 0.0
      %2578 = vmatpush2.msra.mxu0 0.0
      %2579 = vmatprep.subr.mxu0 0.0
      %2580 = vmatpush2.msra.mxu0 0.0
      %2581 = vmatprep.subr.mxu0 0.0
      %2582 = vmatpush2.msra.mxu0 0.0
      %2583 = vmatprep.subr.mxu0 0.0
      %2584 = vmatpush2.msra.mxu0 0.0
      %2585 = vmatprep.subr.mxu0 0.0
      %2586 = vmatpush2.msra.mxu0 0.0
      %2587 = vmatprep.subr.mxu0 0.0
      %2588 = vmatpush2.msra.mxu0 0.0
      %2589 = vmatprep.subr.mxu0 0.0
      %2590 = vmatpush2.msra.mxu0 0.0
      %2591 = vmatprep.subr.mxu0 0.0
      %2592 = vmatpush2.msra.mxu0 0.0
      %2593 = vmatprep.subr.mxu0 0.0
      %2594 = vmatpush2.msra.mxu0 0.0
      %2595 = vmatprep.mubr.f32.mxu0 0.0
      %2596 = vmatmul.mubr.f32.gmra.mxu0 %v2521
      %v2597 = vpop.f32.mrf.mxu0
      %v2598 = vadd.f32 0.0, %v2597
      %v2599 = vpop.f32.mrf.mxu0
      %2600 = vmatprep.mubr.f32.mxu0 0.0
      %2601 = vmatmul.mubr.f32.gmra.mxu0 %v2524
      %v2602 = vpop.f32.mrf.mxu0
      %v2603 = vadd.f32 0.0, %v2602
      %v2604 = vpop.f32.mrf.mxu0
      %2605 = vmatprep.mubr.f32.mxu0 0.0
      %2606 = vmatmul.mubr.f32.gmra.mxu0 %v2527
      %v2607 = vpop.f32.mrf.mxu0
      %v2608 = vadd.f32 0.0, %v2607
      %v2609 = vpop.f32.mrf.mxu0
      %2610 = vdwg.mxu0
      %2614 = vrot.lane.b32.xlu0 %v2598, 112
      %v2615 = vpop.permute.xlu0 %2614
      %2616 = vrot.lane.b32.xlu0 %v2603, 112
      %v2617 = vpop.permute.xlu0 %2616
      %2618 = vrot.lane.b32.xlu0 %v2608, 112
      %v2619 = vpop.permute.xlu0 %2618
      %vm2623 = vcmask 1048448
      %2624 = vst.msk [vmem:[#allocation2] sm:$0xff] %vm2623, %v2615
      %2625 = vst.msk [vmem:[#allocation2 + $0x8] sm:$0xff] %vm2623, %v2617
      %vm2626 = vcmask 1044352
      %2627 = vst.msk [vmem:[#allocation2 + $0x10] sm:$0xf] %vm2626, %v2619
      %v2628 = vld [vmem:[#allocation2] sm:$0xff]
      %v2629 = vld [vmem:[#allocation2 + $0x8] sm:$0xff]
      %v2630 = vld [vmem:[#allocation2 + $0x10] sm:$0xf]
      %v2631 = vpack.c.bf16 %v2629, %v2628
      %v2632 = vpack.c.bf16 %v2630, %v2630
      %v2633 = vld [vmem:[%s5] sm:$0xf]
      %v2634 = vld [vmem:[%s5 + $0x4] sm:$0xf]
      %v2635 = vld [vmem:[%s5 + $0x8] sm:$0xf]
      %v2636 = vld [vmem:[%s5 + $0xc] sm:$0xf]
      %v2637 = vld [vmem:[%s5 + $0x10] sm:$0xf]
      %v2638 = vld [vmem:[%s5 + $0x14] sm:$0xf]
      %v2639 = vld [vmem:[%s5 + $0x18] sm:$0xf]
      %v2640 = vld [vmem:[%s5 + $0x1c] sm:$0xf]
      %v2641 = vld [vmem:[%s5 + $0x20] sm:$0xf]
      %v2642 = vld [vmem:[%s5 + $0x24] sm:$0xf]
      %v2643 = vld [vmem:[%s5 + $0x28] sm:$0xf]
      %v2644 = vld [vmem:[%s5 + $0x2c] sm:$0xf]
      %v2645 = vld [vmem:[%s5 + $0x30] sm:$0xf]
      %v2646 = vld [vmem:[%s5 + $0x34] sm:$0xf]
      %v2647 = vld [vmem:[%s5 + $0x38] sm:$0xf]
      %v2648 = vld [vmem:[%s5 + $0x3c] sm:$0xf]
      %v2649 = vld [vmem:[%s6] sm:$0x1]
      %v2651 = vlaneseq
      %v2652 = vshrl.u32 %v2651, 7
      %v2653 = vsub.s32 0, %v2652
      %v2654 = vrot.slane %v2649, %v2653
      %v2672 = vunpack.c.l.b16 %v2633
      %v2673 = vunpack.c.l.b16 %v2634
      %v2674 = vunpack.c.l.b16 %v2635
      %v2675 = vunpack.c.l.b16 %v2636
      %v2676 = vunpack.c.l.b16 %v2637
      %v2677 = vunpack.c.l.b16 %v2638
      %v2678 = vunpack.c.l.b16 %v2639
      %v2679 = vunpack.c.l.b16 %v2640
      %v2680 = vunpack.c.l.b16 %v2641
      %v2681 = vunpack.c.l.b16 %v2642
      %v2682 = vunpack.c.l.b16 %v2643
      %v2683 = vunpack.c.l.b16 %v2644
      %v2684 = vunpack.c.l.b16 %v2645
      %v2685 = vunpack.c.l.b16 %v2646
      %v2686 = vunpack.c.l.b16 %v2647
      %v2687 = vunpack.c.l.b16 %v2648
      %v2688 = vpack.c.b16 %v2673, %v2672
      %v2689 = vpack.c.b16 %v2675, %v2674
      %v2690 = vpack.c.b16 %v2677, %v2676
      %v2691 = vpack.c.b16 %v2679, %v2678
      %v2692 = vpack.c.b16 %v2681, %v2680
      %v2693 = vpack.c.b16 %v2683, %v2682
      %v2694 = vpack.c.b16 %v2685, %v2684
      %v2695 = vpack.c.b16 %v2687, %v2686
      %2704 = vmatprep.subr.bf16.mxu0 0
      %2705 = vmatpush1.bf16.msra.mxu0 %v2695
      %2706 = vmatprep.subr.bf16.mxu0 0
      %2707 = vmatpush1.bf16.msra.mxu0 %v2694
      %2708 = vmatprep.subr.bf16.mxu0 0
      %2709 = vmatpush1.bf16.msra.mxu0 %v2693
      %2710 = vmatprep.subr.bf16.mxu0 0
      %2711 = vmatpush1.bf16.msra.mxu0 %v2692
      %2712 = vmatprep.subr.bf16.mxu0 0
      %2713 = vmatpush1.bf16.msra.mxu0 %v2691
      %2714 = vmatprep.subr.bf16.mxu0 0
      %2715 = vmatpush1.bf16.msra.mxu0 %v2690
      %2716 = vmatprep.subr.bf16.mxu0 0
      %2717 = vmatpush1.bf16.msra.mxu0 %v2689
      %2718 = vmatprep.subr.bf16.mxu0 0
      %2719 = vmatpush1.bf16.msra.mxu0 %v2688
      %2720 = vmatprep.subr.bf16.mxu0 0
      %2721 = vmatpush2.bf16.msra.mxu0 0
      %2722 = vmatprep.subr.bf16.mxu0 0
      %2723 = vmatpush2.bf16.msra.mxu0 0
      %2724 = vmatprep.subr.bf16.mxu0 0
      %2725 = vmatpush2.bf16.msra.mxu0 0
      %2726 = vmatprep.subr.bf16.mxu0 0
      %2727 = vmatpush2.bf16.msra.mxu0 0
      %2728 = vmatprep.subr.bf16.mxu0 0
      %2729 = vmatpush2.bf16.msra.mxu0 0
      %2730 = vmatprep.subr.bf16.mxu0 0
      %2731 = vmatpush2.bf16.msra.mxu0 0
      %2732 = vmatprep.subr.bf16.mxu0 0
      %2733 = vmatpush2.bf16.msra.mxu0 0
      %2734 = vmatprep.subr.bf16.mxu0 0
      %2735 = vmatpush2.bf16.msra.mxu0 0
      %2736 = vmatprep.mubr.bf16.mxu0 0
      %2737 = vmatmul.mubr.bf16.gmra.mxu0 %v2631
      %v2738 = vpop.f32.mrf.mxu0
      %v2739 = vadd.f32 %v2654, %v2738
      %v2740 = vpop.f32.mrf.mxu0
      %v2741 = vpop.f32.mrf.mxu0
      %v2742 = vadd.f32 %v2654, %v2741
      %v2743 = vpop.f32.mrf.mxu0
      %2744 = vmatprep.mubr.bf16.mxu0 0
      %2745 = vmatmul.mubr.bf16.gmra.mxu0 %v2632
      %v2746 = vpop.f32.mrf.mxu0
      %v2747 = vadd.f32 %v2654, %v2746
      %v2748 = vpop.f32.mrf.mxu0
      %v2749 = vpop.f32.mrf.mxu0
      %v2750 = vpop.f32.mrf.mxu0
      %2751 = vdwg.mxu0
      %v2752 = vadd.f32 %v280, %v2739
      %v2753 = vadd.f32 %v281, %v2742
      %v2754 = vadd.f32 %v282, %v2747
      %2755 = vst [vmem:[%s278] sm:$0xff] %v2752
      %2756 = vst [vmem:[%s278 + $0x8] sm:$0xff] %v2753
      %2757 = vst [vmem:[%s278 + $0x10] sm:$0xf] %v2754
      %p2758 = scmp.lt.s32.totalorder %s18, 1
      %s2759 = scalar_select %p2758, %s18, 1
      %s2760 = smul.addr %s2759, 3
      %s2761 = smul.addr %s2760, 8
      %s2762 = scalar_lea.vmem %s7, %s2761
      // Predicated region
      $region49: #{transformer_mapper_pallas.6} parent=47 // pred_check
        %p2763 = pneg %p188
      $region50: #{transformer_mapper_pallas.6} parent=47 // pred_check_branch
        %2765 = sbr.rel (%p2763) target = $region52
      $region51: #{transformer_mapper_pallas.6} parent=47 // pred_region
        _
      $region52: #{transformer_mapper_pallas.6} parent=47 // pred_fallthru
        _
    $region48: #{transformer_mapper_pallas.6} parent=5 // pred_fallthru
      _
    %p2766 = scmp.le.s32.totalorder 2, %s13
    // Predicated region
    $region53: #{transformer_mapper_pallas.6} parent=5 // pred_check
      %p2767 = pneg %p2766
    $region54: #{transformer_mapper_pallas.6} parent=5 // pred_check_branch
      %2769 = sbr.rel (%p2767) target = $region56
    $region55: #{transformer_mapper_pallas.6} parent=5 // pred_region
      %s2770 = ssub.s32 %s13, 2
      // Predicated region
      $region57: #{transformer_mapper_pallas.6} parent=55 // pred_check
        %p2771 = pneg %p194
      $region58: #{transformer_mapper_pallas.6} parent=55 // pred_check_branch
        %2773 = sbr.rel (%p2771) target = $region60
      $region59: #{transformer_mapper_pallas.6} parent=55 // pred_region
        %p2774 = scmp.lt.s32.totalorder %s19, 1
        %s2775 = scalar_select %p2774, %s19, 1
        %s2776 = smul.addr %s2775, 3
        %s2777 = smul.addr %s2776, 8
        %s2778 = scalar_lea.vmem %s7, %s2777
      $region60: #{transformer_mapper_pallas.6} parent=55 // pred_fallthru
        _
    $region56: #{transformer_mapper_pallas.6} parent=5 // pred_fallthru
      _
  $region6: #{transformer_mapper_pallas.6} parent=0 // loop_footer
    %s17 = sadd.s32 1, %s13
  $region7: #{transformer_mapper_pallas.6} parent=0 // loop_footer_branch
    %12 = sbr.rel target = $region3
  $region8: #{transformer_mapper_pallas.6} parent=0 // loop_exit
    _

// kernel: transformer_mapper_pallas.5
$region0: #{transformer_mapper_pallas.5}
  #allocation0 [shape = 'u32[]', space=smem, size = 0x4, offset = 0x4, fixed_abs, tag = 'smem constant byte address 0x4 - core index']
  #allocation1 [shape = 'u32[144,128]{1,0:T(1,128)}', space=vmem, size = 0x12000, scoped, tag = 'internal scratch']
  %s0 = inlined_call_operand.hbm [shape: f32[2,512], index: 0, kind: input, shape index: {}]
  %s1 = inlined_call_operand.hbm [shape: bf16[512,1280], index: 1, kind: input, shape index: {}]
  %s2 = inlined_call_operand.hbm [shape: f32[1,1280], index: 2, kind: input, shape index: {}]
  %s3 = inlined_call_operand.vmem [shape: f32[2,1280], index: 3, kind: output, shape index: {}]
  %s4 = sld [smem:[#allocation0]]
  $region34: #{transformer_mapper_pallas.5} parent=0
    _
  %s6 = ssub.s32 1, %s4
  %s7 = scalar_select 0, %s6, %s4
  $region1: #{transformer_mapper_pallas.5} parent=0
    #allocation2 [shape = 'u8[4096]{0}', space=vmem, size = 0x1000, scoped, tag = 'input window, operand 0, single buffered']
    #allocation3 [shape = 's32[1]{0}', space=sflag, size = 0x4, scoped, tag = 'scoped memory for transformer_mapper_pallas.5']
    #allocation4 [shape = 'u8[1310720]{0}', space=vmem, size = 0x140000, scoped, tag = 'input window, operand 1, single buffered']
    #allocation5 [shape = 's32[1]{0}', space=sflag, size = 0x4, scoped, tag = 'scoped memory for transformer_mapper_pallas.5']
    #allocation6 [shape = 'u8[5120]{0}', space=vmem, size = 0x1400, scoped, tag = 'input window, operand 2, single buffered']
    %8 = vsyncpa [#allocation3], 0
    %9 = vsyncpa [#allocation5], 0
    // Predicated region
    $region2: #{transformer_mapper_pallas.5} parent=1 // pred_check
      _
    $region3: #{transformer_mapper_pallas.5} parent=1 // pred_check_branch
      %11 = sbr.rel (0) target = $region5
    $region4: #{transformer_mapper_pallas.5} parent=1 // pred_region
      %s13 = ssub.s32 128, 128
      %14 = vsyncadd [#allocation3], %s13
      %s16 = sshll.u32 [#allocation2], 4
      %s17 = int_to_ptr.vmem [resolvable:$true] %s16
      %19 = dma.hbm_to_vmem [thread:$0]  %s0, 128, %s17, [#allocation3]
    $region5: #{transformer_mapper_pallas.5} parent=1 // pred_fallthru
      _
    // Predicated region
    $region6: #{transformer_mapper_pallas.5} parent=1 // pred_check
      _
    $region7: #{transformer_mapper_pallas.5} parent=1 // pred_check_branch
      %21 = sbr.rel (0) target = $region9
    $region8: #{transformer_mapper_pallas.5} parent=1 // pred_region
      %s23 = ssub.s32 40960, 40960
      %24 = vsyncadd [#allocation5], %s23
      %s25 = sshll.u32 [#allocation4], 4
      %s26 = int_to_ptr.vmem [resolvable:$true] %s25
      %31 = dma.hbm_to_vmem [thread:$0]  %s1, 40960, %s26, [#allocation5], 640, 640, 40
    $region9: #{transformer_mapper_pallas.5} parent=1 // pred_fallthru
      _
    // Predicated region
    $region10: #{transformer_mapper_pallas.5} parent=1 // pred_check
      _
    $region11: #{transformer_mapper_pallas.5} parent=1 // pred_check_branch
      %33 = sbr.rel (0) target = $region13
    $region12: #{transformer_mapper_pallas.5} parent=1 // pred_region
      %s35 = ssub.s32 160, 160
      %36 = vsyncadd [#allocation5], %s35
      %s38 = sshll.u32 [#allocation6], 4
      %s39 = int_to_ptr.vmem [resolvable:$true] %s38
      %41 = dma.hbm_to_vmem [thread:$0]  %s2, 160, %s39, [#allocation5]
    $region13: #{transformer_mapper_pallas.5} parent=1 // pred_fallthru
      _
    // Predicated region
    $region14: #{transformer_mapper_pallas.5} parent=1 // pred_check
      _
    $region15: #{transformer_mapper_pallas.5} parent=1 // pred_check_branch
      %43 = sbr.rel (0) target = $region17
    $region16: #{transformer_mapper_pallas.5} parent=1 // pred_region
      %44 = dma.done [#allocation3], 128
    $region17: #{transformer_mapper_pallas.5} parent=1 // pred_fallthru
      _
    // Predicated region
    $region18: #{transformer_mapper_pallas.5} parent=1 // pred_check
      _
    $region19: #{transformer_mapper_pallas.5} parent=1 // pred_check_branch
      %46 = sbr.rel (0) target = $region21
    $region20: #{transformer_mapper_pallas.5} parent=1 // pred_region
      %47 = dma.done [#allocation5], 40960
    $region21: #{transformer_mapper_pallas.5} parent=1 // pred_fallthru
      _
    // Predicated region
    $region22: #{transformer_mapper_pallas.5} parent=1 // pred_check
      _
    $region23: #{transformer_mapper_pallas.5} parent=1 // pred_check_branch
      %49 = sbr.rel (0) target = $region25
    $region24: #{transformer_mapper_pallas.5} parent=1 // pred_region
      %50 = dma.done [#allocation5], 160
    $region25: #{transformer_mapper_pallas.5} parent=1 // pred_fallthru
      _
    %v51 = vld [vmem:[#allocation2] sm:$0xff]
    %v53 = vcombine.high %v51, %v51
    %v55 = vunpack.c.l.s4 1983009808
    %v56 = vunpack.c.0.s8 %v55
    %v57 = vlaneseq
    %v58 = vshrl.u32 %v57, 7
    %v59 = vsub.s32 %v56, %v58
    %v60 = vrot.slane %v51, %v59
    %v62 = vunpack.c.l.s4 1983009808
    %v63 = vunpack.c.0.s8 %v62
    %v64 = vlaneseq
    %v65 = vshrl.u32 %v64, 7
    %v66 = vsub.s32 %v63, %v65
    %v67 = vrot.slane %v53, %v66
    %v68 = vcombine.high %v60, %v60
    %v69 = vcombine.high %v67, %v67
    %v74 = vpack.c.bf16 %v60, %v60
    %v75 = vpack.c.bf16 %v68, %v68
    %v76 = vpack.c.bf16 %v67, %v67
    %v77 = vpack.c.bf16 %v69, %v69
    %v78 = vld [vmem:[#allocation4] sm:$0xff]
    %v79 = vld [vmem:[#allocation4 + $0x8] sm:$0xff]
    %v80 = vld [vmem:[#allocation4 + $0x10] sm:$0xff]
    %v81 = vld [vmem:[#allocation4 + $0x18] sm:$0xff]
    %v82 = vld [vmem:[#allocation4 + $0x20] sm:$0xff]
    %v83 = vld [vmem:[#allocation4 + $0x28] sm:$0xff]
    %v84 = vld [vmem:[#allocation4 + $0x30] sm:$0xff]
    %v85 = vld [vmem:[#allocation4 + $0x38] sm:$0xff]
    %v86 = vld [vmem:[#allocation4 + $0x40] sm:$0xff]
    %v87 = vld [vmem:[#allocation4 + $0x48] sm:$0xff]
    %v88 = vld [vmem:[#allocation4 + $0x50] sm:$0xff]
    %v89 = vld [vmem:[#allocation4 + $0x58] sm:$0xff]
    %v90 = vld [vmem:[#allocation4 + $0x60] sm:$0xff]
    %v91 = vld [vmem:[#allocation4 + $0x68] sm:$0xff]
    %v92 = vld [vmem:[#allocation4 + $0x70] sm:$0xff]
    %v93 = vld [vmem:[#allocation4 + $0x78] sm:$0xff]
    %v94 = vld [vmem:[#allocation4 + $0x80] sm:$0xff]
    %v95 = vld [vmem:[#allocation4 + $0x88] sm:$0xff]
    %v96 = vld [vmem:[#allocation4 + $0x90] sm:$0xff]
    %v97 = vld [vmem:[#allocation4 + $0x98] sm:$0xff]
    %v98 = vld [vmem:[#allocation4 + $0xa0] sm:$0xff]
    %v99 = vld [vmem:[#allocation4 + $0xa8] sm:$0xff]
    %v100 = vld [vmem:[#allocation4 + $0xb0] sm:$0xff]
    %v101 = vld [vmem:[#allocation4 + $0xb8] sm:$0xff]
    %v102 = vld [vmem:[#allocation4 + $0xc0] sm:$0xff]
    %v103 = vld [vmem:[#allocation4 + $0xc8] sm:$0xff]
    %v104 = vld [vmem:[#allocation4 + $0xd0] sm:$0xff]
    %v105 = vld [vmem:[#allocation4 + $0xd8] sm:$0xff]
    %v106 = vld [vmem:[#allocation4 + $0xe0] sm:$0xff]
    %v107 = vld [vmem:[#allocation4 + $0xe8] sm:$0xff]
    %v108 = vld [vmem:[#allocation4 + $0xf0] sm:$0xff]
    %v109 = vld [vmem:[#allocation4 + $0xf8] sm:$0xff]
    %v110 = vld [vmem:[#allocation4 + $0x100] sm:$0xff]
    %v111 = vld [vmem:[#allocation4 + $0x108] sm:$0xff]
    %v112 = vld [vmem:[#allocation4 + $0x110] sm:$0xff]
    %v113 = vld [vmem:[#allocation4 + $0x118] sm:$0xff]
    %v114 = vld [vmem:[#allocation4 + $0x120] sm:$0xff]
    %v115 = vld [vmem:[#allocation4 + $0x128] sm:$0xff]
    %v116 = vld [vmem:[#allocation4 + $0x130] sm:$0xff]
    %v117 = vld [vmem:[#allocation4 + $0x138] sm:$0xff]
    %v118 = vld [vmem:[#allocation4 + $0x140] sm:$0xff]
    %v119 = vld [vmem:[#allocation4 + $0x148] sm:$0xff]
    %v120 = vld [vmem:[#allocation4 + $0x150] sm:$0xff]
    %v121 = vld [vmem:[#allocation4 + $0x158] sm:$0xff]
    %v122 = vld [vmem:[#allocation4 + $0x160] sm:$0xff]
    %v123 = vld [vmem:[#allocation4 + $0x168] sm:$0xff]
    %v124 = vld [vmem:[#allocation4 + $0x170] sm:$0xff]
    %v125 = vld [vmem:[#allocation4 + $0x178] sm:$0xff]
    %v126 = vld [vmem:[#allocation4 + $0x180] sm:$0xff]
    %v127 = vld [vmem:[#allocation4 + $0x188] sm:$0xff]
    %v128 = vld [vmem:[#allocation4 + $0x190] sm:$0xff]
    %v129 = vld [vmem:[#allocation4 + $0x198] sm:$0xff]
    %v130 = vld [vmem:[#allocation4 + $0x1a0] sm:$0xff]
    %v131 = vld [vmem:[#allocation4 + $0x1a8] sm:$0xff]
    %v132 = vld [vmem:[#allocation4 + $0x1b0] sm:$0xff]
    %v133 = vld [vmem:[#allocation4 + $0x1b8] sm:$0xff]
    %v134 = vld [vmem:[#allocation4 + $0x1c0] sm:$0xff]
    %v135 = vld [vmem:[#allocation4 + $0x1c8] sm:$0xff]
    %v136 = vld [vmem:[#allocation4 + $0x1d0] sm:$0xff]
    %v137 = vld [vmem:[#allocation4 + $0x1d8] sm:$0xff]
    %v138 = vld [vmem:[#allocation4 + $0x1e0] sm:$0xff]
    %v139 = vld [vmem:[#allocation4 + $0x1e8] sm:$0xff]
    %v140 = vld [vmem:[#allocation4 + $0x1f0] sm:$0xff]
    %v141 = vld [vmem:[#allocation4 + $0x1f8] sm:$0xff]
    %v142 = vld [vmem:[#allocation4 + $0x200] sm:$0xff]
    %v143 = vld [vmem:[#allocation4 + $0x208] sm:$0xff]
    %v144 = vld [vmem:[#allocation4 + $0x210] sm:$0xff]
    %v145 = vld [vmem:[#allocation4 + $0x218] sm:$0xff]
    %v146 = vld [vmem:[#allocation4 + $0x220] sm:$0xff]
    %v147 = vld [vmem:[#allocation4 + $0x228] sm:$0xff]
    %v148 = vld [vmem:[#allocation4 + $0x230] sm:$0xff]
    %v149 = vld [vmem:[#allocation4 + $0x238] sm:$0xff]
    %v150 = vld [vmem:[#allocation4 + $0x240] sm:$0xff]
    %v151 = vld [vmem:[#allocation4 + $0x248] sm:$0xff]
    %v152 = vld [vmem:[#allocation4 + $0x250] sm:$0xff]
    %v153 = vld [vmem:[#allocation4 + $0x258] sm:$0xff]
    %v154 = vld [vmem:[#allocation4 + $0x260] sm:$0xff]
    %v155 = vld [vmem:[#allocation4 + $0x268] sm:$0xff]
    %v156 = vld [vmem:[#allocation4 + $0x270] sm:$0xff]
    %v157 = vld [vmem:[#allocation4 + $0x278] sm:$0xff]
    %v158 = vld [vmem:[#allocation4 + $0x280] sm:$0xff]
    %v159 = vld [vmem:[#allocation4 + $0x288] sm:$0xff]
    %v160 = vld [vmem:[#allocation4 + $0x290] sm:$0xff]
    %v161 = vld [vmem:[#allocation4 + $0x298] sm:$0xff]
    %v162 = vld [vmem:[#allocation4 + $0x2a0] sm:$0xff]
    %v163 = vld [vmem:[#allocation4 + $0x2a8] sm:$0xff]
    %v164 = vld [vmem:[#allocation4 + $0x2b0] sm:$0xff]
    %v165 = vld [vmem:[#allocation4 + $0x2b8] sm:$0xff]
    %v166 = vld [vmem:[#allocation4 + $0x2c0] sm:$0xff]
    %v167 = vld [vmem:[#allocation4 + $0x2c8] sm:$0xff]
    %v168 = vld [vmem:[#allocation4 + $0x2d0] sm:$0xff]
    %v169 = vld [vmem:[#allocation4 + $0x2d8] sm:$0xff]
    %v170 = vld [vmem:[#allocation4 + $0x2e0] sm:$0xff]
    %v171 = vld [vmem:[#allocation4 + $0x2e8] sm:$0xff]
    %v172 = vld [vmem:[#allocation4 + $0x2f0] sm:$0xff]
    %v173 = vld [vmem:[#allocation4 + $0x2f8] sm:$0xff]
    %v174 = vld [vmem:[#allocation4 + $0x300] sm:$0xff]
    %v175 = vld [vmem:[#allocation4 + $0x308] sm:$0xff]
    %v176 = vld [vmem:[#allocation4 + $0x310] sm:$0xff]
    %v177 = vld [vmem:[#allocation4 + $0x318] sm:$0xff]
    %v178 = vld [vmem:[#allocation4 + $0x320] sm:$0xff]
    %v179 = vld [vmem:[#allocation4 + $0x328] sm:$0xff]
    %v180 = vld [vmem:[#allocation4 + $0x330] sm:$0xff]
    %v181 = vld [vmem:[#allocation4 + $0x338] sm:$0xff]
    %v182 = vld [vmem:[#allocation4 + $0x340] sm:$0xff]
    %v183 = vld [vmem:[#allocation4 + $0x348] sm:$0xff]
    %v184 = vld [vmem:[#allocation4 + $0x350] sm:$0xff]
    %v185 = vld [vmem:[#allocation4 + $0x358] sm:$0xff]
    %v186 = vld [vmem:[#allocation4 + $0x360] sm:$0xff]
    %v187 = vld [vmem:[#allocation4 + $0x368] sm:$0xff]
    %v188 = vld [vmem:[#allocation4 + $0x370] sm:$0xff]
    %v189 = vld [vmem:[#allocation4 + $0x378] sm:$0xff]
    %v190 = vld [vmem:[#allocation4 + $0x380] sm:$0xff]
    %v191 = vld [vmem:[#allocation4 + $0x388] sm:$0xff]
    %v192 = vld [vmem:[#allocation4 + $0x390] sm:$0xff]
    %v193 = vld [vmem:[#allocation4 + $0x398] sm:$0xff]
    %v194 = vld [vmem:[#allocation4 + $0x3a0] sm:$0xff]
    %v195 = vld [vmem:[#allocation4 + $0x3a8] sm:$0xff]
    %v196 = vld [vmem:[#allocation4 + $0x3b0] sm:$0xff]
    %v197 = vld [vmem:[#allocation4 + $0x3b8] sm:$0xff]
    %v198 = vld [vmem:[#allocation4 + $0x3c0] sm:$0xff]
    %v199 = vld [vmem:[#allocation4 + $0x3c8] sm:$0xff]
    %v200 = vld [vmem:[#allocation4 + $0x3d0] sm:$0xff]
    %v201 = vld [vmem:[#allocation4 + $0x3d8] sm:$0xff]
    %v202 = vld [vmem:[#allocation4 + $0x3e0] sm:$0xff]
    %v203 = vld [vmem:[#allocation4 + $0x3e8] sm:$0xff]
    %v204 = vld [vmem:[#allocation4 + $0x3f0] sm:$0xff]
    %v205 = vld [vmem:[#allocation4 + $0x3f8] sm:$0xff]
    %v206 = vld [vmem:[#allocation4 + $0x400] sm:$0xff]
    %v207 = vld [vmem:[#allocation4 + $0x408] sm:$0xff]
    %v208 = vld [vmem:[#allocation4 + $0x410] sm:$0xff]
    %v209 = vld [vmem:[#allocation4 + $0x418] sm:$0xff]
    %v210 = vld [vmem:[#allocation4 + $0x420] sm:$0xff]
    %v211 = vld [vmem:[#allocation4 + $0x428] sm:$0xff]
    %v212 = vld [vmem:[#allocation4 + $0x430] sm:$0xff]
    %v213 = vld [vmem:[#allocation4 + $0x438] sm:$0xff]
    %v214 = vld [vmem:[#allocation4 + $0x440] sm:$0xff]
    %v215 = vld [vmem:[#allocation4 + $0x448] sm:$0xff]
    %v216 = vld [vmem:[#allocation4 + $0x450] sm:$0xff]
    %v217 = vld [vmem:[#allocation4 + $0x458] sm:$0xff]
    %v218 = vld [vmem:[#allocation4 + $0x460] sm:$0xff]
    %v219 = vld [vmem:[#allocation4 + $0x468] sm:$0xff]
    %v220 = vld [vmem:[#allocation4 + $0x470] sm:$0xff]
    %v221 = vld [vmem:[#allocation4 + $0x478] sm:$0xff]
    %v222 = vld [vmem:[#allocation4 + $0x480] sm:$0xff]
    %v223 = vld [vmem:[#allocation4 + $0x488] sm:$0xff]
    %v224 = vld [vmem:[#allocation4 + $0x490] sm:$0xff]
    %v225 = vld [vmem:[#allocation4 + $0x498] sm:$0xff]
    %v226 = vld [vmem:[#allocation4 + $0x4a0] sm:$0xff]
    %v227 = vld [vmem:[#allocation4 + $0x4a8] sm:$0xff]
    %v228 = vld [vmem:[#allocation4 + $0x4b0] sm:$0xff]
    %v229 = vld [vmem:[#allocation4 + $0x4b8] sm:$0xff]
    %v230 = vld [vmem:[#allocation4 + $0x4c0] sm:$0xff]
    %v231 = vld [vmem:[#allocation4 + $0x4c8] sm:$0xff]
    %v232 = vld [vmem:[#allocation4 + $0x4d0] sm:$0xff]
    %v233 = vld [vmem:[#allocation4 + $0x4d8] sm:$0xff]
    %v234 = vld [vmem:[#allocation4 + $0x4e0] sm:$0xff]
    %v235 = vld [vmem:[#allocation4 + $0x4e8] sm:$0xff]
    %v236 = vld [vmem:[#allocation4 + $0x4f0] sm:$0xff]
    %v237 = vld [vmem:[#allocation4 + $0x4f8] sm:$0xff]
    %v238 = vld [vmem:[#allocation4 + $0x500] sm:$0xff]
    %v239 = vld [vmem:[#allocation4 + $0x508] sm:$0xff]
    %v240 = vld [vmem:[#allocation4 + $0x510] sm:$0xff]
    %v241 = vld [vmem:[#allocation4 + $0x518] sm:$0xff]
    %v242 = vld [vmem:[#allocation4 + $0x520] sm:$0xff]
    %v243 = vld [vmem:[#allocation4 + $0x528] sm:$0xff]
    %v244 = vld [vmem:[#allocation4 + $0x530] sm:$0xff]
    %v245 = vld [vmem:[#allocation4 + $0x538] sm:$0xff]
    %v246 = vld [vmem:[#allocation4 + $0x540] sm:$0xff]
    %v247 = vld [vmem:[#allocation4 + $0x548] sm:$0xff]
    %v248 = vld [vmem:[#allocation4 + $0x550] sm:$0xff]
    %v249 = vld [vmem:[#allocation4 + $0x558] sm:$0xff]
    %v250 = vld [vmem:[#allocation4 + $0x560] sm:$0xff]
    %v251 = vld [vmem:[#allocation4 + $0x568] sm:$0xff]
    %v252 = vld [vmem:[#allocation4 + $0x570] sm:$0xff]
    %v253 = vld [vmem:[#allocation4 + $0x578] sm:$0xff]
    %v254 = vld [vmem:[#allocation4 + $0x580] sm:$0xff]
    %v255 = vld [vmem:[#allocation4 + $0x588] sm:$0xff]
    %v256 = vld [vmem:[#allocation4 + $0x590] sm:$0xff]
    %v257 = vld [vmem:[#allocation4 + $0x598] sm:$0xff]
    %v258 = vld [vmem:[#allocation4 + $0x5a0] sm:$0xff]
    %v259 = vld [vmem:[#allocation4 + $0x5a8] sm:$0xff]
    %v260 = vld [vmem:[#allocation4 + $0x5b0] sm:$0xff]
    %v261 = vld [vmem:[#allocation4 + $0x5b8] sm:$0xff]
    %v262 = vld [vmem:[#allocation4 + $0x5c0] sm:$0xff]
    %v263 = vld [vmem:[#allocation4 + $0x5c8] sm:$0xff]
    %v264 = vld [vmem:[#allocation4 + $0x5d0] sm:$0xff]
    %v265 = vld [vmem:[#allocation4 + $0x5d8] sm:$0xff]
    %v266 = vld [vmem:[#allocation4 + $0x5e0] sm:$0xff]
    %v267 = vld [vmem:[#allocation4 + $0x5e8] sm:$0xff]
    %v268 = vld [vmem:[#allocation4 + $0x5f0] sm:$0xff]
    %v269 = vld [vmem:[#allocation4 + $0x5f8] sm:$0xff]
    %v270 = vld [vmem:[#allocation4 + $0x600] sm:$0xff]
    %v271 = vld [vmem:[#allocation4 + $0x608] sm:$0xff]
    %v272 = vld [vmem:[#allocation4 + $0x610] sm:$0xff]
    %v273 = vld [vmem:[#allocation4 + $0x618] sm:$0xff]
    %v274 = vld [vmem:[#allocation4 + $0x620] sm:$0xff]
    %v275 = vld [vmem:[#allocation4 + $0x628] sm:$0xff]
    %v276 = vld [vmem:[#allocation4 + $0x630] sm:$0xff]
    %v277 = vld [vmem:[#allocation4 + $0x638] sm:$0xff]
    %v278 = vld [vmem:[#allocation4 + $0x640] sm:$0xff]
    %v279 = vld [vmem:[#allocation4 + $0x648] sm:$0xff]
    %v280 = vld [vmem:[#allocation4 + $0x650] sm:$0xff]
    %v281 = vld [vmem:[#allocation4 + $0x658] sm:$0xff]
    %v282 = vld [vmem:[#allocation4 + $0x660] sm:$0xff]
    %v283 = vld [vmem:[#allocation4 + $0x668] sm:$0xff]
    %v284 = vld [vmem:[#allocation4 + $0x670] sm:$0xff]
    %v285 = vld [vmem:[#allocation4 + $0x678] sm:$0xff]
    %v286 = vld [vmem:[#allocation4 + $0x680] sm:$0xff]
    %v287 = vld [vmem:[#allocation4 + $0x688] sm:$0xff]
    %v288 = vld [vmem:[#allocation4 + $0x690] sm:$0xff]
    %v289 = vld [vmem:[#allocation4 + $0x698] sm:$0xff]
    %v290 = vld [vmem:[#allocation4 + $0x6a0] sm:$0xff]
    %v291 = vld [vmem:[#allocation4 + $0x6a8] sm:$0xff]
    %v292 = vld [vmem:[#allocation4 + $0x6b0] sm:$0xff]
    %v293 = vld [vmem:[#allocation4 + $0x6b8] sm:$0xff]
    %v294 = vld [vmem:[#allocation4 + $0x6c0] sm:$0xff]
    %v295 = vld [vmem:[#allocation4 + $0x6c8] sm:$0xff]
    %v296 = vld [vmem:[#allocation4 + $0x6d0] sm:$0xff]
    %v297 = vld [vmem:[#allocation4 + $0x6d8] sm:$0xff]
    %v298 = vld [vmem:[#allocation4 + $0x6e0] sm:$0xff]
    %v299 = vld [vmem:[#allocation4 + $0x6e8] sm:$0xff]
    %v300 = vld [vmem:[#allocation4 + $0x6f0] sm:$0xff]
    %v301 = vld [vmem:[#allocation4 + $0x6f8] sm:$0xff]
    %v302 = vld [vmem:[#allocation4 + $0x700] sm:$0xff]
    %v303 = vld [vmem:[#allocation4 + $0x708] sm:$0xff]
    %v304 = vld [vmem:[#allocation4 + $0x710] sm:$0xff]
    %v305 = vld [vmem:[#allocation4 + $0x718] sm:$0xff]
    %v306 = vld [vmem:[#allocation4 + $0x720] sm:$0xff]
    %v307 = vld [vmem:[#allocation4 + $0x728] sm:$0xff]
    %v308 = vld [vmem:[#allocation4 + $0x730] sm:$0xff]
    %v309 = vld [vmem:[#allocation4 + $0x738] sm:$0xff]
    %v310 = vld [vmem:[#allocation4 + $0x740] sm:$0xff]
    %v311 = vld [vmem:[#allocation4 + $0x748] sm:$0xff]
    %v312 = vld [vmem:[#allocation4 + $0x750] sm:$0xff]
    %v313 = vld [vmem:[#allocation4 + $0x758] sm:$0xff]
    %v314 = vld [vmem:[#allocation4 + $0x760] sm:$0xff]
    %v315 = vld [vmem:[#allocation4 + $0x768] sm:$0xff]
    %v316 = vld [vmem:[#allocation4 + $0x770] sm:$0xff]
    %v317 = vld [vmem:[#allocation4 + $0x778] sm:$0xff]
    %v318 = vld [vmem:[#allocation4 + $0x780] sm:$0xff]
    %v319 = vld [vmem:[#allocation4 + $0x788] sm:$0xff]
    %v320 = vld [vmem:[#allocation4 + $0x790] sm:$0xff]
    %v321 = vld [vmem:[#allocation4 + $0x798] sm:$0xff]
    %v322 = vld [vmem:[#allocation4 + $0x7a0] sm:$0xff]
    %v323 = vld [vmem:[#allocation4 + $0x7a8] sm:$0xff]
    %v324 = vld [vmem:[#allocation4 + $0x7b0] sm:$0xff]
    %v325 = vld [vmem:[#allocation4 + $0x7b8] sm:$0xff]
    %v326 = vld [vmem:[#allocation4 + $0x7c0] sm:$0xff]
    %v327 = vld [vmem:[#allocation4 + $0x7c8] sm:$0xff]
    %v328 = vld [vmem:[#allocation4 + $0x7d0] sm:$0xff]
    %v329 = vld [vmem:[#allocation4 + $0x7d8] sm:$0xff]
    %v330 = vld [vmem:[#allocation4 + $0x7e0] sm:$0xff]
    %v331 = vld [vmem:[#allocation4 + $0x7e8] sm:$0xff]
    %v332 = vld [vmem:[#allocation4 + $0x7f0] sm:$0xff]
    %v333 = vld [vmem:[#allocation4 + $0x7f8] sm:$0xff]
    %v334 = vld [vmem:[#allocation4 + $0x800] sm:$0xff]
    %v335 = vld [vmem:[#allocation4 + $0x808] sm:$0xff]
    %v336 = vld [vmem:[#allocation4 + $0x810] sm:$0xff]
    %v337 = vld [vmem:[#allocation4 + $0x818] sm:$0xff]
    %v338 = vld [vmem:[#allocation4 + $0x820] sm:$0xff]
    %v339 = vld [vmem:[#allocation4 + $0x828] sm:$0xff]
    %v340 = vld [vmem:[#allocation4 + $0x830] sm:$0xff]
    %v341 = vld [vmem:[#allocation4 + $0x838] sm:$0xff]
    %v342 = vld [vmem:[#allocation4 + $0x840] sm:$0xff]
    %v343 = vld [vmem:[#allocation4 + $0x848] sm:$0xff]
    %v344 = vld [vmem:[#allocation4 + $0x850] sm:$0xff]
    %v345 = vld [vmem:[#allocation4 + $0x858] sm:$0xff]
    %v346 = vld [vmem:[#allocation4 + $0x860] sm:$0xff]
    %v347 = vld [vmem:[#allocation4 + $0x868] sm:$0xff]
    %v348 = vld [vmem:[#allocation4 + $0x870] sm:$0xff]
    %v349 = vld [vmem:[#allocation4 + $0x878] sm:$0xff]
    %v350 = vld [vmem:[#allocation4 + $0x880] sm:$0xff]
    %v351 = vld [vmem:[#allocation4 + $0x888] sm:$0xff]
    %v352 = vld [vmem:[#allocation4 + $0x890] sm:$0xff]
    %v353 = vld [vmem:[#allocation4 + $0x898] sm:$0xff]
    %v354 = vld [vmem:[#allocation4 + $0x8a0] sm:$0xff]
    %v355 = vld [vmem:[#allocation4 + $0x8a8] sm:$0xff]
    %v356 = vld [vmem:[#allocation4 + $0x8b0] sm:$0xff]
    %v357 = vld [vmem:[#allocation4 + $0x8b8] sm:$0xff]
    %v358 = vld [vmem:[#allocation4 + $0x8c0] sm:$0xff]
    %v359 = vld [vmem:[#allocation4 + $0x8c8] sm:$0xff]
    %v360 = vld [vmem:[#allocation4 + $0x8d0] sm:$0xff]
    %v361 = vld [vmem:[#allocation4 + $0x8d8] sm:$0xff]
    %v362 = vld [vmem:[#allocation4 + $0x8e0] sm:$0xff]
    %v363 = vld [vmem:[#allocation4 + $0x8e8] sm:$0xff]
    %v364 = vld [vmem:[#allocation4 + $0x8f0] sm:$0xff]
    %v365 = vld [vmem:[#allocation4 + $0x8f8] sm:$0xff]
    %v366 = vld [vmem:[#allocation4 + $0x900] sm:$0xff]
    %v367 = vld [vmem:[#allocation4 + $0x908] sm:$0xff]
    %v368 = vld [vmem:[#allocation4 + $0x910] sm:$0xff]
    %v369 = vld [vmem:[#allocation4 + $0x918] sm:$0xff]
    %v370 = vld [vmem:[#allocation4 + $0x920] sm:$0xff]
    %v371 = vld [vmem:[#allocation4 + $0x928] sm:$0xff]
    %v372 = vld [vmem:[#allocation4 + $0x930] sm:$0xff]
    %v373 = vld [vmem:[#allocation4 + $0x938] sm:$0xff]
    %v374 = vld [vmem:[#allocation4 + $0x940] sm:$0xff]
    %v375 = vld [vmem:[#allocation4 + $0x948] sm:$0xff]
    %v376 = vld [vmem:[#allocation4 + $0x950] sm:$0xff]
    %v377 = vld [vmem:[#allocation4 + $0x958] sm:$0xff]
    %v378 = vld [vmem:[#allocation4 + $0x960] sm:$0xff]
    %v379 = vld [vmem:[#allocation4 + $0x968] sm:$0xff]
    %v380 = vld [vmem:[#allocation4 + $0x970] sm:$0xff]
    %v381 = vld [vmem:[#allocation4 + $0x978] sm:$0xff]
    %v382 = vld [vmem:[#allocation4 + $0x980] sm:$0xff]
    %v383 = vld [vmem:[#allocation4 + $0x988] sm:$0xff]
    %v384 = vld [vmem:[#allocation4 + $0x990] sm:$0xff]
    %v385 = vld [vmem:[#allocation4 + $0x998] sm:$0xff]
    %v386 = vld [vmem:[#allocation4 + $0x9a0] sm:$0xff]
    %v387 = vld [vmem:[#allocation4 + $0x9a8] sm:$0xff]
    %v388 = vld [vmem:[#allocation4 + $0x9b0] sm:$0xff]
    %v389 = vld [vmem:[#allocation4 + $0x9b8] sm:$0xff]
    %v390 = vld [vmem:[#allocation4 + $0x9c0] sm:$0xff]
    %v391 = vld [vmem:[#allocation4 + $0x9c8] sm:$0xff]
    %v392 = vld [vmem:[#allocation4 + $0x9d0] sm:$0xff]
    %v393 = vld [vmem:[#allocation4 + $0x9d8] sm:$0xff]
    %v394 = vld [vmem:[#allocation4 + $0x9e0] sm:$0xff]
    %v395 = vld [vmem:[#allocation4 + $0x9e8] sm:$0xff]
    %v396 = vld [vmem:[#allocation4 + $0x9f0] sm:$0xff]
    %v397 = vld [vmem:[#allocation4 + $0x9f8] sm:$0xff]
    %v398 = vld [vmem:[#allocation6] sm:$0xff]
    %v399 = vld [vmem:[#allocation6 + $0x8] sm:$0x3]
    %v402 = vlaneseq
    %v403 = vshrl.u32 %v402, 7
    %v404 = vsub.s32 0, %v403
    %v405 = vrot.slane %v398, %v404
    %v406 = vlaneseq
    %v407 = vshrl.u32 %v406, 7
    %v408 = vsub.s32 1, %v407
    %v409 = vrot.slane %v398, %v408
    %v410 = vlaneseq
    %v411 = vshrl.u32 %v410, 7
    %v412 = vsub.s32 2, %v411
    %v413 = vrot.slane %v398, %v412
    %v414 = vlaneseq
    %v415 = vshrl.u32 %v414, 7
    %v416 = vsub.s32 3, %v415
    %v417 = vrot.slane %v398, %v416
    %v418 = vlaneseq
    %v419 = vshrl.u32 %v418, 7
    %v420 = vsub.s32 4, %v419
    %v421 = vrot.slane %v398, %v420
    %v422 = vlaneseq
    %v423 = vshrl.u32 %v422, 7
    %v424 = vsub.s32 5, %v423
    %v425 = vrot.slane %v398, %v424
    %v426 = vlaneseq
    %v427 = vshrl.u32 %v426, 7
    %v428 = vsub.s32 6, %v427
    %v429 = vrot.slane %v398, %v428
    %v430 = vlaneseq
    %v431 = vshrl.u32 %v430, 7
    %v432 = vsub.s32 7, %v431
    %v433 = vrot.slane %v398, %v432
    %v434 = vlaneseq
    %v435 = vshrl.u32 %v434, 7
    %v436 = vsub.s32 0, %v435
    %v437 = vrot.slane %v399, %v436
    %v438 = vlaneseq
    %v439 = vshrl.u32 %v438, 7
    %v440 = vsub.s32 1, %v439
    %v441 = vrot.slane %v399, %v440
    %v772 = vunpack.c.l.b16 %v78
    %v773 = vunpack.c.h.b16 %v78
    %v774 = vunpack.c.l.b16 %v79
    %v775 = vunpack.c.h.b16 %v79
    %v776 = vunpack.c.l.b16 %v80
    %v777 = vunpack.c.h.b16 %v80
    %v778 = vunpack.c.l.b16 %v81
    %v779 = vunpack.c.h.b16 %v81
    %v780 = vunpack.c.l.b16 %v82
    %v781 = vunpack.c.h.b16 %v82
    %v782 = vunpack.c.l.b16 %v83
    %v783 = vunpack.c.h.b16 %v83
    %v784 = vunpack.c.l.b16 %v84
    %v785 = vunpack.c.h.b16 %v84
    %v786 = vunpack.c.l.b16 %v85
    %v787 = vunpack.c.h.b16 %v85
    %v788 = vunpack.c.l.b16 %v86
    %v789 = vunpack.c.h.b16 %v86
    %v790 = vunpack.c.l.b16 %v87
    %v791 = vunpack.c.h.b16 %v87
    %v792 = vunpack.c.l.b16 %v88
    %v793 = vunpack.c.h.b16 %v88
    %v794 = vunpack.c.l.b16 %v89
    %v795 = vunpack.c.h.b16 %v89
    %v796 = vunpack.c.l.b16 %v90
    %v797 = vunpack.c.h.b16 %v90
    %v798 = vunpack.c.l.b16 %v91
    %v799 = vunpack.c.h.b16 %v91
    %v800 = vunpack.c.l.b16 %v92
    %v801 = vunpack.c.h.b16 %v92
    %v802 = vunpack.c.l.b16 %v93
    %v803 = vunpack.c.h.b16 %v93
    %v804 = vunpack.c.l.b16 %v94
    %v805 = vunpack.c.h.b16 %v94
    %v806 = vunpack.c.l.b16 %v95
    %v807 = vunpack.c.h.b16 %v95
    %v808 = vunpack.c.l.b16 %v96
    %v809 = vunpack.c.h.b16 %v96
    %v810 = vunpack.c.l.b16 %v97
    %v811 = vunpack.c.h.b16 %v97
    %v812 = vunpack.c.l.b16 %v98
    %v813 = vunpack.c.h.b16 %v98
    %v814 = vunpack.c.l.b16 %v99
    %v815 = vunpack.c.h.b16 %v99
    %v816 = vunpack.c.l.b16 %v100
    %v817 = vunpack.c.h.b16 %v100
    %v818 = vunpack.c.l.b16 %v101
    %v819 = vunpack.c.h.b16 %v101
    %v820 = vunpack.c.l.b16 %v102
    %v821 = vunpack.c.h.b16 %v102
    %v822 = vunpack.c.l.b16 %v103
    %v823 = vunpack.c.h.b16 %v103
    %v824 = vunpack.c.l.b16 %v104
    %v825 = vunpack.c.h.b16 %v104
    %v826 = vunpack.c.l.b16 %v105
    %v827 = vunpack.c.h.b16 %v105
    %v828 = vunpack.c.l.b16 %v106
    %v829 = vunpack.c.h.b16 %v106
    %v830 = vunpack.c.l.b16 %v107
    %v831 = vunpack.c.h.b16 %v107
    %v832 = vunpack.c.l.b16 %v108
    %v833 = vunpack.c.h.b16 %v108
    %v834 = vunpack.c.l.b16 %v109
    %v835 = vunpack.c.h.b16 %v109
    %v836 = vunpack.c.l.b16 %v110
    %v837 = vunpack.c.h.b16 %v110
    %v838 = vunpack.c.l.b16 %v111
    %v839 = vunpack.c.h.b16 %v111
    %v840 = vunpack.c.l.b16 %v112
    %v841 = vunpack.c.h.b16 %v112
    %v842 = vunpack.c.l.b16 %v113
    %v843 = vunpack.c.h.b16 %v113
    %v844 = vunpack.c.l.b16 %v114
    %v845 = vunpack.c.h.b16 %v114
    %v846 = vunpack.c.l.b16 %v115
    %v847 = vunpack.c.h.b16 %v115
    %v848 = vunpack.c.l.b16 %v116
    %v849 = vunpack.c.h.b16 %v116
    %v850 = vunpack.c.l.b16 %v117
    %v851 = vunpack.c.h.b16 %v117
    %v852 = vunpack.c.l.b16 %v118
    %v853 = vunpack.c.h.b16 %v118
    %v854 = vunpack.c.l.b16 %v119
    %v855 = vunpack.c.h.b16 %v119
    %v856 = vunpack.c.l.b16 %v120
    %v857 = vunpack.c.h.b16 %v120
    %v858 = vunpack.c.l.b16 %v121
    %v859 = vunpack.c.h.b16 %v121
    %v860 = vunpack.c.l.b16 %v122
    %v861 = vunpack.c.h.b16 %v122
    %v862 = vunpack.c.l.b16 %v123
    %v863 = vunpack.c.h.b16 %v123
    %v864 = vunpack.c.l.b16 %v124
    %v865 = vunpack.c.h.b16 %v124
    %v866 = vunpack.c.l.b16 %v125
    %v867 = vunpack.c.h.b16 %v125
    %v868 = vunpack.c.l.b16 %v126
    %v869 = vunpack.c.h.b16 %v126
    %v870 = vunpack.c.l.b16 %v127
    %v871 = vunpack.c.h.b16 %v127
    %v872 = vunpack.c.l.b16 %v128
    %v873 = vunpack.c.h.b16 %v128
    %v874 = vunpack.c.l.b16 %v129
    %v875 = vunpack.c.h.b16 %v129
    %v876 = vunpack.c.l.b16 %v130
    %v877 = vunpack.c.h.b16 %v130
    %v878 = vunpack.c.l.b16 %v131
    %v879 = vunpack.c.h.b16 %v131
    %v880 = vunpack.c.l.b16 %v132
    %v881 = vunpack.c.h.b16 %v132
    %v882 = vunpack.c.l.b16 %v133
    %v883 = vunpack.c.h.b16 %v133
    %v884 = vunpack.c.l.b16 %v134
    %v885 = vunpack.c.h.b16 %v134
    %v886 = vunpack.c.l.b16 %v135
    %v887 = vunpack.c.h.b16 %v135
    %v888 = vunpack.c.l.b16 %v136
    %v889 = vunpack.c.h.b16 %v136
    %v890 = vunpack.c.l.b16 %v137
    %v891 = vunpack.c.h.b16 %v137
    %v892 = vunpack.c.l.b16 %v138
    %v893 = vunpack.c.h.b16 %v138
    %v894 = vunpack.c.l.b16 %v139
    %v895 = vunpack.c.h.b16 %v139
    %v896 = vunpack.c.l.b16 %v140
    %v897 = vunpack.c.h.b16 %v140
    %v898 = vunpack.c.l.b16 %v141
    %v899 = vunpack.c.h.b16 %v141
    %v900 = vunpack.c.l.b16 %v142
    %v901 = vunpack.c.h.b16 %v142
    %v902 = vunpack.c.l.b16 %v143
    %v903 = vunpack.c.h.b16 %v143
    %v904 = vunpack.c.l.b16 %v144
    %v905 = vunpack.c.h.b16 %v144
    %v906 = vunpack.c.l.b16 %v145
    %v907 = vunpack.c.h.b16 %v145
    %v908 = vunpack.c.l.b16 %v146
    %v909 = vunpack.c.h.b16 %v146
    %v910 = vunpack.c.l.b16 %v147
    %v911 = vunpack.c.h.b16 %v147
    %v912 = vunpack.c.l.b16 %v148
    %v913 = vunpack.c.h.b16 %v148
    %v914 = vunpack.c.l.b16 %v149
    %v915 = vunpack.c.h.b16 %v149
    %v916 = vunpack.c.l.b16 %v150
    %v917 = vunpack.c.h.b16 %v150
    %v918 = vunpack.c.l.b16 %v151
    %v919 = vunpack.c.h.b16 %v151
    %v920 = vunpack.c.l.b16 %v152
    %v921 = vunpack.c.h.b16 %v152
    %v922 = vunpack.c.l.b16 %v153
    %v923 = vunpack.c.h.b16 %v153
    %v924 = vunpack.c.l.b16 %v154
    %v925 = vunpack.c.h.b16 %v154
    %v926 = vunpack.c.l.b16 %v155
    %v927 = vunpack.c.h.b16 %v155
    %v928 = vunpack.c.l.b16 %v156
    %v929 = vunpack.c.h.b16 %v156
    %v930 = vunpack.c.l.b16 %v157
    %v931 = vunpack.c.h.b16 %v157
    %v932 = vunpack.c.l.b16 %v158
    %v933 = vunpack.c.h.b16 %v158
    %v934 = vunpack.c.l.b16 %v159
    %v935 = vunpack.c.h.b16 %v159
    %v936 = vunpack.c.l.b16 %v160
    %v937 = vunpack.c.h.b16 %v160
    %v938 = vunpack.c.l.b16 %v161
    %v939 = vunpack.c.h.b16 %v161
    %v940 = vunpack.c.l.b16 %v162
    %v941 = vunpack.c.h.b16 %v162
    %v942 = vunpack.c.l.b16 %v163
    %v943 = vunpack.c.h.b16 %v163
    %v944 = vunpack.c.l.b16 %v164
    %v945 = vunpack.c.h.b16 %v164
    %v946 = vunpack.c.l.b16 %v165
    %v947 = vunpack.c.h.b16 %v165
    %v948 = vunpack.c.l.b16 %v166
    %v949 = vunpack.c.h.b16 %v166
    %v950 = vunpack.c.l.b16 %v167
    %v951 = vunpack.c.h.b16 %v167
    %v952 = vunpack.c.l.b16 %v168
    %v953 = vunpack.c.h.b16 %v168
    %v954 = vunpack.c.l.b16 %v169
    %v955 = vunpack.c.h.b16 %v169
    %v956 = vunpack.c.l.b16 %v170
    %v957 = vunpack.c.h.b16 %v170
    %v958 = vunpack.c.l.b16 %v171
    %v959 = vunpack.c.h.b16 %v171
    %v960 = vunpack.c.l.b16 %v172
    %v961 = vunpack.c.h.b16 %v172
    %v962 = vunpack.c.l.b16 %v173
    %v963 = vunpack.c.h.b16 %v173
    %v964 = vunpack.c.l.b16 %v174
    %v965 = vunpack.c.h.b16 %v174
    %v966 = vunpack.c.l.b16 %v175
    %v967 = vunpack.c.h.b16 %v175
    %v968 = vunpack.c.l.b16 %v176
    %v969 = vunpack.c.h.b16 %v176
    %v970 = vunpack.c.l.b16 %v177
    %v971 = vunpack.c.h.b16 %v177
    %v972 = vunpack.c.l.b16 %v178
    %v973 = vunpack.c.h.b16 %v178
    %v974 = vunpack.c.l.b16 %v179
    %v975 = vunpack.c.h.b16 %v179
    %v976 = vunpack.c.l.b16 %v180
    %v977 = vunpack.c.h.b16 %v180
    %v978 = vunpack.c.l.b16 %v181
    %v979 = vunpack.c.h.b16 %v181
    %v980 = vunpack.c.l.b16 %v182
    %v981 = vunpack.c.h.b16 %v182
    %v982 = vunpack.c.l.b16 %v183
    %v983 = vunpack.c.h.b16 %v183
    %v984 = vunpack.c.l.b16 %v184
    %v985 = vunpack.c.h.b16 %v184
    %v986 = vunpack.c.l.b16 %v185
    %v987 = vunpack.c.h.b16 %v185
    %v988 = vunpack.c.l.b16 %v186
    %v989 = vunpack.c.h.b16 %v186
    %v990 = vunpack.c.l.b16 %v187
    %v991 = vunpack.c.h.b16 %v187
    %v992 = vunpack.c.l.b16 %v188
    %v993 = vunpack.c.h.b16 %v188
    %v994 = vunpack.c.l.b16 %v189
    %v995 = vunpack.c.h.b16 %v189
    %v996 = vunpack.c.l.b16 %v190
    %v997 = vunpack.c.h.b16 %v190
    %v998 = vunpack.c.l.b16 %v191
    %v999 = vunpack.c.h.b16 %v191
    %v1000 = vunpack.c.l.b16 %v192
    %v1001 = vunpack.c.h.b16 %v192
    %v1002 = vunpack.c.l.b16 %v193
    %v1003 = vunpack.c.h.b16 %v193
    %v1004 = vunpack.c.l.b16 %v194
    %v1005 = vunpack.c.h.b16 %v194
    %v1006 = vunpack.c.l.b16 %v195
    %v1007 = vunpack.c.h.b16 %v195
    %v1008 = vunpack.c.l.b16 %v196
    %v1009 = vunpack.c.h.b16 %v196
    %v1010 = vunpack.c.l.b16 %v197
    %v1011 = vunpack.c.h.b16 %v197
    %v1012 = vunpack.c.l.b16 %v198
    %v1013 = vunpack.c.h.b16 %v198
    %v1014 = vunpack.c.l.b16 %v199
    %v1015 = vunpack.c.h.b16 %v199
    %v1016 = vunpack.c.l.b16 %v200
    %v1017 = vunpack.c.h.b16 %v200
    %v1018 = vunpack.c.l.b16 %v201
    %v1019 = vunpack.c.h.b16 %v201
    %v1020 = vunpack.c.l.b16 %v202
    %v1021 = vunpack.c.h.b16 %v202
    %v1022 = vunpack.c.l.b16 %v203
    %v1023 = vunpack.c.h.b16 %v203
    %v1024 = vunpack.c.l.b16 %v204
    %v1025 = vunpack.c.h.b16 %v204
    %v1026 = vunpack.c.l.b16 %v205
    %v1027 = vunpack.c.h.b16 %v205
    %v1028 = vunpack.c.l.b16 %v206
    %v1029 = vunpack.c.h.b16 %v206
    %v1030 = vunpack.c.l.b16 %v207
    %v1031 = vunpack.c.h.b16 %v207
    %v1032 = vunpack.c.l.b16 %v208
    %v1033 = vunpack.c.h.b16 %v208
    %v1034 = vunpack.c.l.b16 %v209
    %v1035 = vunpack.c.h.b16 %v209
    %v1036 = vunpack.c.l.b16 %v210
    %v1037 = vunpack.c.h.b16 %v210
    %v1038 = vunpack.c.l.b16 %v211
    %v1039 = vunpack.c.h.b16 %v211
    %v1040 = vunpack.c.l.b16 %v212
    %v1041 = vunpack.c.h.b16 %v212
    %v1042 = vunpack.c.l.b16 %v213
    %v1043 = vunpack.c.h.b16 %v213
    %v1044 = vunpack.c.l.b16 %v214
    %v1045 = vunpack.c.h.b16 %v214
    %v1046 = vunpack.c.l.b16 %v215
    %v1047 = vunpack.c.h.b16 %v215
    %v1048 = vunpack.c.l.b16 %v216
    %v1049 = vunpack.c.h.b16 %v216
    %v1050 = vunpack.c.l.b16 %v217
    %v1051 = vunpack.c.h.b16 %v217
    %v1052 = vunpack.c.l.b16 %v218
    %v1053 = vunpack.c.h.b16 %v218
    %v1054 = vunpack.c.l.b16 %v219
    %v1055 = vunpack.c.h.b16 %v219
    %v1056 = vunpack.c.l.b16 %v220
    %v1057 = vunpack.c.h.b16 %v220
    %v1058 = vunpack.c.l.b16 %v221
    %v1059 = vunpack.c.h.b16 %v221
    %v1060 = vunpack.c.l.b16 %v222
    %v1061 = vunpack.c.h.b16 %v222
    %v1062 = vunpack.c.l.b16 %v223
    %v1063 = vunpack.c.h.b16 %v223
    %v1064 = vunpack.c.l.b16 %v224
    %v1065 = vunpack.c.h.b16 %v224
    %v1066 = vunpack.c.l.b16 %v225
    %v1067 = vunpack.c.h.b16 %v225
    %v1068 = vunpack.c.l.b16 %v226
    %v1069 = vunpack.c.h.b16 %v226
    %v1070 = vunpack.c.l.b16 %v227
    %v1071 = vunpack.c.h.b16 %v227
    %v1072 = vunpack.c.l.b16 %v228
    %v1073 = vunpack.c.h.b16 %v228
    %v1074 = vunpack.c.l.b16 %v229
    %v1075 = vunpack.c.h.b16 %v229
    %v1076 = vunpack.c.l.b16 %v230
    %v1077 = vunpack.c.h.b16 %v230
    %v1078 = vunpack.c.l.b16 %v231
    %v1079 = vunpack.c.h.b16 %v231
    %v1080 = vunpack.c.l.b16 %v232
    %v1081 = vunpack.c.h.b16 %v232
    %v1082 = vunpack.c.l.b16 %v233
    %v1083 = vunpack.c.h.b16 %v233
    %v1084 = vunpack.c.l.b16 %v234
    %v1085 = vunpack.c.h.b16 %v234
    %v1086 = vunpack.c.l.b16 %v235
    %v1087 = vunpack.c.h.b16 %v235
    %v1088 = vunpack.c.l.b16 %v236
    %v1089 = vunpack.c.h.b16 %v236
    %v1090 = vunpack.c.l.b16 %v237
    %v1091 = vunpack.c.h.b16 %v237
    %v1092 = vunpack.c.l.b16 %v238
    %v1093 = vunpack.c.h.b16 %v238
    %v1094 = vunpack.c.l.b16 %v239
    %v1095 = vunpack.c.h.b16 %v239
    %v1096 = vunpack.c.l.b16 %v240
    %v1097 = vunpack.c.h.b16 %v240
    %v1098 = vunpack.c.l.b16 %v241
    %v1099 = vunpack.c.h.b16 %v241
    %v1100 = vunpack.c.l.b16 %v242
    %v1101 = vunpack.c.h.b16 %v242
    %v1102 = vunpack.c.l.b16 %v243
    %v1103 = vunpack.c.h.b16 %v243
    %v1104 = vunpack.c.l.b16 %v244
    %v1105 = vunpack.c.h.b16 %v244
    %v1106 = vunpack.c.l.b16 %v245
    %v1107 = vunpack.c.h.b16 %v245
    %v1108 = vunpack.c.l.b16 %v246
    %v1109 = vunpack.c.h.b16 %v246
    %v1110 = vunpack.c.l.b16 %v247
    %v1111 = vunpack.c.h.b16 %v247
    %v1112 = vunpack.c.l.b16 %v248
    %v1113 = vunpack.c.h.b16 %v248
    %v1114 = vunpack.c.l.b16 %v249
    %v1115 = vunpack.c.h.b16 %v249
    %v1116 = vunpack.c.l.b16 %v250
    %v1117 = vunpack.c.h.b16 %v250
    %v1118 = vunpack.c.l.b16 %v251
    %v1119 = vunpack.c.h.b16 %v251
    %v1120 = vunpack.c.l.b16 %v252
    %v1121 = vunpack.c.h.b16 %v252
    %v1122 = vunpack.c.l.b16 %v253
    %v1123 = vunpack.c.h.b16 %v253
    %v1124 = vunpack.c.l.b16 %v254
    %v1125 = vunpack.c.h.b16 %v254
    %v1126 = vunpack.c.l.b16 %v255
    %v1127 = vunpack.c.h.b16 %v255
    %v1128 = vunpack.c.l.b16 %v256
    %v1129 = vunpack.c.h.b16 %v256
    %v1130 = vunpack.c.l.b16 %v257
    %v1131 = vunpack.c.h.b16 %v257
    %v1132 = vunpack.c.l.b16 %v258
    %v1133 = vunpack.c.h.b16 %v258
    %v1134 = vunpack.c.l.b16 %v259
    %v1135 = vunpack.c.h.b16 %v259
    %v1136 = vunpack.c.l.b16 %v260
    %v1137 = vunpack.c.h.b16 %v260
    %v1138 = vunpack.c.l.b16 %v261
    %v1139 = vunpack.c.h.b16 %v261
    %v1140 = vunpack.c.l.b16 %v262
    %v1141 = vunpack.c.h.b16 %v262
    %v1142 = vunpack.c.l.b16 %v263
    %v1143 = vunpack.c.h.b16 %v263
    %v1144 = vunpack.c.l.b16 %v264
    %v1145 = vunpack.c.h.b16 %v264
    %v1146 = vunpack.c.l.b16 %v265
    %v1147 = vunpack.c.h.b16 %v265
    %v1148 = vunpack.c.l.b16 %v266
    %v1149 = vunpack.c.h.b16 %v266
    %v1150 = vunpack.c.l.b16 %v267
    %v1151 = vunpack.c.h.b16 %v267
    %v1152 = vunpack.c.l.b16 %v268
    %v1153 = vunpack.c.h.b16 %v268
    %v1154 = vunpack.c.l.b16 %v269
    %v1155 = vunpack.c.h.b16 %v269
    %v1156 = vunpack.c.l.b16 %v270
    %v1157 = vunpack.c.h.b16 %v270
    %v1158 = vunpack.c.l.b16 %v271
    %v1159 = vunpack.c.h.b16 %v271
    %v1160 = vunpack.c.l.b16 %v272
    %v1161 = vunpack.c.h.b16 %v272
    %v1162 = vunpack.c.l.b16 %v273
    %v1163 = vunpack.c.h.b16 %v273
    %v1164 = vunpack.c.l.b16 %v274
    %v1165 = vunpack.c.h.b16 %v274
    %v1166 = vunpack.c.l.b16 %v275
    %v1167 = vunpack.c.h.b16 %v275
    %v1168 = vunpack.c.l.b16 %v276
    %v1169 = vunpack.c.h.b16 %v276
    %v1170 = vunpack.c.l.b16 %v277
    %v1171 = vunpack.c.h.b16 %v277
    %v1172 = vunpack.c.l.b16 %v278
    %v1173 = vunpack.c.h.b16 %v278
    %v1174 = vunpack.c.l.b16 %v279
    %v1175 = vunpack.c.h.b16 %v279
    %v1176 = vunpack.c.l.b16 %v280
    %v1177 = vunpack.c.h.b16 %v280
    %v1178 = vunpack.c.l.b16 %v281
    %v1179 = vunpack.c.h.b16 %v281
    %v1180 = vunpack.c.l.b16 %v282
    %v1181 = vunpack.c.h.b16 %v282
    %v1182 = vunpack.c.l.b16 %v283
    %v1183 = vunpack.c.h.b16 %v283
    %v1184 = vunpack.c.l.b16 %v284
    %v1185 = vunpack.c.h.b16 %v284
    %v1186 = vunpack.c.l.b16 %v285
    %v1187 = vunpack.c.h.b16 %v285
    %v1188 = vunpack.c.l.b16 %v286
    %v1189 = vunpack.c.h.b16 %v286
    %v1190 = vunpack.c.l.b16 %v287
    %v1191 = vunpack.c.h.b16 %v287
    %v1192 = vunpack.c.l.b16 %v288
    %v1193 = vunpack.c.h.b16 %v288
    %v1194 = vunpack.c.l.b16 %v289
    %v1195 = vunpack.c.h.b16 %v289
    %v1196 = vunpack.c.l.b16 %v290
    %v1197 = vunpack.c.h.b16 %v290
    %v1198 = vunpack.c.l.b16 %v291
    %v1199 = vunpack.c.h.b16 %v291
    %v1200 = vunpack.c.l.b16 %v292
    %v1201 = vunpack.c.h.b16 %v292
    %v1202 = vunpack.c.l.b16 %v293
    %v1203 = vunpack.c.h.b16 %v293
    %v1204 = vunpack.c.l.b16 %v294
    %v1205 = vunpack.c.h.b16 %v294
    %v1206 = vunpack.c.l.b16 %v295
    %v1207 = vunpack.c.h.b16 %v295
    %v1208 = vunpack.c.l.b16 %v296
    %v1209 = vunpack.c.h.b16 %v296
    %v1210 = vunpack.c.l.b16 %v297
    %v1211 = vunpack.c.h.b16 %v297
    %v1212 = vunpack.c.l.b16 %v298
    %v1213 = vunpack.c.h.b16 %v298
    %v1214 = vunpack.c.l.b16 %v299
    %v1215 = vunpack.c.h.b16 %v299
    %v1216 = vunpack.c.l.b16 %v300
    %v1217 = vunpack.c.h.b16 %v300
    %v1218 = vunpack.c.l.b16 %v301
    %v1219 = vunpack.c.h.b16 %v301
    %v1220 = vunpack.c.l.b16 %v302
    %v1221 = vunpack.c.h.b16 %v302
    %v1222 = vunpack.c.l.b16 %v303
    %v1223 = vunpack.c.h.b16 %v303
    %v1224 = vunpack.c.l.b16 %v304
    %v1225 = vunpack.c.h.b16 %v304
    %v1226 = vunpack.c.l.b16 %v305
    %v1227 = vunpack.c.h.b16 %v305
    %v1228 = vunpack.c.l.b16 %v306
    %v1229 = vunpack.c.h.b16 %v306
    %v1230 = vunpack.c.l.b16 %v307
    %v1231 = vunpack.c.h.b16 %v307
    %v1232 = vunpack.c.l.b16 %v308
    %v1233 = vunpack.c.h.b16 %v308
    %v1234 = vunpack.c.l.b16 %v309
    %v1235 = vunpack.c.h.b16 %v309
    %v1236 = vunpack.c.l.b16 %v310
    %v1237 = vunpack.c.h.b16 %v310
    %v1238 = vunpack.c.l.b16 %v311
    %v1239 = vunpack.c.h.b16 %v311
    %v1240 = vunpack.c.l.b16 %v312
    %v1241 = vunpack.c.h.b16 %v312
    %v1242 = vunpack.c.l.b16 %v313
    %v1243 = vunpack.c.h.b16 %v313
    %v1244 = vunpack.c.l.b16 %v314
    %v1245 = vunpack.c.h.b16 %v314
    %v1246 = vunpack.c.l.b16 %v315
    %v1247 = vunpack.c.h.b16 %v315
    %v1248 = vunpack.c.l.b16 %v316
    %v1249 = vunpack.c.h.b16 %v316
    %v1250 = vunpack.c.l.b16 %v317
    %v1251 = vunpack.c.h.b16 %v317
    %v1252 = vunpack.c.l.b16 %v318
    %v1253 = vunpack.c.h.b16 %v318
    %v1254 = vunpack.c.l.b16 %v319
    %v1255 = vunpack.c.h.b16 %v319
    %v1256 = vunpack.c.l.b16 %v320
    %v1257 = vunpack.c.h.b16 %v320
    %v1258 = vunpack.c.l.b16 %v321
    %v1259 = vunpack.c.h.b16 %v321
    %v1260 = vunpack.c.l.b16 %v322
    %v1261 = vunpack.c.h.b16 %v322
    %v1262 = vunpack.c.l.b16 %v323
    %v1263 = vunpack.c.h.b16 %v323
    %v1264 = vunpack.c.l.b16 %v324
    %v1265 = vunpack.c.h.b16 %v324
    %v1266 = vunpack.c.l.b16 %v325
    %v1267 = vunpack.c.h.b16 %v325
    %v1268 = vunpack.c.l.b16 %v326
    %v1269 = vunpack.c.h.b16 %v326
    %v1270 = vunpack.c.l.b16 %v327
    %v1271 = vunpack.c.h.b16 %v327
    %v1272 = vunpack.c.l.b16 %v328
    %v1273 = vunpack.c.h.b16 %v328
    %v1274 = vunpack.c.l.b16 %v329
    %v1275 = vunpack.c.h.b16 %v329
    %v1276 = vunpack.c.l.b16 %v330
    %v1277 = vunpack.c.h.b16 %v330
    %v1278 = vunpack.c.l.b16 %v331
    %v1279 = vunpack.c.h.b16 %v331
    %v1280 = vunpack.c.l.b16 %v332
    %v1281 = vunpack.c.h.b16 %v332
    %v1282 = vunpack.c.l.b16 %v333
    %v1283 = vunpack.c.h.b16 %v333
    %v1284 = vunpack.c.l.b16 %v334
    %v1285 = vunpack.c.h.b16 %v334
    %v1286 = vunpack.c.l.b16 %v335
    %v1287 = vunpack.c.h.b16 %v335
    %v1288 = vunpack.c.l.b16 %v336
    %v1289 = vunpack.c.h.b16 %v336
    %v1290 = vunpack.c.l.b16 %v337
    %v1291 = vunpack.c.h.b16 %v337
    %v1292 = vunpack.c.l.b16 %v338
    %v1293 = vunpack.c.h.b16 %v338
    %v1294 = vunpack.c.l.b16 %v339
    %v1295 = vunpack.c.h.b16 %v339
    %v1296 = vunpack.c.l.b16 %v340
    %v1297 = vunpack.c.h.b16 %v340
    %v1298 = vunpack.c.l.b16 %v341
    %v1299 = vunpack.c.h.b16 %v341
    %v1300 = vunpack.c.l.b16 %v342
    %v1301 = vunpack.c.h.b16 %v342
    %v1302 = vunpack.c.l.b16 %v343
    %v1303 = vunpack.c.h.b16 %v343
    %v1304 = vunpack.c.l.b16 %v344
    %v1305 = vunpack.c.h.b16 %v344
    %v1306 = vunpack.c.l.b16 %v345
    %v1307 = vunpack.c.h.b16 %v345
    %v1308 = vunpack.c.l.b16 %v346
    %v1309 = vunpack.c.h.b16 %v346
    %v1310 = vunpack.c.l.b16 %v347
    %v1311 = vunpack.c.h.b16 %v347
    %v1312 = vunpack.c.l.b16 %v348
    %v1313 = vunpack.c.h.b16 %v348
    %v1314 = vunpack.c.l.b16 %v349
    %v1315 = vunpack.c.h.b16 %v349
    %v1316 = vunpack.c.l.b16 %v350
    %v1317 = vunpack.c.h.b16 %v350
    %v1318 = vunpack.c.l.b16 %v351
    %v1319 = vunpack.c.h.b16 %v351
    %v1320 = vunpack.c.l.b16 %v352
    %v1321 = vunpack.c.h.b16 %v352
    %v1322 = vunpack.c.l.b16 %v353
    %v1323 = vunpack.c.h.b16 %v353
    %v1324 = vunpack.c.l.b16 %v354
    %v1325 = vunpack.c.h.b16 %v354
    %v1326 = vunpack.c.l.b16 %v355
    %v1327 = vunpack.c.h.b16 %v355
    %v1328 = vunpack.c.l.b16 %v356
    %v1329 = vunpack.c.h.b16 %v356
    %v1330 = vunpack.c.l.b16 %v357
    %v1331 = vunpack.c.h.b16 %v357
    %v1332 = vunpack.c.l.b16 %v358
    %v1333 = vunpack.c.h.b16 %v358
    %v1334 = vunpack.c.l.b16 %v359
    %v1335 = vunpack.c.h.b16 %v359
    %v1336 = vunpack.c.l.b16 %v360
    %v1337 = vunpack.c.h.b16 %v360
    %v1338 = vunpack.c.l.b16 %v361
    %v1339 = vunpack.c.h.b16 %v361
    %v1340 = vunpack.c.l.b16 %v362
    %v1341 = vunpack.c.h.b16 %v362
    %v1342 = vunpack.c.l.b16 %v363
    %v1343 = vunpack.c.h.b16 %v363
    %v1344 = vunpack.c.l.b16 %v364
    %v1345 = vunpack.c.h.b16 %v364
    %v1346 = vunpack.c.l.b16 %v365
    %v1347 = vunpack.c.h.b16 %v365
    %v1348 = vunpack.c.l.b16 %v366
    %v1349 = vunpack.c.h.b16 %v366
    %v1350 = vunpack.c.l.b16 %v367
    %v1351 = vunpack.c.h.b16 %v367
    %v1352 = vunpack.c.l.b16 %v368
    %v1353 = vunpack.c.h.b16 %v368
    %v1354 = vunpack.c.l.b16 %v369
    %v1355 = vunpack.c.h.b16 %v369
    %v1356 = vunpack.c.l.b16 %v370
    %v1357 = vunpack.c.h.b16 %v370
    %v1358 = vunpack.c.l.b16 %v371
    %v1359 = vunpack.c.h.b16 %v371
    %v1360 = vunpack.c.l.b16 %v372
    %v1361 = vunpack.c.h.b16 %v372
    %v1362 = vunpack.c.l.b16 %v373
    %v1363 = vunpack.c.h.b16 %v373
    %v1364 = vunpack.c.l.b16 %v374
    %v1365 = vunpack.c.h.b16 %v374
    %v1366 = vunpack.c.l.b16 %v375
    %v1367 = vunpack.c.h.b16 %v375
    %v1368 = vunpack.c.l.b16 %v376
    %v1369 = vunpack.c.h.b16 %v376
    %v1370 = vunpack.c.l.b16 %v377
    %v1371 = vunpack.c.h.b16 %v377
    %v1372 = vunpack.c.l.b16 %v378
    %v1373 = vunpack.c.h.b16 %v378
    %v1374 = vunpack.c.l.b16 %v379
    %v1375 = vunpack.c.h.b16 %v379
    %v1376 = vunpack.c.l.b16 %v380
    %v1377 = vunpack.c.h.b16 %v380
    %v1378 = vunpack.c.l.b16 %v381
    %v1379 = vunpack.c.h.b16 %v381
    %v1380 = vunpack.c.l.b16 %v382
    %v1381 = vunpack.c.h.b16 %v382
    %v1382 = vunpack.c.l.b16 %v383
    %v1383 = vunpack.c.h.b16 %v383
    %v1384 = vunpack.c.l.b16 %v384
    %v1385 = vunpack.c.h.b16 %v384
    %v1386 = vunpack.c.l.b16 %v385
    %v1387 = vunpack.c.h.b16 %v385
    %v1388 = vunpack.c.l.b16 %v386
    %v1389 = vunpack.c.h.b16 %v386
    %v1390 = vunpack.c.l.b16 %v387
    %v1391 = vunpack.c.h.b16 %v387
    %v1392 = vunpack.c.l.b16 %v388
    %v1393 = vunpack.c.h.b16 %v388
    %v1394 = vunpack.c.l.b16 %v389
    %v1395 = vunpack.c.h.b16 %v389
    %v1396 = vunpack.c.l.b16 %v390
    %v1397 = vunpack.c.h.b16 %v390
    %v1398 = vunpack.c.l.b16 %v391
    %v1399 = vunpack.c.h.b16 %v391
    %v1400 = vunpack.c.l.b16 %v392
    %v1401 = vunpack.c.h.b16 %v392
    %v1402 = vunpack.c.l.b16 %v393
    %v1403 = vunpack.c.h.b16 %v393
    %v1404 = vunpack.c.l.b16 %v394
    %v1405 = vunpack.c.h.b16 %v394
    %v1406 = vunpack.c.l.b16 %v395
    %v1407 = vunpack.c.h.b16 %v395
    %v1408 = vunpack.c.l.b16 %v396
    %v1409 = vunpack.c.h.b16 %v396
    %v1410 = vunpack.c.l.b16 %v397
    %v1411 = vunpack.c.h.b16 %v397
    %v1412 = vpack.c.b16 %v782, %v772
    %v1413 = vpack.c.b16 %v783, %v773
    %v1414 = vpack.c.b16 %v784, %v774
    %v1415 = vpack.c.b16 %v785, %v775
    %v1416 = vpack.c.b16 %v786, %v776
    %v1417 = vpack.c.b16 %v787, %v777
    %v1418 = vpack.c.b16 %v788, %v778
    %v1419 = vpack.c.b16 %v789, %v779
    %v1420 = vpack.c.b16 %v790, %v780
    %v1421 = vpack.c.b16 %v791, %v781
    %v1422 = vpack.c.b16 %v802, %v792
    %v1423 = vpack.c.b16 %v803, %v793
    %v1424 = vpack.c.b16 %v804, %v794
    %v1425 = vpack.c.b16 %v805, %v795
    %v1426 = vpack.c.b16 %v806, %v796
    %v1427 = vpack.c.b16 %v807, %v797
    %v1428 = vpack.c.b16 %v808, %v798
    %v1429 = vpack.c.b16 %v809, %v799
    %v1430 = vpack.c.b16 %v810, %v800
    %v1431 = vpack.c.b16 %v811, %v801
    %v1432 = vpack.c.b16 %v822, %v812
    %v1433 = vpack.c.b16 %v823, %v813
    %v1434 = vpack.c.b16 %v824, %v814
    %v1435 = vpack.c.b16 %v825, %v815
    %v1436 = vpack.c.b16 %v826, %v816
    %v1437 = vpack.c.b16 %v827, %v817
    %v1438 = vpack.c.b16 %v828, %v818
    %v1439 = vpack.c.b16 %v829, %v819
    %v1440 = vpack.c.b16 %v830, %v820
    %v1441 = vpack.c.b16 %v831, %v821
    %v1442 = vpack.c.b16 %v842, %v832
    %v1443 = vpack.c.b16 %v843, %v833
    %v1444 = vpack.c.b16 %v844, %v834
    %v1445 = vpack.c.b16 %v845, %v835
    %v1446 = vpack.c.b16 %v846, %v836
    %v1447 = vpack.c.b16 %v847, %v837
    %v1448 = vpack.c.b16 %v848, %v838
    %v1449 = vpack.c.b16 %v849, %v839
    %v1450 = vpack.c.b16 %v850, %v840
    %v1451 = vpack.c.b16 %v851, %v841
    %v1452 = vpack.c.b16 %v862, %v852
    %v1453 = vpack.c.b16 %v863, %v853
    %v1454 = vpack.c.b16 %v864, %v854
    %v1455 = vpack.c.b16 %v865, %v855
    %v1456 = vpack.c.b16 %v866, %v856
    %v1457 = vpack.c.b16 %v867, %v857
    %v1458 = vpack.c.b16 %v868, %v858
    %v1459 = vpack.c.b16 %v869, %v859
    %v1460 = vpack.c.b16 %v870, %v860
    %v1461 = vpack.c.b16 %v871, %v861
    %v1462 = vpack.c.b16 %v882, %v872
    %v1463 = vpack.c.b16 %v883, %v873
    %v1464 = vpack.c.b16 %v884, %v874
    %v1465 = vpack.c.b16 %v885, %v875
    %v1466 = vpack.c.b16 %v886, %v876
    %v1467 = vpack.c.b16 %v887, %v877
    %v1468 = vpack.c.b16 %v888, %v878
    %v1469 = vpack.c.b16 %v889, %v879
    %v1470 = vpack.c.b16 %v890, %v880
    %v1471 = vpack.c.b16 %v891, %v881
    %v1472 = vpack.c.b16 %v902, %v892
    %v1473 = vpack.c.b16 %v903, %v893
    %v1474 = vpack.c.b16 %v904, %v894
    %v1475 = vpack.c.b16 %v905, %v895
    %v1476 = vpack.c.b16 %v906, %v896
    %v1477 = vpack.c.b16 %v907, %v897
    %v1478 = vpack.c.b16 %v908, %v898
    %v1479 = vpack.c.b16 %v909, %v899
    %v1480 = vpack.c.b16 %v910, %v900
    %v1481 = vpack.c.b16 %v911, %v901
    %v1482 = vpack.c.b16 %v922, %v912
    %v1483 = vpack.c.b16 %v923, %v913
    %v1484 = vpack.c.b16 %v924, %v914
    %v1485 = vpack.c.b16 %v925, %v915
    %v1486 = vpack.c.b16 %v926, %v916
    %v1487 = vpack.c.b16 %v927, %v917
    %v1488 = vpack.c.b16 %v928, %v918
    %v1489 = vpack.c.b16 %v929, %v919
    %v1490 = vpack.c.b16 %v930, %v920
    %v1491 = vpack.c.b16 %v931, %v921
    %v1492 = vpack.c.b16 %v942, %v932
    %v1493 = vpack.c.b16 %v943, %v933
    %v1494 = vpack.c.b16 %v944, %v934
    %v1495 = vpack.c.b16 %v945, %v935
    %v1496 = vpack.c.b16 %v946, %v936
    %v1497 = vpack.c.b16 %v947, %v937
    %v1498 = vpack.c.b16 %v948, %v938
    %v1499 = vpack.c.b16 %v949, %v939
    %v1500 = vpack.c.b16 %v950, %v940
    %v1501 = vpack.c.b16 %v951, %v941
    %v1502 = vpack.c.b16 %v962, %v952
    %v1503 = vpack.c.b16 %v963, %v953
    %v1504 = vpack.c.b16 %v964, %v954
    %v1505 = vpack.c.b16 %v965, %v955
    %v1506 = vpack.c.b16 %v966, %v956
    %v1507 = vpack.c.b16 %v967, %v957
    %v1508 = vpack.c.b16 %v968, %v958
    %v1509 = vpack.c.b16 %v969, %v959
    %v1510 = vpack.c.b16 %v970, %v960
    %v1511 = vpack.c.b16 %v971, %v961
    %v1512 = vpack.c.b16 %v982, %v972
    %v1513 = vpack.c.b16 %v983, %v973
    %v1514 = vpack.c.b16 %v984, %v974
    %v1515 = vpack.c.b16 %v985, %v975
    %v1516 = vpack.c.b16 %v986, %v976
    %v1517 = vpack.c.b16 %v987, %v977
    %v1518 = vpack.c.b16 %v988, %v978
    %v1519 = vpack.c.b16 %v989, %v979
    %v1520 = vpack.c.b16 %v990, %v980
    %v1521 = vpack.c.b16 %v991, %v981
    %v1522 = vpack.c.b16 %v1002, %v992
    %v1523 = vpack.c.b16 %v1003, %v993
    %v1524 = vpack.c.b16 %v1004, %v994
    %v1525 = vpack.c.b16 %v1005, %v995
    %v1526 = vpack.c.b16 %v1006, %v996
    %v1527 = vpack.c.b16 %v1007, %v997
    %v1528 = vpack.c.b16 %v1008, %v998
    %v1529 = vpack.c.b16 %v1009, %v999
    %v1530 = vpack.c.b16 %v1010, %v1000
    %v1531 = vpack.c.b16 %v1011, %v1001
    %v1532 = vpack.c.b16 %v1022, %v1012
    %v1533 = vpack.c.b16 %v1023, %v1013
    %v1534 = vpack.c.b16 %v1024, %v1014
    %v1535 = vpack.c.b16 %v1025, %v1015
    %v1536 = vpack.c.b16 %v1026, %v1016
    %v1537 = vpack.c.b16 %v1027, %v1017
    %v1538 = vpack.c.b16 %v1028, %v1018
    %v1539 = vpack.c.b16 %v1029, %v1019
    %v1540 = vpack.c.b16 %v1030, %v1020
    %v1541 = vpack.c.b16 %v1031, %v1021
    %v1542 = vpack.c.b16 %v1042, %v1032
    %v1543 = vpack.c.b16 %v1043, %v1033
    %v1544 = vpack.c.b16 %v1044, %v1034
    %v1545 = vpack.c.b16 %v1045, %v1035
    %v1546 = vpack.c.b16 %v1046, %v1036
    %v1547 = vpack.c.b16 %v1047, %v1037
    %v1548 = vpack.c.b16 %v1048, %v1038
    %v1549 = vpack.c.b16 %v1049, %v1039
    %v1550 = vpack.c.b16 %v1050, %v1040
    %v1551 = vpack.c.b16 %v1051, %v1041
    %v1552 = vpack.c.b16 %v1062, %v1052
    %v1553 = vpack.c.b16 %v1063, %v1053
    %v1554 = vpack.c.b16 %v1064, %v1054
    %v1555 = vpack.c.b16 %v1065, %v1055
    %v1556 = vpack.c.b16 %v1066, %v1056
    %v1557 = vpack.c.b16 %v1067, %v1057
    %v1558 = vpack.c.b16 %v1068, %v1058
    %v1559 = vpack.c.b16 %v1069, %v1059
    %v1560 = vpack.c.b16 %v1070, %v1060
    %v1561 = vpack.c.b16 %v1071, %v1061
    %v1562 = vpack.c.b16 %v1082, %v1072
    %v1563 = vpack.c.b16 %v1083, %v1073
    %v1564 = vpack.c.b16 %v1084, %v1074
    %v1565 = vpack.c.b16 %v1085, %v1075
    %v1566 = vpack.c.b16 %v1086, %v1076
    %v1567 = vpack.c.b16 %v1087, %v1077
    %v1568 = vpack.c.b16 %v1088, %v1078
    %v1569 = vpack.c.b16 %v1089, %v1079
    %v1570 = vpack.c.b16 %v1090, %v1080
    %v1571 = vpack.c.b16 %v1091, %v1081
    %v1572 = vpack.c.b16 %v1102, %v1092
    %v1573 = vpack.c.b16 %v1103, %v1093
    %v1574 = vpack.c.b16 %v1104, %v1094
    %v1575 = vpack.c.b16 %v1105, %v1095
    %v1576 = vpack.c.b16 %v1106, %v1096
    %v1577 = vpack.c.b16 %v1107, %v1097
    %v1578 = vpack.c.b16 %v1108, %v1098
    %v1579 = vpack.c.b16 %v1109, %v1099
    %v1580 = vpack.c.b16 %v1110, %v1100
    %v1581 = vpack.c.b16 %v1111, %v1101
    %v1582 = vpack.c.b16 %v1122, %v1112
    %v1583 = vpack.c.b16 %v1123, %v1113
    %v1584 = vpack.c.b16 %v1124, %v1114
    %v1585 = vpack.c.b16 %v1125, %v1115
    %v1586 = vpack.c.b16 %v1126, %v1116
    %v1587 = vpack.c.b16 %v1127, %v1117
    %v1588 = vpack.c.b16 %v1128, %v1118
    %v1589 = vpack.c.b16 %v1129, %v1119
    %v1590 = vpack.c.b16 %v1130, %v1120
    %v1591 = vpack.c.b16 %v1131, %v1121
    %v1592 = vpack.c.b16 %v1142, %v1132
    %v1593 = vpack.c.b16 %v1143, %v1133
    %v1594 = vpack.c.b16 %v1144, %v1134
    %v1595 = vpack.c.b16 %v1145, %v1135
    %v1596 = vpack.c.b16 %v1146, %v1136
    %v1597 = vpack.c.b16 %v1147, %v1137
    %v1598 = vpack.c.b16 %v1148, %v1138
    %v1599 = vpack.c.b16 %v1149, %v1139
    %v1600 = vpack.c.b16 %v1150, %v1140
    %v1601 = vpack.c.b16 %v1151, %v1141
    %v1602 = vpack.c.b16 %v1162, %v1152
    %v1603 = vpack.c.b16 %v1163, %v1153
    %v1604 = vpack.c.b16 %v1164, %v1154
    %v1605 = vpack.c.b16 %v1165, %v1155
    %v1606 = vpack.c.b16 %v1166, %v1156
    %v1607 = vpack.c.b16 %v1167, %v1157
    %v1608 = vpack.c.b16 %v1168, %v1158
    %v1609 = vpack.c.b16 %v1169, %v1159
    %v1610 = vpack.c.b16 %v1170, %v1160
    %v1611 = vpack.c.b16 %v1171, %v1161
    %v1612 = vpack.c.b16 %v1182, %v1172
    %v1613 = vpack.c.b16 %v1183, %v1173
    %v1614 = vpack.c.b16 %v1184, %v1174
    %v1615 = vpack.c.b16 %v1185, %v1175
    %v1616 = vpack.c.b16 %v1186, %v1176
    %v1617 = vpack.c.b16 %v1187, %v1177
    %v1618 = vpack.c.b16 %v1188, %v1178
    %v1619 = vpack.c.b16 %v1189, %v1179
    %v1620 = vpack.c.b16 %v1190, %v1180
    %v1621 = vpack.c.b16 %v1191, %v1181
    %v1622 = vpack.c.b16 %v1202, %v1192
    %v1623 = vpack.c.b16 %v1203, %v1193
    %v1624 = vpack.c.b16 %v1204, %v1194
    %v1625 = vpack.c.b16 %v1205, %v1195
    %v1626 = vpack.c.b16 %v1206, %v1196
    %v1627 = vpack.c.b16 %v1207, %v1197
    %v1628 = vpack.c.b16 %v1208, %v1198
    %v1629 = vpack.c.b16 %v1209, %v1199
    %v1630 = vpack.c.b16 %v1210, %v1200
    %v1631 = vpack.c.b16 %v1211, %v1201
    %v1632 = vpack.c.b16 %v1222, %v1212
    %v1633 = vpack.c.b16 %v1223, %v1213
    %v1634 = vpack.c.b16 %v1224, %v1214
    %v1635 = vpack.c.b16 %v1225, %v1215
    %v1636 = vpack.c.b16 %v1226, %v1216
    %v1637 = vpack.c.b16 %v1227, %v1217
    %v1638 = vpack.c.b16 %v1228, %v1218
    %v1639 = vpack.c.b16 %v1229, %v1219
    %v1640 = vpack.c.b16 %v1230, %v1220
    %v1641 = vpack.c.b16 %v1231, %v1221
    %v1642 = vpack.c.b16 %v1242, %v1232
    %v1643 = vpack.c.b16 %v1243, %v1233
    %v1644 = vpack.c.b16 %v1244, %v1234
    %v1645 = vpack.c.b16 %v1245, %v1235
    %v1646 = vpack.c.b16 %v1246, %v1236
    %v1647 = vpack.c.b16 %v1247, %v1237
    %v1648 = vpack.c.b16 %v1248, %v1238
    %v1649 = vpack.c.b16 %v1249, %v1239
    %v1650 = vpack.c.b16 %v1250, %v1240
    %v1651 = vpack.c.b16 %v1251, %v1241
    %v1652 = vpack.c.b16 %v1262, %v1252
    %v1653 = vpack.c.b16 %v1263, %v1253
    %v1654 = vpack.c.b16 %v1264, %v1254
    %v1655 = vpack.c.b16 %v1265, %v1255
    %v1656 = vpack.c.b16 %v1266, %v1256
    %v1657 = vpack.c.b16 %v1267, %v1257
    %v1658 = vpack.c.b16 %v1268, %v1258
    %v1659 = vpack.c.b16 %v1269, %v1259
    %v1660 = vpack.c.b16 %v1270, %v1260
    %v1661 = vpack.c.b16 %v1271, %v1261
    %v1662 = vpack.c.b16 %v1282, %v1272
    %v1663 = vpack.c.b16 %v1283, %v1273
    %v1664 = vpack.c.b16 %v1284, %v1274
    %v1665 = vpack.c.b16 %v1285, %v1275
    %v1666 = vpack.c.b16 %v1286, %v1276
    %v1667 = vpack.c.b16 %v1287, %v1277
    %v1668 = vpack.c.b16 %v1288, %v1278
    %v1669 = vpack.c.b16 %v1289, %v1279
    %v1670 = vpack.c.b16 %v1290, %v1280
    %v1671 = vpack.c.b16 %v1291, %v1281
    %v1672 = vpack.c.b16 %v1302, %v1292
    %v1673 = vpack.c.b16 %v1303, %v1293
    %v1674 = vpack.c.b16 %v1304, %v1294
    %v1675 = vpack.c.b16 %v1305, %v1295
    %v1676 = vpack.c.b16 %v1306, %v1296
    %v1677 = vpack.c.b16 %v1307, %v1297
    %v1678 = vpack.c.b16 %v1308, %v1298
    %v1679 = vpack.c.b16 %v1309, %v1299
    %v1680 = vpack.c.b16 %v1310, %v1300
    %v1681 = vpack.c.b16 %v1311, %v1301
    %v1682 = vpack.c.b16 %v1322, %v1312
    %v1683 = vpack.c.b16 %v1323, %v1313
    %v1684 = vpack.c.b16 %v1324, %v1314
    %v1685 = vpack.c.b16 %v1325, %v1315
    %v1686 = vpack.c.b16 %v1326, %v1316
    %v1687 = vpack.c.b16 %v1327, %v1317
    %v1688 = vpack.c.b16 %v1328, %v1318
    %v1689 = vpack.c.b16 %v1329, %v1319
    %v1690 = vpack.c.b16 %v1330, %v1320
    %v1691 = vpack.c.b16 %v1331, %v1321
    %v1692 = vpack.c.b16 %v1342, %v1332
    %v1693 = vpack.c.b16 %v1343, %v1333
    %v1694 = vpack.c.b16 %v1344, %v1334
    %v1695 = vpack.c.b16 %v1345, %v1335
    %v1696 = vpack.c.b16 %v1346, %v1336
    %v1697 = vpack.c.b16 %v1347, %v1337
    %v1698 = vpack.c.b16 %v1348, %v1338
    %v1699 = vpack.c.b16 %v1349, %v1339
    %v1700 = vpack.c.b16 %v1350, %v1340
    %v1701 = vpack.c.b16 %v1351, %v1341
    %v1702 = vpack.c.b16 %v1362, %v1352
    %v1703 = vpack.c.b16 %v1363, %v1353
    %v1704 = vpack.c.b16 %v1364, %v1354
    %v1705 = vpack.c.b16 %v1365, %v1355
    %v1706 = vpack.c.b16 %v1366, %v1356
    %v1707 = vpack.c.b16 %v1367, %v1357
    %v1708 = vpack.c.b16 %v1368, %v1358
    %v1709 = vpack.c.b16 %v1369, %v1359
    %v1710 = vpack.c.b16 %v1370, %v1360
    %v1711 = vpack.c.b16 %v1371, %v1361
    %v1712 = vpack.c.b16 %v1382, %v1372
    %v1713 = vpack.c.b16 %v1383, %v1373
    %v1714 = vpack.c.b16 %v1384, %v1374
    %v1715 = vpack.c.b16 %v1385, %v1375
    %v1716 = vpack.c.b16 %v1386, %v1376
    %v1717 = vpack.c.b16 %v1387, %v1377
    %v1718 = vpack.c.b16 %v1388, %v1378
    %v1719 = vpack.c.b16 %v1389, %v1379
    %v1720 = vpack.c.b16 %v1390, %v1380
    %v1721 = vpack.c.b16 %v1391, %v1381
    %v1722 = vpack.c.b16 %v1402, %v1392
    %v1723 = vpack.c.b16 %v1403, %v1393
    %v1724 = vpack.c.b16 %v1404, %v1394
    %v1725 = vpack.c.b16 %v1405, %v1395
    %v1726 = vpack.c.b16 %v1406, %v1396
    %v1727 = vpack.c.b16 %v1407, %v1397
    %v1728 = vpack.c.b16 %v1408, %v1398
    %v1729 = vpack.c.b16 %v1409, %v1399
    %v1730 = vpack.c.b16 %v1410, %v1400
    %v1731 = vpack.c.b16 %v1411, %v1401
    %2052 = vmatprep.subr.bf16.mxu0 %v1483
    %2053 = vmatpush1.bf16.msra.mxu0 %v1482
    %2054 = vmatprep.subr.bf16.mxu0 %v1473
    %2055 = vmatpush1.bf16.msra.mxu0 %v1472
    %2056 = vmatprep.subr.bf16.mxu0 %v1463
    %2057 = vmatpush1.bf16.msra.mxu0 %v1462
    %2058 = vmatprep.subr.bf16.mxu0 %v1453
    %2059 = vmatpush1.bf16.msra.mxu0 %v1452
    %2060 = vmatprep.subr.bf16.mxu0 %v1443
    %2061 = vmatpush1.bf16.msra.mxu0 %v1442
    %2062 = vmatprep.subr.bf16.mxu0 %v1433
    %2063 = vmatpush1.bf16.msra.mxu0 %v1432
    %2064 = vmatprep.subr.bf16.mxu0 %v1423
    %2065 = vmatpush1.bf16.msra.mxu0 %v1422
    %2066 = vmatprep.subr.bf16.mxu0 %v1413
    %2067 = vmatpush1.bf16.msra.mxu0 %v1412
    %2068 = vmatprep.subr.bf16.mxu0 %v1563
    %2069 = vmatpush2.bf16.msra.mxu0 %v1562
    %2070 = vmatprep.subr.bf16.mxu0 %v1553
    %2071 = vmatpush2.bf16.msra.mxu0 %v1552
    %2072 = vmatprep.subr.bf16.mxu0 %v1543
    %2073 = vmatpush2.bf16.msra.mxu0 %v1542
    %2074 = vmatprep.subr.bf16.mxu0 %v1533
    %2075 = vmatpush2.bf16.msra.mxu0 %v1532
    %2076 = vmatprep.subr.bf16.mxu0 %v1523
    %2077 = vmatpush2.bf16.msra.mxu0 %v1522
    %2078 = vmatprep.subr.bf16.mxu0 %v1513
    %2079 = vmatpush2.bf16.msra.mxu0 %v1512
    %2080 = vmatprep.subr.bf16.mxu0 %v1503
    %2081 = vmatpush2.bf16.msra.mxu0 %v1502
    %2082 = vmatprep.subr.bf16.mxu0 %v1493
    %2083 = vmatpush2.bf16.msra.mxu0 %v1492
    %2084 = vmatprep.mubr.bf16.mxu0 %v75
    %2085 = vmatmul.mubr.bf16.gmra.mxu0 %v74
    %v2086 = vpop.f32.mrf.mxu0
    %v2087 = vadd.f32 %v405, %v2086
    %v2088 = vpop.f32.mrf.mxu0
    %v2089 = vadd.f32 %v409, %v2088
    %v2090 = vpop.f32.mrf.mxu0
    %v2091 = vpop.f32.mrf.mxu0
    %2092 = vdwg.mxu0
    %2093 = vmatprep.subr.bf16.mxu0 %v1643
    %2094 = vmatpush1.bf16.msra.mxu0 %v1642
    %2095 = vmatprep.subr.bf16.mxu0 %v1633
    %2096 = vmatpush1.bf16.msra.mxu0 %v1632
    %2097 = vmatprep.subr.bf16.mxu0 %v1623
    %2098 = vmatpush1.bf16.msra.mxu0 %v1622
    %2099 = vmatprep.subr.bf16.mxu0 %v1613
    %2100 = vmatpush1.bf16.msra.mxu0 %v1612
    %2101 = vmatprep.subr.bf16.mxu0 %v1603
    %2102 = vmatpush1.bf16.msra.mxu0 %v1602
    %2103 = vmatprep.subr.bf16.mxu0 %v1593
    %2104 = vmatpush1.bf16.msra.mxu0 %v1592
    %2105 = vmatprep.subr.bf16.mxu0 %v1583
    %2106 = vmatpush1.bf16.msra.mxu0 %v1582
    %2107 = vmatprep.subr.bf16.mxu0 %v1573
    %2108 = vmatpush1.bf16.msra.mxu0 %v1572
    %2109 = vmatprep.subr.bf16.mxu0 %v1723
    %2110 = vmatpush2.bf16.msra.mxu0 %v1722
    %2111 = vmatprep.subr.bf16.mxu0 %v1713
    %2112 = vmatpush2.bf16.msra.mxu0 %v1712
    %2113 = vmatprep.subr.bf16.mxu0 %v1703
    %2114 = vmatpush2.bf16.msra.mxu0 %v1702
    %2115 = vmatprep.subr.bf16.mxu0 %v1693
    %2116 = vmatpush2.bf16.msra.mxu0 %v1692
    %2117 = vmatprep.subr.bf16.mxu0 %v1683
    %2118 = vmatpush2.bf16.msra.mxu0 %v1682
    %2119 = vmatprep.subr.bf16.mxu0 %v1673
    %2120 = vmatpush2.bf16.msra.mxu0 %v1672
    %2121 = vmatprep.subr.bf16.mxu0 %v1663
    %2122 = vmatpush2.bf16.msra.mxu0 %v1662
    %2123 = vmatprep.subr.bf16.mxu0 %v1653
    %2124 = vmatpush2.bf16.msra.mxu0 %v1652
    %2125 = vmatprep.mubr.bf16.mxu0 %v77
    %2126 = vmatmul.mubr.bf16.gmra.mxu0 %v76
    %v2127 = vpop.f32.mrf.mxu0
    %v2128 = vadd.f32 %v2087, %v2127
    %v2129 = vpop.f32.mrf.mxu0
    %v2130 = vadd.f32 %v2089, %v2129
    %v2131 = vpop.f32.mrf.mxu0
    %v2132 = vpop.f32.mrf.mxu0
    %2133 = vdwg.mxu0
    %2134 = vmatprep.subr.bf16.mxu0 %v1485
    %2135 = vmatpush1.bf16.msra.mxu0 %v1484
    %2136 = vmatprep.subr.bf16.mxu0 %v1475
    %2137 = vmatpush1.bf16.msra.mxu0 %v1474
    %2138 = vmatprep.subr.bf16.mxu0 %v1465
    %2139 = vmatpush1.bf16.msra.mxu0 %v1464
    %2140 = vmatprep.subr.bf16.mxu0 %v1455
    %2141 = vmatpush1.bf16.msra.mxu0 %v1454
    %2142 = vmatprep.subr.bf16.mxu0 %v1445
    %2143 = vmatpush1.bf16.msra.mxu0 %v1444
    %2144 = vmatprep.subr.bf16.mxu0 %v1435
    %2145 = vmatpush1.bf16.msra.mxu0 %v1434
    %2146 = vmatprep.subr.bf16.mxu0 %v1425
    %2147 = vmatpush1.bf16.msra.mxu0 %v1424
    %2148 = vmatprep.subr.bf16.mxu0 %v1415
    %2149 = vmatpush1.bf16.msra.mxu0 %v1414
    %2150 = vmatprep.subr.bf16.mxu0 %v1565
    %2151 = vmatpush2.bf16.msra.mxu0 %v1564
    %2152 = vmatprep.subr.bf16.mxu0 %v1555
    %2153 = vmatpush2.bf16.msra.mxu0 %v1554
    %2154 = vmatprep.subr.bf16.mxu0 %v1545
    %2155 = vmatpush2.bf16.msra.mxu0 %v1544
    %2156 = vmatprep.subr.bf16.mxu0 %v1535
    %2157 = vmatpush2.bf16.msra.mxu0 %v1534
    %2158 = vmatprep.subr.bf16.mxu0 %v1525
    %2159 = vmatpush2.bf16.msra.mxu0 %v1524
    %2160 = vmatprep.subr.bf16.mxu0 %v1515
    %2161 = vmatpush2.bf16.msra.mxu0 %v1514
    %2162 = vmatprep.subr.bf16.mxu0 %v1505
    %2163 = vmatpush2.bf16.msra.mxu0 %v1504
    %2164 = vmatprep.subr.bf16.mxu0 %v1495
    %2165 = vmatpush2.bf16.msra.mxu0 %v1494
    %2166 = vmatprep.mubr.bf16.mxu0 %v75
    %2167 = vmatmul.mubr.bf16.gmra.mxu0 %v74
    %v2168 = vpop.f32.mrf.mxu0
    %v2169 = vadd.f32 %v413, %v2168
    %v2170 = vpop.f32.mrf.mxu0
    %v2171 = vadd.f32 %v417, %v2170
    %v2172 = vpop.f32.mrf.mxu0
    %v2173 = vpop.f32.mrf.mxu0
    %2174 = vdwg.mxu0
    %2175 = vmatprep.subr.bf16.mxu0 %v1645
    %2176 = vmatpush1.bf16.msra.mxu0 %v1644
    %2177 = vmatprep.subr.bf16.mxu0 %v1635
    %2178 = vmatpush1.bf16.msra.mxu0 %v1634
    %2179 = vmatprep.subr.bf16.mxu0 %v1625
    %2180 = vmatpush1.bf16.msra.mxu0 %v1624
    %2181 = vmatprep.subr.bf16.mxu0 %v1615
    %2182 = vmatpush1.bf16.msra.mxu0 %v1614
    %2183 = vmatprep.subr.bf16.mxu0 %v1605
    %2184 = vmatpush1.bf16.msra.mxu0 %v1604
    %2185 = vmatprep.subr.bf16.mxu0 %v1595
    %2186 = vmatpush1.bf16.msra.mxu0 %v1594
    %2187 = vmatprep.subr.bf16.mxu0 %v1585
    %2188 = vmatpush1.bf16.msra.mxu0 %v1584
    %2189 = vmatprep.subr.bf16.mxu0 %v1575
    %2190 = vmatpush1.bf16.msra.mxu0 %v1574
    %2191 = vmatprep.subr.bf16.mxu0 %v1725
    %2192 = vmatpush2.bf16.msra.mxu0 %v1724
    %2193 = vmatprep.subr.bf16.mxu0 %v1715
    %2194 = vmatpush2.bf16.msra.mxu0 %v1714
    %2195 = vmatprep.subr.bf16.mxu0 %v1705
    %2196 = vmatpush2.bf16.msra.mxu0 %v1704
    %2197 = vmatprep.subr.bf16.mxu0 %v1695
    %2198 = vmatpush2.bf16.msra.mxu0 %v1694
    %2199 = vmatprep.subr.bf16.mxu0 %v1685
    %2200 = vmatpush2.bf16.msra.mxu0 %v1684
    %2201 = vmatprep.subr.bf16.mxu0 %v1675
    %2202 = vmatpush2.bf16.msra.mxu0 %v1674
    %2203 = vmatprep.subr.bf16.mxu0 %v1665
    %2204 = vmatpush2.bf16.msra.mxu0 %v1664
    %2205 = vmatprep.subr.bf16.mxu0 %v1655
    %2206 = vmatpush2.bf16.msra.mxu0 %v1654
    %2207 = vmatprep.mubr.bf16.mxu0 %v77
    %2208 = vmatmul.mubr.bf16.gmra.mxu0 %v76
    %v2209 = vpop.f32.mrf.mxu0
    %v2210 = vadd.f32 %v2169, %v2209
    %v2211 = vpop.f32.mrf.mxu0
    %v2212 = vadd.f32 %v2171, %v2211
    %v2213 = vpop.f32.mrf.mxu0
    %v2214 = vpop.f32.mrf.mxu0
    %2215 = vdwg.mxu0
    %2216 = vmatprep.subr.bf16.mxu0 %v1487
    %2217 = vmatpush1.bf16.msra.mxu0 %v1486
    %2218 = vmatprep.subr.bf16.mxu0 %v1477
    %2219 = vmatpush1.bf16.msra.mxu0 %v1476
    %2220 = vmatprep.subr.bf16.mxu0 %v1467
    %2221 = vmatpush1.bf16.msra.mxu0 %v1466
    %2222 = vmatprep.subr.bf16.mxu0 %v1457
    %2223 = vmatpush1.bf16.msra.mxu0 %v1456
    %2224 = vmatprep.subr.bf16.mxu0 %v1447
    %2225 = vmatpush1.bf16.msra.mxu0 %v1446
    %2226 = vmatprep.subr.bf16.mxu0 %v1437
    %2227 = vmatpush1.bf16.msra.mxu0 %v1436
    %2228 = vmatprep.subr.bf16.mxu0 %v1427
    %2229 = vmatpush1.bf16.msra.mxu0 %v1426
    %2230 = vmatprep.subr.bf16.mxu0 %v1417
    %2231 = vmatpush1.bf16.msra.mxu0 %v1416
    %2232 = vmatprep.subr.bf16.mxu0 %v1567
    %2233 = vmatpush2.bf16.msra.mxu0 %v1566
    %2234 = vmatprep.subr.bf16.mxu0 %v1557
    %2235 = vmatpush2.bf16.msra.mxu0 %v1556
    %2236 = vmatprep.subr.bf16.mxu0 %v1547
    %2237 = vmatpush2.bf16.msra.mxu0 %v1546
    %2238 = vmatprep.subr.bf16.mxu0 %v1537
    %2239 = vmatpush2.bf16.msra.mxu0 %v1536
    %2240 = vmatprep.subr.bf16.mxu0 %v1527
    %2241 = vmatpush2.bf16.msra.mxu0 %v1526
    %2242 = vmatprep.subr.bf16.mxu0 %v1517
    %2243 = vmatpush2.bf16.msra.mxu0 %v1516
    %2244 = vmatprep.subr.bf16.mxu0 %v1507
    %2245 = vmatpush2.bf16.msra.mxu0 %v1506
    %2246 = vmatprep.subr.bf16.mxu0 %v1497
    %2247 = vmatpush2.bf16.msra.mxu0 %v1496
    %2248 = vmatprep.mubr.bf16.mxu0 %v75
    %2249 = vmatmul.mubr.bf16.gmra.mxu0 %v74
    %v2250 = vpop.f32.mrf.mxu0
    %v2251 = vadd.f32 %v421, %v2250
    %v2252 = vpop.f32.mrf.mxu0
    %v2253 = vadd.f32 %v425, %v2252
    %v2254 = vpop.f32.mrf.mxu0
    %v2255 = vpop.f32.mrf.mxu0
    %2256 = vdwg.mxu0
    %2257 = vmatprep.subr.bf16.mxu0 %v1647
    %2258 = vmatpush1.bf16.msra.mxu0 %v1646
    %2259 = vmatprep.subr.bf16.mxu0 %v1637
    %2260 = vmatpush1.bf16.msra.mxu0 %v1636
    %2261 = vmatprep.subr.bf16.mxu0 %v1627
    %2262 = vmatpush1.bf16.msra.mxu0 %v1626
    %2263 = vmatprep.subr.bf16.mxu0 %v1617
    %2264 = vmatpush1.bf16.msra.mxu0 %v1616
    %2265 = vmatprep.subr.bf16.mxu0 %v1607
    %2266 = vmatpush1.bf16.msra.mxu0 %v1606
    %2267 = vmatprep.subr.bf16.mxu0 %v1597
    %2268 = vmatpush1.bf16.msra.mxu0 %v1596
    %2269 = vmatprep.subr.bf16.mxu0 %v1587
    %2270 = vmatpush1.bf16.msra.mxu0 %v1586
    %2271 = vmatprep.subr.bf16.mxu0 %v1577
    %2272 = vmatpush1.bf16.msra.mxu0 %v1576
    %2273 = vmatprep.subr.bf16.mxu0 %v1727
    %2274 = vmatpush2.bf16.msra.mxu0 %v1726
    %2275 = vmatprep.subr.bf16.mxu0 %v1717
    %2276 = vmatpush2.bf16.msra.mxu0 %v1716
    %2277 = vmatprep.subr.bf16.mxu0 %v1707
    %2278 = vmatpush2.bf16.msra.mxu0 %v1706
    %2279 = vmatprep.subr.bf16.mxu0 %v1697
    %2280 = vmatpush2.bf16.msra.mxu0 %v1696
    %2281 = vmatprep.subr.bf16.mxu0 %v1687
    %2282 = vmatpush2.bf16.msra.mxu0 %v1686
    %2283 = vmatprep.subr.bf16.mxu0 %v1677
    %2284 = vmatpush2.bf16.msra.mxu0 %v1676
    %2285 = vmatprep.subr.bf16.mxu0 %v1667
    %2286 = vmatpush2.bf16.msra.mxu0 %v1666
    %2287 = vmatprep.subr.bf16.mxu0 %v1657
    %2288 = vmatpush2.bf16.msra.mxu0 %v1656
    %2289 = vmatprep.mubr.bf16.mxu0 %v77
    %2290 = vmatmul.mubr.bf16.gmra.mxu0 %v76
    %v2291 = vpop.f32.mrf.mxu0
    %v2292 = vadd.f32 %v2251, %v2291
    %v2293 = vpop.f32.mrf.mxu0
    %v2294 = vadd.f32 %v2253, %v2293
    %v2295 = vpop.f32.mrf.mxu0
    %v2296 = vpop.f32.mrf.mxu0
    %2297 = vdwg.mxu0
    %2298 = vmatprep.subr.bf16.mxu0 %v1489
    %2299 = vmatpush1.bf16.msra.mxu0 %v1488
    %2300 = vmatprep.subr.bf16.mxu0 %v1479
    %2301 = vmatpush1.bf16.msra.mxu0 %v1478
    %2302 = vmatprep.subr.bf16.mxu0 %v1469
    %2303 = vmatpush1.bf16.msra.mxu0 %v1468
    %2304 = vmatprep.subr.bf16.mxu0 %v1459
    %2305 = vmatpush1.bf16.msra.mxu0 %v1458
    %2306 = vmatprep.subr.bf16.mxu0 %v1449
    %2307 = vmatpush1.bf16.msra.mxu0 %v1448
    %2308 = vmatprep.subr.bf16.mxu0 %v1439
    %2309 = vmatpush1.bf16.msra.mxu0 %v1438
    %2310 = vmatprep.subr.bf16.mxu0 %v1429
    %2311 = vmatpush1.bf16.msra.mxu0 %v1428
    %2312 = vmatprep.subr.bf16.mxu0 %v1419
    %2313 = vmatpush1.bf16.msra.mxu0 %v1418
    %2314 = vmatprep.subr.bf16.mxu0 %v1569
    %2315 = vmatpush2.bf16.msra.mxu0 %v1568
    %2316 = vmatprep.subr.bf16.mxu0 %v1559
    %2317 = vmatpush2.bf16.msra.mxu0 %v1558
    %2318 = vmatprep.subr.bf16.mxu0 %v1549
    %2319 = vmatpush2.bf16.msra.mxu0 %v1548
    %2320 = vmatprep.subr.bf16.mxu0 %v1539
    %2321 = vmatpush2.bf16.msra.mxu0 %v1538
    %2322 = vmatprep.subr.bf16.mxu0 %v1529
    %2323 = vmatpush2.bf16.msra.mxu0 %v1528
    %2324 = vmatprep.subr.bf16.mxu0 %v1519
    %2325 = vmatpush2.bf16.msra.mxu0 %v1518
    %2326 = vmatprep.subr.bf16.mxu0 %v1509
    %2327 = vmatpush2.bf16.msra.mxu0 %v1508
    %2328 = vmatprep.subr.bf16.mxu0 %v1499
    %2329 = vmatpush2.bf16.msra.mxu0 %v1498
    %2330 = vmatprep.mubr.bf16.mxu0 %v75
    %2331 = vmatmul.mubr.bf16.gmra.mxu0 %v74
    %v2332 = vpop.f32.mrf.mxu0
    %v2333 = vadd.f32 %v429, %v2332
    %v2334 = vpop.f32.mrf.mxu0
    %v2335 = vadd.f32 %v433, %v2334
    %v2336 = vpop.f32.mrf.mxu0
    %v2337 = vpop.f32.mrf.mxu0
    %2338 = vdwg.mxu0
    %2339 = vmatprep.subr.bf16.mxu0 %v1649
    %2340 = vmatpush1.bf16.msra.mxu0 %v1648
    %2341 = vmatprep.subr.bf16.mxu0 %v1639
    %2342 = vmatpush1.bf16.msra.mxu0 %v1638
    %2343 = vmatprep.subr.bf16.mxu0 %v1629
    %2344 = vmatpush1.bf16.msra.mxu0 %v1628
    %2345 = vmatprep.subr.bf16.mxu0 %v1619
    %2346 = vmatpush1.bf16.msra.mxu0 %v1618
    %2347 = vmatprep.subr.bf16.mxu0 %v1609
    %2348 = vmatpush1.bf16.msra.mxu0 %v1608
    %2349 = vmatprep.subr.bf16.mxu0 %v1599
    %2350 = vmatpush1.bf16.msra.mxu0 %v1598
    %2351 = vmatprep.subr.bf16.mxu0 %v1589
    %2352 = vmatpush1.bf16.msra.mxu0 %v1588
    %2353 = vmatprep.subr.bf16.mxu0 %v1579
    %2354 = vmatpush1.bf16.msra.mxu0 %v1578
    %2355 = vmatprep.subr.bf16.mxu0 %v1729
    %2356 = vmatpush2.bf16.msra.mxu0 %v1728
    %2357 = vmatprep.subr.bf16.mxu0 %v1719
    %2358 = vmatpush2.bf16.msra.mxu0 %v1718
    %2359 = vmatprep.subr.bf16.mxu0 %v1709
    %2360 = vmatpush2.bf16.msra.mxu0 %v1708
    %2361 = vmatprep.subr.bf16.mxu0 %v1699
    %2362 = vmatpush2.bf16.msra.mxu0 %v1698
    %2363 = vmatprep.subr.bf16.mxu0 %v1689
    %2364 = vmatpush2.bf16.msra.mxu0 %v1688
    %2365 = vmatprep.subr.bf16.mxu0 %v1679
    %2366 = vmatpush2.bf16.msra.mxu0 %v1678
    %2367 = vmatprep.subr.bf16.mxu0 %v1669
    %2368 = vmatpush2.bf16.msra.mxu0 %v1668
    %2369 = vmatprep.subr.bf16.mxu0 %v1659
    %2370 = vmatpush2.bf16.msra.mxu0 %v1658
    %2371 = vmatprep.mubr.bf16.mxu0 %v77
    %2372 = vmatmul.mubr.bf16.gmra.mxu0 %v76
    %v2373 = vpop.f32.mrf.mxu0
    %v2374 = vadd.f32 %v2333, %v2373
    %v2375 = vpop.f32.mrf.mxu0
    %v2376 = vadd.f32 %v2335, %v2375
    %v2377 = vpop.f32.mrf.mxu0
    %v2378 = vpop.f32.mrf.mxu0
    %2379 = vdwg.mxu0
    %2380 = vmatprep.subr.bf16.mxu0 %v1491
    %2381 = vmatpush1.bf16.msra.mxu0 %v1490
    %2382 = vmatprep.subr.bf16.mxu0 %v1481
    %2383 = vmatpush1.bf16.msra.mxu0 %v1480
    %2384 = vmatprep.subr.bf16.mxu0 %v1471
    %2385 = vmatpush1.bf16.msra.mxu0 %v1470
    %2386 = vmatprep.subr.bf16.mxu0 %v1461
    %2387 = vmatpush1.bf16.msra.mxu0 %v1460
    %2388 = vmatprep.subr.bf16.mxu0 %v1451
    %2389 = vmatpush1.bf16.msra.mxu0 %v1450
    %2390 = vmatprep.subr.bf16.mxu0 %v1441
    %2391 = vmatpush1.bf16.msra.mxu0 %v1440
    %2392 = vmatprep.subr.bf16.mxu0 %v1431
    %2393 = vmatpush1.bf16.msra.mxu0 %v1430
    %2394 = vmatprep.subr.bf16.mxu0 %v1421
    %2395 = vmatpush1.bf16.msra.mxu0 %v1420
    %2396 = vmatprep.subr.bf16.mxu0 %v1571
    %2397 = vmatpush2.bf16.msra.mxu0 %v1570
    %2398 = vmatprep.subr.bf16.mxu0 %v1561
    %2399 = vmatpush2.bf16.msra.mxu0 %v1560
    %2400 = vmatprep.subr.bf16.mxu0 %v1551
    %2401 = vmatpush2.bf16.msra.mxu0 %v1550
    %2402 = vmatprep.subr.bf16.mxu0 %v1541
    %2403 = vmatpush2.bf16.msra.mxu0 %v1540
    %2404 = vmatprep.subr.bf16.mxu0 %v1531
    %2405 = vmatpush2.bf16.msra.mxu0 %v1530
    %2406 = vmatprep.subr.bf16.mxu0 %v1521
    %2407 = vmatpush2.bf16.msra.mxu0 %v1520
    %2408 = vmatprep.subr.bf16.mxu0 %v1511
    %2409 = vmatpush2.bf16.msra.mxu0 %v1510
    %2410 = vmatprep.subr.bf16.mxu0 %v1501
    %2411 = vmatpush2.bf16.msra.mxu0 %v1500
    %2412 = vmatprep.mubr.bf16.mxu0 %v75
    %2413 = vmatmul.mubr.bf16.gmra.mxu0 %v74
    %v2414 = vpop.f32.mrf.mxu0
    %v2415 = vadd.f32 %v437, %v2414
    %v2416 = vpop.f32.mrf.mxu0
    %v2417 = vadd.f32 %v441, %v2416
    %v2418 = vpop.f32.mrf.mxu0
    %v2419 = vpop.f32.mrf.mxu0
    %2420 = vdwg.mxu0
    %2421 = vmatprep.subr.bf16.mxu0 %v1651
    %2422 = vmatpush1.bf16.msra.mxu0 %v1650
    %2423 = vmatprep.subr.bf16.mxu0 %v1641
    %2424 = vmatpush1.bf16.msra.mxu0 %v1640
    %2425 = vmatprep.subr.bf16.mxu0 %v1631
    %2426 = vmatpush1.bf16.msra.mxu0 %v1630
    %2427 = vmatprep.subr.bf16.mxu0 %v1621
    %2428 = vmatpush1.bf16.msra.mxu0 %v1620
    %2429 = vmatprep.subr.bf16.mxu0 %v1611
    %2430 = vmatpush1.bf16.msra.mxu0 %v1610
    %2431 = vmatprep.subr.bf16.mxu0 %v1601
    %2432 = vmatpush1.bf16.msra.mxu0 %v1600
    %2433 = vmatprep.subr.bf16.mxu0 %v1591
    %2434 = vmatpush1.bf16.msra.mxu0 %v1590
    %2435 = vmatprep.subr.bf16.mxu0 %v1581
    %2436 = vmatpush1.bf16.msra.mxu0 %v1580
    %2437 = vmatprep.subr.bf16.mxu0 %v1731
    %2438 = vmatpush2.bf16.msra.mxu0 %v1730
    %2439 = vmatprep.subr.bf16.mxu0 %v1721
    %2440 = vmatpush2.bf16.msra.mxu0 %v1720
    %2441 = vmatprep.subr.bf16.mxu0 %v1711
    %2442 = vmatpush2.bf16.msra.mxu0 %v1710
    %2443 = vmatprep.subr.bf16.mxu0 %v1701
    %2444 = vmatpush2.bf16.msra.mxu0 %v1700
    %2445 = vmatprep.subr.bf16.mxu0 %v1691
    %2446 = vmatpush2.bf16.msra.mxu0 %v1690
    %2447 = vmatprep.subr.bf16.mxu0 %v1681
    %2448 = vmatpush2.bf16.msra.mxu0 %v1680
    %2449 = vmatprep.subr.bf16.mxu0 %v1671
    %2450 = vmatpush2.bf16.msra.mxu0 %v1670
    %2451 = vmatprep.subr.bf16.mxu0 %v1661
    %2452 = vmatpush2.bf16.msra.mxu0 %v1660
    %2453 = vmatprep.mubr.bf16.mxu0 %v77
    %2454 = vmatmul.mubr.bf16.gmra.mxu0 %v76
    %v2455 = vpop.f32.mrf.mxu0
    %v2456 = vadd.f32 %v2415, %v2455
    %v2457 = vpop.f32.mrf.mxu0
    %v2458 = vadd.f32 %v2417, %v2457
    %v2459 = vpop.f32.mrf.mxu0
    %v2460 = vpop.f32.mrf.mxu0
    %2461 = vdwg.mxu0
    %v2472 = vcombine.low %v2128, %v2130
    %v2473 = vcombine.low %v2210, %v2212
    %v2475 = vunpack.c.l.s4 1983009808
    %v2476 = vunpack.c.0.s8 %v2475
    %v2477 = vlaneseq
    %v2478 = vshrl.u32 %v2477, 7
    %v2479 = vsub.s32 %v2476, %v2478
    %v2480 = vrot.slane %v2472, %v2479
    %v2482 = vunpack.c.l.s4 1983009808
    %v2483 = vunpack.c.0.s8 %v2482
    %v2484 = vlaneseq
    %v2485 = vshrl.u32 %v2484, 7
    %v2486 = vsub.s32 %v2483, %v2485
    %v2487 = vrot.slane %v2473, %v2486
    %v2488 = vcombine.low %v2480, %v2487
    %v2489 = vcombine.low %v2292, %v2294
    %v2490 = vcombine.low %v2374, %v2376
    %v2492 = vunpack.c.l.s4 1983009808
    %v2493 = vunpack.c.0.s8 %v2492
    %v2494 = vlaneseq
    %v2495 = vshrl.u32 %v2494, 7
    %v2496 = vsub.s32 %v2493, %v2495
    %v2497 = vrot.slane %v2489, %v2496
    %v2499 = vunpack.c.l.s4 1983009808
    %v2500 = vunpack.c.0.s8 %v2499
    %v2501 = vlaneseq
    %v2502 = vshrl.u32 %v2501, 7
    %v2503 = vsub.s32 %v2500, %v2502
    %v2504 = vrot.slane %v2490, %v2503
    %v2505 = vcombine.low %v2497, %v2504
    %v2506 = vcombine.low %v2456, %v2458
    %v2508 = vunpack.c.l.s4 1983009808
    %v2509 = vunpack.c.0.s8 %v2508
    %v2510 = vlaneseq
    %v2511 = vshrl.u32 %v2510, 7
    %v2512 = vsub.s32 %v2509, %v2511
    %v2513 = vrot.slane %v2506, %v2512
    %2517 = vst [vmem:[%s3] sm:$0xff] %v2488
    %2518 = vst [vmem:[%s3 + $0x8] sm:$0xff] %v2505
    %2519 = vst [vmem:[%s3 + $0x10] sm:$0xf] %v2513
    // Predicated region
    $region26: #{transformer_mapper_pallas.5} parent=1 // pred_check
      _
    $region27: #{transformer_mapper_pallas.5} parent=1 // pred_check_branch
      %2521 = sbr.rel (0) target = $region29
    $region28: #{transformer_mapper_pallas.5} parent=1 // pred_region
      _
    $region29: #{transformer_mapper_pallas.5} parent=1 // pred_fallthru
      _
    // Predicated region
    $region30: #{transformer_mapper_pallas.5} parent=1 // pred_check
      _
    $region31: #{transformer_mapper_pallas.5} parent=1 // pred_check_branch
      %2523 = sbr.rel (0) target = $region33
    $region32: #{transformer_mapper_pallas.5} parent=1 // pred_region
      _
    $region33: #{transformer_mapper_pallas.5} parent=1 // pred_fallthru
      _
    %2524 = vsyncpa [#allocation3], 1
    %2525 = vsyncpa [#allocation5], 1

</llo_original>
